<compile_context>
chip_gen: v7x
topology: tpu7x:2x2x1
jax: 0.10.0
libtpu: 0.0.40
codegen_flags: <defaults>
</compile_context>

<pallas_src>
import numpy as np
import jax
import jax.numpy as jnp
from jax.experimental import pallas as pl
from jax.experimental.pallas import tpu as pltpu

ADJ_BOUNDARY, ADJ_REWIRE, ADJ_UPPER, ADJ_LOWER = 0, 1, 2, 3
MAX_DIM = 2
NUM_DIMS = MAX_DIM + 1      # per-dimension parameter sets (MultiDimensionalModule)
NUM_BRANCHES = 4            # boundary, rewire, upper, lower


# ------------------------------- Pallas kernel -------------------------------
def cinpp_kernel(block_dim_ref,            # [num_blocks] i32 (SMEM; used by index_maps only)
                 m_ref,                    # [TM, 4*Np]      int8/bf16 branch-packed counts
                 xbd_ref,                  # [4*Np, 4*Di]    bf16 block-diagonal features
                 xself_ref,                # [TM, 4*Di]      f32 (1+eps)*x per-branch self term
                 w1_ref, b1_ref,           # [1, 4*Di, 4*H] bf16, [1, 1, 4*H] f32
                 w2_ref, b2_ref,           # [1, 4*H, 4*H]  bf16, [1, 1, 4*H] f32
                 wo_ref, bo_ref,           # [1, 4*H, Do_p] bf16, [1, 1, Do_p] f32
                 out_ref):                 # [TM, Do_p] f32
    del block_dim_ref  # consumed by index_maps (per-dimension weight selection)

    # Widen the int8 neighbor counts to bf16 (no-op when already bf16) and run the
    # fused 4-branch GIN aggregation as one lane-dense MXU matmul; then add the
    # (1+eps)*x self term (split out of the operator so it can stay int8) on the VPU.
    m = m_ref[...].astype(jnp.bfloat16)
    agg = jnp.dot(m, xbd_ref[...], preferred_element_type=jnp.float32)
    agg = agg + xself_ref[...]

    # Per-cell-dimension base net, block-diagonal over the 4 branches, so all
    # branches run in one 128-wide bf16 matmul per layer (f32 accumulation).
    h = jnp.maximum(
        jnp.dot(agg.astype(jnp.bfloat16), w1_ref[0],
                preferred_element_type=jnp.float32) + b1_ref[0], 0.0)
    h = jnp.maximum(
        jnp.dot(h.astype(jnp.bfloat16), w2_ref[0],
                preferred_element_type=jnp.float32) + b2_ref[0], 0.0)

    # h's lane layout == concat([boundary, rewire, upper, lower]); the output Linear
    # consumes it directly (no concat / relayout), then the final F.relu.
    out = jnp.dot(h.astype(jnp.bfloat16), wo_ref[0],
                  preferred_element_type=jnp.float32) + bo_ref[0]
    out_ref[...] = jnp.maximum(out, 0.0)


# ------------------------------- host-side glue -------------------------------
def _round_up(v, m):
    return ((v + m - 1) // m) * m


def _vmem_capacity_bytes():
    try:
        info = pltpu.get_tpu_info()
        cap = getattr(info, "vmem_capacity_bytes", None)
        if cap:
            return int(cap)
    except Exception:
        pass
    return 64 * 1024 * 1024   # conservative default (v7x per-core VMEM)


def _choose_tile_and_vmem(group_sizes, d_in, hidden, d_out_p, vmem_cap):
    """Pick the row tile tm and the scoped-VMEM limit from the chip's VMEM budget."""
    four_di = NUM_BRANCHES * d_in
    four_h = NUM_BRANCHES * hidden
    nonempty = [g for g in group_sizes if g > 0]
    max_group = max(nonempty) if nonempty else 1

    # Don't pad small complexes up to a huge tile; keep >=2 blocks for v7x's 2 cores.
    tm_need = _round_up(max_group, 32)
    if len(nonempty) == 1 and max_group > 32:
        tm_need = max(32, _round_up((max_group + 1) // 2, 32))
    tm_cap = min(512, tm_need)

    budget = int(vmem_cap * 0.70)          # leave headroom for compiler scratch
    headroom = 12 * 1024 * 1024

    def step_bytes(tm):
        np_pad = sum(_round_up(g, tm) for g in nonempty) if nonempty else tm
        four_np = NUM_BRANCHES * np_pad
        fixed = (2 * four_np * four_di * 2                                   # x_bd (<=2 bufs) bf16
                 + 2 * 2 * (four_di * four_h + four_h * four_h + four_h * d_out_p)  # bf16 weights x2
                 + 2 * 4 * (2 * four_h + d_out_p))                           # f32 biases x2
        per_row = (6 * four_np                                               # op tile (2 bufs) + convert
                   + 2 * four_di * 4 + 2 * d_out_p * 4                       # self-term + out tiles
                   + (four_di + 2 * four_h + d_out_p) * 4)                   # in-kernel f32 values
        return fixed + tm * per_row

    tm = 32
    for cand in range(tm_cap, 31, -32):
        if step_bytes(cand) <= budget:
            tm = cand
            break
    step = step_bytes(tm)
    vmem_limit = int(min(vmem_cap * 0.85, max(32 * 1024 * 1024, step + headroom)))
    vmem_limit = max(vmem_limit, step + 2 * 1024 * 1024)
    return tm, vmem_limit


def _group_rows(cell_dimension, tm):
    """Sort cells by dimension, pad each group to a multiple of tm."""
    n = cell_dimension.shape[0]
    row_src, block_dim = [], []
    positions = np.zeros(n, dtype=np.int32)   # padded position of each original cell
    for d in range(NUM_DIMS):
        idx = np.nonzero(cell_dimension == d)[0]
        if idx.size == 0:
            continue
        start = len(row_src)
        positions[idx] = start + np.arange(idx.size, dtype=np.int32)
        row_src.extend(int(i) for i in idx)
        pad = (-idx.size) % tm
        row_src.extend([-1] * pad)
        block_dim.extend([d] * ((idx.size + pad) // tm))
    return (np.asarray(row_src, np.int64),
            np.asarray(block_dim, np.int32),
            positions)


def _pack_params(params, d_out_p):
    """Repack per-branch/per-dim weights into block-diagonal 128-lane bf16 operands."""
    w1 = np.asarray(params["w1"], np.float32)   # [4, NUM_DIMS, Di, H]
    b1 = np.asarray(params["b1"], np.float32)   # [4, NUM_DIMS, 1, H]
    w2 = np.asarray(params["w2"], np.float32)   # [4, NUM_DIMS, H, H]
    b2 = np.asarray(params["b2"], np.float32)
    wo = np.asarray(params["wo"], np.float32)   # [NUM_DIMS, 4*H, Do]
    bo = np.asarray(params["bo"], np.float32)   # [NUM_DIMS, 1, Do]
    nbr, nd, _, h = w1.shape
    d_out = wo.shape[-1]

    def block_diag(w):
        _, _, a, b = w.shape
        out = np.zeros((nd, nbr * a, nbr * b), np.float32)
        for br in range(nbr):
            out[:, br * a:(br + 1) * a, br * b:(br + 1) * b] = w[br]
        return out

    w1_bd = block_diag(w1)                                            # [nd, 4*Di, 4*H]
    w2_bd = block_diag(w2)                                            # [nd, 4*H, 4*H]
    b1c = np.transpose(b1, (1, 2, 0, 3)).reshape(nd, 1, nbr * h)      # [nd, 1, 4*H]
    b2c = np.transpose(b2, (1, 2, 0, 3)).reshape(nd, 1, nbr * h)
    wo_p = np.zeros((nd, nbr * h, d_out_p), np.float32)
    wo_p[:, :, :d_out] = wo
    bo_p = np.zeros((nd, 1, d_out_p), np.float32)
    bo_p[:, :, :d_out] = bo
    # Weights in bf16 (single-pass MXU, half the per-dim weight DMA); biases stay f32.
    return (jnp.asarray(w1_bd, jnp.bfloat16), jnp.asarray(b1c, jnp.float32),
            jnp.asarray(w2_bd, jnp.bfloat16), jnp.asarray(b2c, jnp.float32),
            jnp.asarray(wo_p, jnp.bfloat16), jnp.asarray(bo_p, jnp.float32))


def cinpp_pallas(x, M_counts, cell_dimension, params, *, eps, tm=None):
    """x: [N, Di] f32, M_counts: [4, N, N] neighbor-count operators (no self term),
       cell_dimension: [N] int, params: see init_params, eps: GIN epsilon."""
    x_np = np.asarray(x, np.float32)
    n, d_in = x_np.shape
    hidden = params["w1"].shape[-1]
    d_out = params["wo"].shape[-1]
    d_out_p = _round_up(d_out, 128)
    four_di = NUM_BRANCHES * d_in
    four_h = NUM_BRANCHES * hidden

    cell_dimension = np.asarray(cell_dimension)
    group_sizes = [int((cell_dimension == d).sum()) for d in range(NUM_DIMS)]

    vmem_cap = _vmem_capacity_bytes()
    auto_tm, vmem_limit = _choose_tile_and_vmem(group_sizes, d_in, hidden, d_out_p, vmem_cap)
    tm = auto_tm if tm is None else max(32, _round_up(int(tm), 32))

    row_src, block_dim, positions = _group_rows(cell_dimension, tm)
    n_pad = row_src.shape[0]
    num_blocks = block_dim.shape[0]
    valid = row_src >= 0
    src = np.where(valid, row_src, 0)
    four_np = NUM_BRANCHES * n_pad

    # Quantize features to bf16 once (mirrored exactly in the reference).
    xq = np.asarray(jnp.asarray(x_np).astype(jnp.bfloat16).astype(jnp.float32))
    xq_s = xq[src] * valid[:, None].astype(np.float32)               # [Np, Di]

    # Permuted neighbor-count operators (single advanced-indexing pass; no (1+eps)I).
    M_np = np.asarray(M_counts, np.float32)
    ix_r, ix_c = np.ix_(src, src)
    Ms = M_np[:, ix_r, ix_c]                                          # [4, Np, Np]
    Ms[:, ~valid, :] = 0.0
    Ms[:, :, ~valid] = 0.0
    m_cat_np = np.ascontiguousarray(
        Ms.transpose(1, 0, 2).reshape(n_pad, four_np))                # [Np, 4*Np] counts

    # Block-diagonal features [4Np, 4Di] (slice assignment, no kron) and the
    # (1+eps)*x self term tiled over the 4 branch lane blocks [Np, 4Di].
    x_bd_np = np.zeros((four_np, four_di), np.float32)
    for br in range(NUM_BRANCHES):
        x_bd_np[br * n_pad:(br + 1) * n_pad, br * d_in:(br + 1) * d_in] = xq_s
    x_bd = jnp.asarray(x_bd_np, jnp.bfloat16)
    x_self = jnp.asarray(np.tile((1.0 + eps) * xq_s, (1, NUM_BRANCHES)), jnp.float32)

    w1_bd, b1c, w2_bd, b2c, wo_p, bo_p = _pack_params(params, d_out_p)
    block_dim_j = jnp.asarray(block_dim, jnp.int32)

    def dsel(i, bd):          # this row block's per-cell-dimension weight slice
        return (bd[i], 0, 0)

    def run(op_kind, xbd_buffers):
        if op_kind == "int8":
            m_arr = jnp.asarray(m_cat_np.astype(np.int8))
        else:
            m_arr = jnp.asarray(m_cat_np, jnp.bfloat16)
        xbd_kwargs = {}
        if xbd_buffers is not None:
            xbd_kwargs = dict(pipeline_mode=pl.Buffered(xbd_buffers))
        grid_spec = pltpu.PrefetchScalarGridSpec(
            num_scalar_prefetch=1,
            grid=(num_blocks,),
            in_specs=[
                pl.BlockSpec((tm, four_np), lambda i, bd: (i, 0)),         # operator rows (streamed)
                pl.BlockSpec((four_np, four_di), lambda i, bd: (0, 0),     # block-diag feats (resident)
                             **xbd_kwargs),
                pl.BlockSpec((tm, four_di), lambda i, bd: (i, 0)),         # (1+eps)*x self term
                pl.BlockSpec((1, four_di, four_h), dsel),                  # w1 (per dim, block-diag)
                pl.BlockSpec((1, 1, four_h), dsel),                        # b1
                pl.BlockSpec((1, four_h, four_h), dsel),                   # w2
                pl.BlockSpec((1, 1, four_h), dsel),                        # b2
                pl.BlockSpec((1, four_h, d_out_p), dsel),                  # wo
                pl.BlockSpec((1, 1, d_out_p), dsel),                       # bo
            ],
            out_specs=pl.BlockSpec((tm, d_out_p), lambda i, bd: (i, 0)),
        )
        out_pad = pl.pallas_call(
            cinpp_kernel,
            grid_spec=grid_spec,
            out_shape=jax.ShapeDtypeStruct((n_pad, d_out_p), jnp.float32),
            compiler_params=pltpu.CompilerParams(
                dimension_semantics=("parallel",),
                vmem_limit_bytes=int(vmem_limit)),
        )(block_dim_j, m_arr, x_bd, x_self,
          w1_bd, b1c, w2_bd, b2c, wo_p, bo_p)
        return jax.block_until_ready(out_pad)

    # int8 operator (exact counts) halves HBM traffic of the dominant streamed buffer;
    # fall back to bf16 and/or default buffering if the feature is unavailable.
    int8_ok = float(M_np.max()) <= 127.0 and float(M_np.min()) >= 0.0
    attempts = []
    if int8_ok:
        attempts += [("int8", 1), ("int8", None)]
    attempts += [("bf16", 1), ("bf16", None)]

    out_pad, last_err = None, None
    for op_kind, xbd_buffers in attempts:
        try:
            out_pad = run(op_kind, xbd_buffers)
            break
        except Exception as err:            # lowering / feature fallback
            last_err = err
    if out_pad is None:
        raise last_err

    # Un-permute back to original cell order and strip lane padding.
    return out_pad[jnp.asarray(positions, jnp.int32)][:, :d_out]


def build_operators(n, edge_index, edge_type, upper_ind, lower_ind):
    """Dense neighbor-count operators M[4, N, N] (no (1+eps)*I self term)."""
    edge_index = np.asarray(edge_index)
    edge_type = np.asarray(edge_type)

    def count_op(sel, shared=None):
        m = np.zeros((n, n), dtype=np.float32)
        src = edge_index[0, sel]
        dst = edge_index[1, sel]
        np.add.at(m, (dst, src), 1.0)
        if shared is not None:
            np.add.at(m, (dst, np.asarray(shared)), 1.0)
        return m

    m_bnd = count_op(edge_type == ADJ_BOUNDARY)
    m_rew = count_op(edge_type == ADJ_REWIRE)
    m_up = count_op(edge_type == ADJ_UPPER, upper_ind)
    m_low = count_op(edge_type == ADJ_LOWER, lower_ind)
    return np.stack([m_bnd, m_rew, m_up, m_low]).astype(np.float32)


def init_params(key, d_in, hidden, d_out):
    ks = jax.random.split(key, 6)

    def lin(k, fan_in, shape, scale=1.0):
        return scale * jax.random.normal(k, shape, jnp.float32) / np.sqrt(fan_in)

    return dict(
        w1=lin(ks[0], d_in, (NUM_BRANCHES, NUM_DIMS, d_in, hidden)),
        b1=lin(ks[1], hidden, (NUM_BRANCHES, NUM_DIMS, 1, hidden), 0.1),
        w2=lin(ks[2], hidden, (NUM_BRANCHES, NUM_DIMS, hidden, hidden)),
        b2=lin(ks[3], hidden, (NUM_BRANCHES, NUM_DIMS, 1, hidden), 0.1),
        wo=lin(ks[4], 4 * hidden, (NUM_DIMS, 4 * hidden, d_out)),
        bo=lin(ks[5], d_out, (NUM_DIMS, 1, d_out), 0.1),
    )


def reference(x, M_counts, mask, p, eps):
    """Plain-JAX reference (mirrors the kernel's bf16 quantization of x and the weights)."""
    xq = x.astype(jnp.bfloat16).astype(jnp.float32)
    q = lambda w: w.astype(jnp.bfloat16).astype(jnp.float32)
    feats = []
    for br in range(NUM_BRANCHES):
        agg = M_counts[br] @ xq + (1.0 + eps) * xq
        h = jnp.zeros((x.shape[0], p["w1"].shape[-1]), jnp.float32)
        for d in range(NUM_DIMS):
            h1 = jax.nn.relu(agg @ q(p["w1"][br, d]) + p["b1"][br, d])
            h2 = jax.nn.relu(h1 @ q(p["w2"][br, d]) + p["b2"][br, d])
            h = h + mask[:, d:d + 1] * h2
        feats.append(h)
    comb = jnp.concatenate(feats, axis=-1)
    out = jnp.zeros((x.shape[0], p["wo"].shape[-1]), jnp.float32)
    for d in range(NUM_DIMS):
        out = out + mask[:, d:d + 1] * (comb @ q(p["wo"][d]) + p["bo"][d])
    return jax.nn.relu(out)


# ----------------------------------- main -------------------------------------
if __name__ == "__main__":
    key = jax.random.PRNGKey(0)
    N, D_IN, HIDDEN, D_OUT = 48, 32, 32, 32
    E = 96
    eps = 0.1

    k_x, k_e, k_t, k_u, k_l, k_d, k_p = jax.random.split(key, 7)
    x = jax.random.normal(k_x, (N, D_IN), jnp.float32)
    edge_index = np.asarray(jax.random.randint(k_e, (2, E), 0, N))
    edge_type = np.asarray(jax.random.randint(k_t, (E,), 0, 4))
    num_up = int((edge_type == ADJ_UPPER).sum())
    num_low = int((edge_type == ADJ_LOWER).sum())
    upper_ind = np.asarray(jax.random.randint(k_u, (max(num_up, 1),), 0, N))[:num_up]
    lower_ind = np.asarray(jax.random.randint(k_l, (max(num_low, 1),), 0, N))[:num_low]
    cell_dimension = np.asarray(jax.random.randint(k_d, (N,), 0, NUM_DIMS))
    mask = jnp.asarray(np.eye(NUM_DIMS, dtype=np.float32)[cell_dimension])

    M = build_operators(N, edge_index, edge_type, upper_ind, lower_ind)
    params = init_params(k_p, D_IN, HIDDEN, D_OUT)

    out = cinpp_pallas(x, M, cell_dimension, params, eps=eps)
    out = jax.block_until_ready(out)

    ref = jax.block_until_ready(reference(x, jnp.asarray(M), mask, params, eps))
    np.testing.assert_allclose(np.asarray(out), np.asarray(ref), rtol=2e-2, atol=2e-2)
    print("KERNEL_OK")
</pallas_src>

<mosaic_0001>
module attributes {stable_mosaic.version = 11 : i64} {
  func.func @cinpp_kernel(%arg0: i32, %arg1: memref<3xi32, #tpu.memory_space<smem>>, %arg2: memref<32x384xi8, #tpu.memory_space<vmem>>, %arg3: memref<384x128xbf16, #tpu.memory_space<vmem>>, %arg4: memref<32x128xf32, #tpu.memory_space<vmem>>, %arg5: memref<1x128x128xbf16, #tpu.memory_space<vmem>>, %arg6: memref<1x1x128xf32, #tpu.memory_space<vmem>>, %arg7: memref<1x128x128xbf16, #tpu.memory_space<vmem>>, %arg8: memref<1x1x128xf32, #tpu.memory_space<vmem>>, %arg9: memref<1x128x128xbf16, #tpu.memory_space<vmem>>, %arg10: memref<1x1x128xf32, #tpu.memory_space<vmem>>, %arg11: memref<32x128xf32, #tpu.memory_space<vmem>>) attributes {dimension_semantics = [#tpu.dimension_semantics<parallel>], iteration_bounds = array<i64: 3>, scalar_prefetch = 1 : i64, scratch_operands = 0 : i64, tpu.core_type = #tpu.core_type<tc>, window_params = [{transform_indices = @transform_0, window_bounds = array<i64: 32, 384>}, {pipeline_mode = #tpu.pipeline_mode<synchronous>, transform_indices = @transform_1, window_bounds = array<i64: 384, 128>}, {transform_indices = @transform_2, window_bounds = array<i64: 32, 128>}, {transform_indices = @transform_3, window_bounds = array<i64: 1, 128, 128>}, {transform_indices = @transform_4, window_bounds = array<i64: 1, 1, 128>}, {transform_indices = @transform_5, window_bounds = array<i64: 1, 128, 128>}, {transform_indices = @transform_6, window_bounds = array<i64: 1, 1, 128>}, {transform_indices = @transform_7, window_bounds = array<i64: 1, 128, 128>}, {transform_indices = @transform_8, window_bounds = array<i64: 1, 1, 128>}, {transform_indices = @transform_9, window_bounds = array<i64: 32, 128>}]} {
    %c0 = arith.constant 0 : index
    %c0_0 = arith.constant 0 : index
    %0 = vector.load %arg2[%c0, %c0_0] : memref<32x384xi8, #tpu.memory_space<vmem>>, vector<32x384xi8>
    %1 = arith.sitofp %0 : vector<32x384xi8> to vector<32x384xbf16>
    %c0_1 = arith.constant 0 : index
    %c0_2 = arith.constant 0 : index
    %2 = vector.load %arg3[%c0_1, %c0_2] : memref<384x128xbf16, #tpu.memory_space<vmem>>, vector<384x128xbf16>
    %cst = arith.constant dense<0.000000e+00> : vector<32x128xf32>
    %3 = tpu.matmul %1, %2, %cst {dimension_numbers = #tpu.dot_dimension_numbers<[1], [0], [0], [1], [0, 0, 1, 1], [], []>} : vector<32x384xbf16>, vector<384x128xbf16>, vector<32x128xf32> -> vector<32x128xf32>
    %c0_3 = arith.constant 0 : index
    %c0_4 = arith.constant 0 : index
    %4 = vector.load %arg4[%c0_3, %c0_4] : memref<32x128xf32, #tpu.memory_space<vmem>>, vector<32x128xf32>
    %5 = arith.addf %3, %4 : vector<32x128xf32>
    %6 = arith.truncf %5 : vector<32x128xf32> to vector<32x128xbf16>
    %c0_5 = arith.constant 0 : index
    %c0_6 = arith.constant 0 : index
    %c0_7 = arith.constant 0 : index
    %7 = vector.load %arg5[%c0_5, %c0_6, %c0_7] : memref<1x128x128xbf16, #tpu.memory_space<vmem>>, vector<1x128x128xbf16>
    %8 = vector.shape_cast %7 : vector<1x128x128xbf16> to vector<128x128xbf16>
    %cst_8 = arith.constant dense<0.000000e+00> : vector<32x128xf32>
    %9 = tpu.matmul %6, %8, %cst_8 {dimension_numbers = #tpu.dot_dimension_numbers<[1], [0], [0], [1], [0, 0, 1, 1], [], []>} : vector<32x128xbf16>, vector<128x128xbf16>, vector<32x128xf32> -> vector<32x128xf32>
    %c0_9 = arith.constant 0 : index
    %c0_10 = arith.constant 0 : index
    %c0_11 = arith.constant 0 : index
    %10 = vector.load %arg6[%c0_9, %c0_10, %c0_11] : memref<1x1x128xf32, #tpu.memory_space<vmem>>, vector<1x1x128xf32>
    %11 = vector.shape_cast %10 : vector<1x1x128xf32> to vector<1x128xf32>
    %12 = vector.broadcast %11 : vector<1x128xf32> to vector<32x128xf32>
    %13 = arith.addf %9, %12 : vector<32x128xf32>
    %cst_12 = arith.constant 0.000000e+00 : f32
    %14 = vector.broadcast %cst_12 : f32 to vector<32x128xf32>
    %15 = arith.maximumf %13, %14 : vector<32x128xf32>
    %16 = arith.truncf %15 : vector<32x128xf32> to vector<32x128xbf16>
    %c0_13 = arith.constant 0 : index
    %c0_14 = arith.constant 0 : index
    %c0_15 = arith.constant 0 : index
    %17 = vector.load %arg7[%c0_13, %c0_14, %c0_15] : memref<1x128x128xbf16, #tpu.memory_space<vmem>>, vector<1x128x128xbf16>
    %18 = vector.shape_cast %17 : vector<1x128x128xbf16> to vector<128x128xbf16>
    %cst_16 = arith.constant dense<0.000000e+00> : vector<32x128xf32>
    %19 = tpu.matmul %16, %18, %cst_16 {dimension_numbers = #tpu.dot_dimension_numbers<[1], [0], [0], [1], [0, 0, 1, 1], [], []>} : vector<32x128xbf16>, vector<128x128xbf16>, vector<32x128xf32> -> vector<32x128xf32>
    %c0_17 = arith.constant 0 : index
    %c0_18 = arith.constant 0 : index
    %c0_19 = arith.constant 0 : index
    %20 = vector.load %arg8[%c0_17, %c0_18, %c0_19] : memref<1x1x128xf32, #tpu.memory_space<vmem>>, vector<1x1x128xf32>
    %21 = vector.shape_cast %20 : vector<1x1x128xf32> to vector<1x128xf32>
    %22 = vector.broadcast %21 : vector<1x128xf32> to vector<32x128xf32>
    %23 = arith.addf %19, %22 : vector<32x128xf32>
    %cst_20 = arith.constant 0.000000e+00 : f32
    %24 = vector.broadcast %cst_20 : f32 to vector<32x128xf32>
    %25 = arith.maximumf %23, %24 : vector<32x128xf32>
    %26 = arith.truncf %25 : vector<32x128xf32> to vector<32x128xbf16>
    %c0_21 = arith.constant 0 : index
    %c0_22 = arith.constant 0 : index
    %c0_23 = arith.constant 0 : index
    %27 = vector.load %arg9[%c0_21, %c0_22, %c0_23] : memref<1x128x128xbf16, #tpu.memory_space<vmem>>, vector<1x128x128xbf16>
    %28 = vector.shape_cast %27 : vector<1x128x128xbf16> to vector<128x128xbf16>
    %cst_24 = arith.constant dense<0.000000e+00> : vector<32x128xf32>
    %29 = tpu.matmul %26, %28, %cst_24 {dimension_numbers = #tpu.dot_dimension_numbers<[1], [0], [0], [1], [0, 0, 1, 1], [], []>} : vector<32x128xbf16>, vector<128x128xbf16>, vector<32x128xf32> -> vector<32x128xf32>
    %c0_25 = arith.constant 0 : index
    %c0_26 = arith.constant 0 : index
    %c0_27 = arith.constant 0 : index
    %30 = vector.load %arg10[%c0_25, %c0_26, %c0_27] : memref<1x1x128xf32, #tpu.memory_space<vmem>>, vector<1x1x128xf32>
    %31 = vector.shape_cast %30 : vector<1x1x128xf32> to vector<1x128xf32>
    %32 = vector.broadcast %31 : vector<1x128xf32> to vector<32x128xf32>
    %33 = arith.addf %29, %32 : vector<32x128xf32>
    %cst_28 = arith.constant 0.000000e+00 : f32
    %34 = vector.broadcast %cst_28 : f32 to vector<32x128xf32>
    %35 = arith.maximumf %33, %34 : vector<32x128xf32>
    %c0_29 = arith.constant 0 : index
    %c0_30 = arith.constant 0 : index
    %36 = vector.load %arg11[%c0_29, %c0_30] : memref<32x128xf32, #tpu.memory_space<vmem>>, vector<32x128xf32>
    tpu.vector_store %arg11[%c0_29, %c0_30], %35 {strides = array<i32>} : memref<32x128xf32, #tpu.memory_space<vmem>>, vector<32x128xf32>,
    return
  }
  func.func @transform_0(%arg0: i32, %arg1: memref<3xi32, #tpu.memory_space<smem>>) -> (i32, i32) {
    %c0_i32 = arith.constant 0 : i32
    %c0_i32_0 = arith.constant 0 : i32
    return %arg0, %c0_i32 : i32, i32
  }
  func.func @transform_1(%arg0: i32, %arg1: memref<3xi32, #tpu.memory_space<smem>>) -> (i32, i32) {
    %c0_i32 = arith.constant 0 : i32
    %c0_i32_0 = arith.constant 0 : i32
    %c0_i32_1 = arith.constant 0 : i32
    return %c0_i32, %c0_i32_0 : i32, i32
  }
  func.func @transform_2(%arg0: i32, %arg1: memref<3xi32, #tpu.memory_space<smem>>) -> (i32, i32) {
    %c0_i32 = arith.constant 0 : i32
    %c0_i32_0 = arith.constant 0 : i32
    return %arg0, %c0_i32 : i32, i32
  }
  func.func @transform_3(%arg0: i32, %arg1: memref<3xi32, #tpu.memory_space<smem>>) -> (i32, i32, i32) {
    %0 = arith.index_cast %arg0 : i32 to index
    %1 = memref.load %arg1[%0] : memref<3xi32, #tpu.memory_space<smem>>
    %c0_i32 = arith.constant 0 : i32
    %c0_i32_0 = arith.constant 0 : i32
    %c0_i32_1 = arith.constant 0 : i32
    return %1, %c0_i32, %c0_i32_0 : i32, i32, i32
  }
  func.func @transform_4(%arg0: i32, %arg1: memref<3xi32, #tpu.memory_space<smem>>) -> (i32, i32, i32) {
    %0 = arith.index_cast %arg0 : i32 to index
    %1 = memref.load %arg1[%0] : memref<3xi32, #tpu.memory_space<smem>>
    %c0_i32 = arith.constant 0 : i32
    %c0_i32_0 = arith.constant 0 : i32
    %c0_i32_1 = arith.constant 0 : i32
    return %1, %c0_i32, %c0_i32_0 : i32, i32, i32
  }
  func.func @transform_5(%arg0: i32, %arg1: memref<3xi32, #tpu.memory_space<smem>>) -> (i32, i32, i32) {
    %0 = arith.index_cast %arg0 : i32 to index
    %1 = memref.load %arg1[%0] : memref<3xi32, #tpu.memory_space<smem>>
    %c0_i32 = arith.constant 0 : i32
    %c0_i32_0 = arith.constant 0 : i32
    %c0_i32_1 = arith.constant 0 : i32
    return %1, %c0_i32, %c0_i32_0 : i32, i32, i32
  }
  func.func @transform_6(%arg0: i32, %arg1: memref<3xi32, #tpu.memory_space<smem>>) -> (i32, i32, i32) {
    %0 = arith.index_cast %arg0 : i32 to index
    %1 = memref.load %arg1[%0] : memref<3xi32, #tpu.memory_space<smem>>
    %c0_i32 = arith.constant 0 : i32
    %c0_i32_0 = arith.constant 0 : i32
    %c0_i32_1 = arith.constant 0 : i32
    return %1, %c0_i32, %c0_i32_0 : i32, i32, i32
  }
  func.func @transform_7(%arg0: i32, %arg1: memref<3xi32, #tpu.memory_space<smem>>) -> (i32, i32, i32) {
    %0 = arith.index_cast %arg0 : i32 to index
    %1 = memref.load %arg1[%0] : memref<3xi32, #tpu.memory_space<smem>>
    %c0_i32 = arith.constant 0 : i32
    %c0_i32_0 = arith.constant 0 : i32
    %c0_i32_1 = arith.constant 0 : i32
    return %1, %c0_i32, %c0_i32_0 : i32, i32, i32
  }
  func.func @transform_8(%arg0: i32, %arg1: memref<3xi32, #tpu.memory_space<smem>>) -> (i32, i32, i32) {
    %0 = arith.index_cast %arg0 : i32 to index
    %1 = memref.load %arg1[%0] : memref<3xi32, #tpu.memory_space<smem>>
    %c0_i32 = arith.constant 0 : i32
    %c0_i32_0 = arith.constant 0 : i32
    %c0_i32_1 = arith.constant 0 : i32
    return %1, %c0_i32, %c0_i32_0 : i32, i32, i32
  }
  func.func @transform_9(%arg0: i32, %arg1: memref<3xi32, #tpu.memory_space<smem>>) -> (i32, i32) {
    %c0_i32 = arith.constant 0 : i32
    %c0_i32_0 = arith.constant 0 : i32
    return %arg0, %c0_i32 : i32, i32
  }
}

module attributes {stable_mosaic.version = 11 : i64} {
  func.func @cinpp_kernel(%arg0: i32, %arg1: memref<3xi32, #tpu.memory_space<smem>>, %arg2: memref<32x384xi8, #tpu.memory_space<vmem>>, %arg3: memref<384x128xbf16, #tpu.memory_space<vmem>>, %arg4: memref<32x128xf32, #tpu.memory_space<vmem>>, %arg5: memref<1x128x128xbf16, #tpu.memory_space<vmem>>, %arg6: memref<1x1x128xf32, #tpu.memory_space<vmem>>, %arg7: memref<1x128x128xbf16, #tpu.memory_space<vmem>>, %arg8: memref<1x1x128xf32, #tpu.memory_space<vmem>>, %arg9: memref<1x128x128xbf16, #tpu.memory_space<vmem>>, %arg10: memref<1x1x128xf32, #tpu.memory_space<vmem>>, %arg11: memref<32x128xf32, #tpu.memory_space<vmem>>) attributes {dimension_semantics = [#tpu.dimension_semantics<parallel>], iteration_bounds = array<i64: 3>, scalar_prefetch = 1 : i64, scratch_operands = 0 : i64, tpu.core_type = #tpu.core_type<tc>, window_params = [{transform_indices = @transform_0, window_bounds = array<i64: 32, 384>}, {pipeline_mode = #tpu.pipeline_mode<synchronous>, transform_indices = @transform_1, window_bounds = array<i64: 384, 128>}, {transform_indices = @transform_2, window_bounds = array<i64: 32, 128>}, {transform_indices = @transform_3, window_bounds = array<i64: 1, 128, 128>}, {transform_indices = @transform_4, window_bounds = array<i64: 1, 1, 128>}, {transform_indices = @transform_5, window_bounds = array<i64: 1, 128, 128>}, {transform_indices = @transform_6, window_bounds = array<i64: 1, 1, 128>}, {transform_indices = @transform_7, window_bounds = array<i64: 1, 128, 128>}, {transform_indices = @transform_8, window_bounds = array<i64: 1, 1, 128>}, {transform_indices = @transform_9, window_bounds = array<i64: 32, 128>}]} {
    %c0 = arith.constant 0 : index
    %c0_0 = arith.constant 0 : index
    %0 = vector.load %arg2[%c0, %c0_0] : memref<32x384xi8, #tpu.memory_space<vmem>>, vector<32x384xi8>
    %1 = arith.sitofp %0 : vector<32x384xi8> to vector<32x384xbf16>
    %c0_1 = arith.constant 0 : index
    %c0_2 = arith.constant 0 : index
    %2 = vector.load %arg3[%c0_1, %c0_2] : memref<384x128xbf16, #tpu.memory_space<vmem>>, vector<384x128xbf16>
    %cst = arith.constant dense<0.000000e+00> : vector<32x128xf32>
    %3 = tpu.matmul %1, %2, %cst {dimension_numbers = #tpu.dot_dimension_numbers<[1], [0], [0], [1], [0, 0, 1, 1], [], []>} : vector<32x384xbf16>, vector<384x128xbf16>, vector<32x128xf32> -> vector<32x128xf32>
    %c0_3 = arith.constant 0 : index
    %c0_4 = arith.constant 0 : index
    %4 = vector.load %arg4[%c0_3, %c0_4] : memref<32x128xf32, #tpu.memory_space<vmem>>, vector<32x128xf32>
    %5 = arith.addf %3, %4 : vector<32x128xf32>
    %6 = arith.truncf %5 : vector<32x128xf32> to vector<32x128xbf16>
    %c0_5 = arith.constant 0 : index
    %c0_6 = arith.constant 0 : index
    %c0_7 = arith.constant 0 : index
    %7 = vector.load %arg5[%c0_5, %c0_6, %c0_7] : memref<1x128x128xbf16, #tpu.memory_space<vmem>>, vector<1x128x128xbf16>
    %8 = vector.shape_cast %7 : vector<1x128x128xbf16> to vector<128x128xbf16>
    %cst_8 = arith.constant dense<0.000000e+00> : vector<32x128xf32>
    %9 = tpu.matmul %6, %8, %cst_8 {dimension_numbers = #tpu.dot_dimension_numbers<[1], [0], [0], [1], [0, 0, 1, 1], [], []>} : vector<32x128xbf16>, vector<128x128xbf16>, vector<32x128xf32> -> vector<32x128xf32>
    %c0_9 = arith.constant 0 : index
    %c0_10 = arith.constant 0 : index
    %c0_11 = arith.constant 0 : index
    %10 = vector.load %arg6[%c0_9, %c0_10, %c0_11] : memref<1x1x128xf32, #tpu.memory_space<vmem>>, vector<1x1x128xf32>
    %11 = vector.shape_cast %10 : vector<1x1x128xf32> to vector<1x128xf32>
    %12 = vector.broadcast %11 : vector<1x128xf32> to vector<32x128xf32>
    %13 = arith.addf %9, %12 : vector<32x128xf32>
    %cst_12 = arith.constant 0.000000e+00 : f32
    %14 = vector.broadcast %cst_12 : f32 to vector<32x128xf32>
    %15 = arith.maximumf %13, %14 : vector<32x128xf32>
    %16 = arith.truncf %15 : vector<32x128xf32> to vector<32x128xbf16>
    %c0_13 = arith.constant 0 : index
    %c0_14 = arith.constant 0 : index
    %c0_15 = arith.constant 0 : index
    %17 = vector.load %arg7[%c0_13, %c0_14, %c0_15] : memref<1x128x128xbf16, #tpu.memory_space<vmem>>, vector<1x128x128xbf16>
    %18 = vector.shape_cast %17 : vector<1x128x128xbf16> to vector<128x128xbf16>
    %cst_16 = arith.constant dense<0.000000e+00> : vector<32x128xf32>
    %19 = tpu.matmul %16, %18, %cst_16 {dimension_numbers = #tpu.dot_dimension_numbers<[1], [0], [0], [1], [0, 0, 1, 1], [], []>} : vector<32x128xbf16>, vector<128x128xbf16>, vector<32x128xf32> -> vector<32x128xf32>
    %c0_17 = arith.constant 0 : index
    %c0_18 = arith.constant 0 : index
    %c0_19 = arith.constant 0 : index
    %20 = vector.load %arg8[%c0_17, %c0_18, %c0_19] : memref<1x1x128xf32, #tpu.memory_space<vmem>>, vector<1x1x128xf32>
    %21 = vector.shape_cast %20 : vector<1x1x128xf32> to vector<1x128xf32>
    %22 = vector.broadcast %21 : vector<1x128xf32> to vector<32x128xf32>
    %23 = arith.addf %19, %22 : vector<32x128xf32>
    %cst_20 = arith.constant 0.000000e+00 : f32
    %24 = vector.broadcast %cst_20 : f32 to vector<32x128xf32>
    %25 = arith.maximumf %23, %24 : vector<32x128xf32>
    %26 = arith.truncf %25 : vector<32x128xf32> to vector<32x128xbf16>
    %c0_21 = arith.constant 0 : index
    %c0_22 = arith.constant 0 : index
    %c0_23 = arith.constant 0 : index
    %27 = vector.load %arg9[%c0_21, %c0_22, %c0_23] : memref<1x128x128xbf16, #tpu.memory_space<vmem>>, vector<1x128x128xbf16>
    %28 = vector.shape_cast %27 : vector<1x128x128xbf16> to vector<128x128xbf16>
    %cst_24 = arith.constant dense<0.000000e+00> : vector<32x128xf32>
    %29 = tpu.matmul %26, %28, %cst_24 {dimension_numbers = #tpu.dot_dimension_numbers<[1], [0], [0], [1], [0, 0, 1, 1], [], []>} : vector<32x128xbf16>, vector<128x128xbf16>, vector<32x128xf32> -> vector<32x128xf32>
    %c0_25 = arith.constant 0 : index
    %c0_26 = arith.constant 0 : index
    %c0_27 = arith.constant 0 : index
    %30 = vector.load %arg10[%c0_25, %c0_26, %c0_27] : memref<1x1x128xf32, #tpu.memory_space<vmem>>, vector<1x1x128xf32>
    %31 = vector.shape_cast %30 : vector<1x1x128xf32> to vector<1x128xf32>
    %32 = vector.broadcast %31 : vector<1x128xf32> to vector<32x128xf32>
    %33 = arith.addf %29, %32 : vector<32x128xf32>
    %cst_28 = arith.constant 0.000000e+00 : f32
    %34 = vector.broadcast %cst_28 : f32 to vector<32x128xf32>
    %35 = arith.maximumf %33, %34 : vector<32x128xf32>
    %c0_29 = arith.constant 0 : index
    %c0_30 = arith.constant 0 : index
    %36 = vector.load %arg11[%c0_29, %c0_30] : memref<32x128xf32, #tpu.memory_space<vmem>>, vector<32x128xf32>
    tpu.vector_store %arg11[%c0_29, %c0_30], %35 {strides = array<i32>} : memref<32x128xf32, #tpu.memory_space<vmem>>, vector<32x128xf32>,
    return
  }
  func.func @transform_0(%arg0: i32, %arg1: memref<3xi32, #tpu.memory_space<smem>>) -> (i32, i32) {
    %c0_i32 = arith.constant 0 : i32
    %c0_i32_0 = arith.constant 0 : i32
    return %arg0, %c0_i32 : i32, i32
  }
  func.func @transform_1(%arg0: i32, %arg1: memref<3xi32, #tpu.memory_space<smem>>) -> (i32, i32) {
    %c0_i32 = arith.constant 0 : i32
    %c0_i32_0 = arith.constant 0 : i32
    %c0_i32_1 = arith.constant 0 : i32
    return %c0_i32, %c0_i32_0 : i32, i32
  }
  func.func @transform_2(%arg0: i32, %arg1: memref<3xi32, #tpu.memory_space<smem>>) -> (i32, i32) {
    %c0_i32 = arith.constant 0 : i32
    %c0_i32_0 = arith.constant 0 : i32
    return %arg0, %c0_i32 : i32, i32
  }
  func.func @transform_3(%arg0: i32, %arg1: memref<3xi32, #tpu.memory_space<smem>>) -> (i32, i32, i32) {
    %0 = arith.index_cast %arg0 : i32 to index
    %1 = memref.load %arg1[%0] : memref<3xi32, #tpu.memory_space<smem>>
    %c0_i32 = arith.constant 0 : i32
    %c0_i32_0 = arith.constant 0 : i32
    %c0_i32_1 = arith.constant 0 : i32
    return %1, %c0_i32, %c0_i32_0 : i32, i32, i32
  }
  func.func @transform_4(%arg0: i32, %arg1: memref<3xi32, #tpu.memory_space<smem>>) -> (i32, i32, i32) {
    %0 = arith.index_cast %arg0 : i32 to index
    %1 = memref.load %arg1[%0] : memref<3xi32, #tpu.memory_space<smem>>
    %c0_i32 = arith.constant 0 : i32
    %c0_i32_0 = arith.constant 0 : i32
    %c0_i32_1 = arith.constant 0 : i32
    return %1, %c0_i32, %c0_i32_0 : i32, i32, i32
  }
  func.func @transform_5(%arg0: i32, %arg1: memref<3xi32, #tpu.memory_space<smem>>) -> (i32, i32, i32) {
    %0 = arith.index_cast %arg0 : i32 to index
    %1 = memref.load %arg1[%0] : memref<3xi32, #tpu.memory_space<smem>>
    %c0_i32 = arith.constant 0 : i32
    %c0_i32_0 = arith.constant 0 : i32
    %c0_i32_1 = arith.constant 0 : i32
    return %1, %c0_i32, %c0_i32_0 : i32, i32, i32
  }
  func.func @transform_6(%arg0: i32, %arg1: memref<3xi32, #tpu.memory_space<smem>>) -> (i32, i32, i32) {
    %0 = arith.index_cast %arg0 : i32 to index
    %1 = memref.load %arg1[%0] : memref<3xi32, #tpu.memory_space<smem>>
    %c0_i32 = arith.constant 0 : i32
    %c0_i32_0 = arith.constant 0 : i32
    %c0_i32_1 = arith.constant 0 : i32
    return %1, %c0_i32, %c0_i32_0 : i32, i32, i32
  }
  func.func @transform_7(%arg0: i32, %arg1: memref<3xi32, #tpu.memory_space<smem>>) -> (i32, i32, i32) {
    %0 = arith.index_cast %arg0 : i32 to index
    %1 = memref.load %arg1[%0] : memref<3xi32, #tpu.memory_space<smem>>
    %c0_i32 = arith.constant 0 : i32
    %c0_i32_0 = arith.constant 0 : i32
    %c0_i32_1 = arith.constant 0 : i32
    return %1, %c0_i32, %c0_i32_0 : i32, i32, i32
  }
  func.func @transform_8(%arg0: i32, %arg1: memref<3xi32, #tpu.memory_space<smem>>) -> (i32, i32, i32) {
    %0 = arith.index_cast %arg0 : i32 to index
    %1 = memref.load %arg1[%0] : memref<3xi32, #tpu.memory_space<smem>>
    %c0_i32 = arith.constant 0 : i32
    %c0_i32_0 = arith.constant 0 : i32
    %c0_i32_1 = arith.constant 0 : i32
    return %1, %c0_i32, %c0_i32_0 : i32, i32, i32
  }
  func.func @transform_9(%arg0: i32, %arg1: memref<3xi32, #tpu.memory_space<smem>>) -> (i32, i32) {
    %c0_i32 = arith.constant 0 : i32
    %c0_i32_0 = arith.constant 0 : i32
    return %arg0, %c0_i32 : i32, i32
  }
}

module attributes {stable_mosaic.version = 11 : i64} {
  func.func @cinpp_kernel(%arg0: i32, %arg1: memref<3xi32, #tpu.memory_space<smem>>, %arg2: memref<32x384xbf16, #tpu.memory_space<vmem>>, %arg3: memref<384x128xbf16, #tpu.memory_space<vmem>>, %arg4: memref<32x128xf32, #tpu.memory_space<vmem>>, %arg5: memref<1x128x128xbf16, #tpu.memory_space<vmem>>, %arg6: memref<1x1x128xf32, #tpu.memory_space<vmem>>, %arg7: memref<1x128x128xbf16, #tpu.memory_space<vmem>>, %arg8: memref<1x1x128xf32, #tpu.memory_space<vmem>>, %arg9: memref<1x128x128xbf16, #tpu.memory_space<vmem>>, %arg10: memref<1x1x128xf32, #tpu.memory_space<vmem>>, %arg11: memref<32x128xf32, #tpu.memory_space<vmem>>) attributes {dimension_semantics = [#tpu.dimension_semantics<parallel>], iteration_bounds = array<i64: 3>, scalar_prefetch = 1 : i64, scratch_operands = 0 : i64, tpu.core_type = #tpu.core_type<tc>, window_params = [{transform_indices = @transform_0, window_bounds = array<i64: 32, 384>}, {pipeline_mode = #tpu.pipeline_mode<synchronous>, transform_indices = @transform_1, window_bounds = array<i64: 384, 128>}, {transform_indices = @transform_2, window_bounds = array<i64: 32, 128>}, {transform_indices = @transform_3, window_bounds = array<i64: 1, 128, 128>}, {transform_indices = @transform_4, window_bounds = array<i64: 1, 1, 128>}, {transform_indices = @transform_5, window_bounds = array<i64: 1, 128, 128>}, {transform_indices = @transform_6, window_bounds = array<i64: 1, 1, 128>}, {transform_indices = @transform_7, window_bounds = array<i64: 1, 128, 128>}, {transform_indices = @transform_8, window_bounds = array<i64: 1, 1, 128>}, {transform_indices = @transform_9, window_bounds = array<i64: 32, 128>}]} {
    %c0 = arith.constant 0 : index
    %c0_0 = arith.constant 0 : index
    %0 = vector.load %arg2[%c0, %c0_0] : memref<32x384xbf16, #tpu.memory_space<vmem>>, vector<32x384xbf16>
    %c0_1 = arith.constant 0 : index
    %c0_2 = arith.constant 0 : index
    %1 = vector.load %arg3[%c0_1, %c0_2] : memref<384x128xbf16, #tpu.memory_space<vmem>>, vector<384x128xbf16>
    %cst = arith.constant dense<0.000000e+00> : vector<32x128xf32>
    %2 = tpu.matmul %0, %1, %cst {dimension_numbers = #tpu.dot_dimension_numbers<[1], [0], [0], [1], [0, 0, 1, 1], [], []>} : vector<32x384xbf16>, vector<384x128xbf16>, vector<32x128xf32> -> vector<32x128xf32>
    %c0_3 = arith.constant 0 : index
    %c0_4 = arith.constant 0 : index
    %3 = vector.load %arg4[%c0_3, %c0_4] : memref<32x128xf32, #tpu.memory_space<vmem>>, vector<32x128xf32>
    %4 = arith.addf %2, %3 : vector<32x128xf32>
    %5 = arith.truncf %4 : vector<32x128xf32> to vector<32x128xbf16>
    %c0_5 = arith.constant 0 : index
    %c0_6 = arith.constant 0 : index
    %c0_7 = arith.constant 0 : index
    %6 = vector.load %arg5[%c0_5, %c0_6, %c0_7] : memref<1x128x128xbf16, #tpu.memory_space<vmem>>, vector<1x128x128xbf16>
    %7 = vector.shape_cast %6 : vector<1x128x128xbf16> to vector<128x128xbf16>
    %cst_8 = arith.constant dense<0.000000e+00> : vector<32x128xf32>
    %8 = tpu.matmul %5, %7, %cst_8 {dimension_numbers = #tpu.dot_dimension_numbers<[1], [0], [0], [1], [0, 0, 1, 1], [], []>} : vector<32x128xbf16>, vector<128x128xbf16>, vector<32x128xf32> -> vector<32x128xf32>
    %c0_9 = arith.constant 0 : index
    %c0_10 = arith.constant 0 : index
    %c0_11 = arith.constant 0 : index
    %9 = vector.load %arg6[%c0_9, %c0_10, %c0_11] : memref<1x1x128xf32, #tpu.memory_space<vmem>>, vector<1x1x128xf32>
    %10 = vector.shape_cast %9 : vector<1x1x128xf32> to vector<1x128xf32>
    %11 = vector.broadcast %10 : vector<1x128xf32> to vector<32x128xf32>
    %12 = arith.addf %8, %11 : vector<32x128xf32>
    %cst_12 = arith.constant 0.000000e+00 : f32
    %13 = vector.broadcast %cst_12 : f32 to vector<32x128xf32>
    %14 = arith.maximumf %12, %13 : vector<32x128xf32>
    %15 = arith.truncf %14 : vector<32x128xf32> to vector<32x128xbf16>
    %c0_13 = arith.constant 0 : index
    %c0_14 = arith.constant 0 : index
    %c0_15 = arith.constant 0 : index
    %16 = vector.load %arg7[%c0_13, %c0_14, %c0_15] : memref<1x128x128xbf16, #tpu.memory_space<vmem>>, vector<1x128x128xbf16>
    %17 = vector.shape_cast %16 : vector<1x128x128xbf16> to vector<128x128xbf16>
    %cst_16 = arith.constant dense<0.000000e+00> : vector<32x128xf32>
    %18 = tpu.matmul %15, %17, %cst_16 {dimension_numbers = #tpu.dot_dimension_numbers<[1], [0], [0], [1], [0, 0, 1, 1], [], []>} : vector<32x128xbf16>, vector<128x128xbf16>, vector<32x128xf32> -> vector<32x128xf32>
    %c0_17 = arith.constant 0 : index
    %c0_18 = arith.constant 0 : index
    %c0_19 = arith.constant 0 : index
    %19 = vector.load %arg8[%c0_17, %c0_18, %c0_19] : memref<1x1x128xf32, #tpu.memory_space<vmem>>, vector<1x1x128xf32>
    %20 = vector.shape_cast %19 : vector<1x1x128xf32> to vector<1x128xf32>
    %21 = vector.broadcast %20 : vector<1x128xf32> to vector<32x128xf32>
    %22 = arith.addf %18, %21 : vector<32x128xf32>
    %cst_20 = arith.constant 0.000000e+00 : f32
    %23 = vector.broadcast %cst_20 : f32 to vector<32x128xf32>
    %24 = arith.maximumf %22, %23 : vector<32x128xf32>
    %25 = arith.truncf %24 : vector<32x128xf32> to vector<32x128xbf16>
    %c0_21 = arith.constant 0 : index
    %c0_22 = arith.constant 0 : index
    %c0_23 = arith.constant 0 : index
    %26 = vector.load %arg9[%c0_21, %c0_22, %c0_23] : memref<1x128x128xbf16, #tpu.memory_space<vmem>>, vector<1x128x128xbf16>
    %27 = vector.shape_cast %26 : vector<1x128x128xbf16> to vector<128x128xbf16>
    %cst_24 = arith.constant dense<0.000000e+00> : vector<32x128xf32>
    %28 = tpu.matmul %25, %27, %cst_24 {dimension_numbers = #tpu.dot_dimension_numbers<[1], [0], [0], [1], [0, 0, 1, 1], [], []>} : vector<32x128xbf16>, vector<128x128xbf16>, vector<32x128xf32> -> vector<32x128xf32>
    %c0_25 = arith.constant 0 : index
    %c0_26 = arith.constant 0 : index
    %c0_27 = arith.constant 0 : index
    %29 = vector.load %arg10[%c0_25, %c0_26, %c0_27] : memref<1x1x128xf32, #tpu.memory_space<vmem>>, vector<1x1x128xf32>
    %30 = vector.shape_cast %29 : vector<1x1x128xf32> to vector<1x128xf32>
    %31 = vector.broadcast %30 : vector<1x128xf32> to vector<32x128xf32>
    %32 = arith.addf %28, %31 : vector<32x128xf32>
    %cst_28 = arith.constant 0.000000e+00 : f32
    %33 = vector.broadcast %cst_28 : f32 to vector<32x128xf32>
    %34 = arith.maximumf %32, %33 : vector<32x128xf32>
    %c0_29 = arith.constant 0 : index
    %c0_30 = arith.constant 0 : index
    %35 = vector.load %arg11[%c0_29, %c0_30] : memref<32x128xf32, #tpu.memory_space<vmem>>, vector<32x128xf32>
    tpu.vector_store %arg11[%c0_29, %c0_30], %34 {strides = array<i32>} : memref<32x128xf32, #tpu.memory_space<vmem>>, vector<32x128xf32>,
    return
  }
  func.func @transform_0(%arg0: i32, %arg1: memref<3xi32, #tpu.memory_space<smem>>) -> (i32, i32) {
    %c0_i32 = arith.constant 0 : i32
    %c0_i32_0 = arith.constant 0 : i32
    return %arg0, %c0_i32 : i32, i32
  }
  func.func @transform_1(%arg0: i32, %arg1: memref<3xi32, #tpu.memory_space<smem>>) -> (i32, i32) {
    %c0_i32 = arith.constant 0 : i32
    %c0_i32_0 = arith.constant 0 : i32
    %c0_i32_1 = arith.constant 0 : i32
    return %c0_i32, %c0_i32_0 : i32, i32
  }
  func.func @transform_2(%arg0: i32, %arg1: memref<3xi32, #tpu.memory_space<smem>>) -> (i32, i32) {
    %c0_i32 = arith.constant 0 : i32
    %c0_i32_0 = arith.constant 0 : i32
    return %arg0, %c0_i32 : i32, i32
  }
  func.func @transform_3(%arg0: i32, %arg1: memref<3xi32, #tpu.memory_space<smem>>) -> (i32, i32, i32) {
    %0 = arith.index_cast %arg0 : i32 to index
    %1 = memref.load %arg1[%0] : memref<3xi32, #tpu.memory_space<smem>>
    %c0_i32 = arith.constant 0 : i32
    %c0_i32_0 = arith.constant 0 : i32
    %c0_i32_1 = arith.constant 0 : i32
    return %1, %c0_i32, %c0_i32_0 : i32, i32, i32
  }
  func.func @transform_4(%arg0: i32, %arg1: memref<3xi32, #tpu.memory_space<smem>>) -> (i32, i32, i32) {
    %0 = arith.index_cast %arg0 : i32 to index
    %1 = memref.load %arg1[%0] : memref<3xi32, #tpu.memory_space<smem>>
    %c0_i32 = arith.constant 0 : i32
    %c0_i32_0 = arith.constant 0 : i32
    %c0_i32_1 = arith.constant 0 : i32
    return %1, %c0_i32, %c0_i32_0 : i32, i32, i32
  }
  func.func @transform_5(%arg0: i32, %arg1: memref<3xi32, #tpu.memory_space<smem>>) -> (i32, i32, i32) {
    %0 = arith.index_cast %arg0 : i32 to index
    %1 = memref.load %arg1[%0] : memref<3xi32, #tpu.memory_space<smem>>
    %c0_i32 = arith.constant 0 : i32
    %c0_i32_0 = arith.constant 0 : i32
    %c0_i32_1 = arith.constant 0 : i32
    return %1, %c0_i32, %c0_i32_0 : i32, i32, i32
  }
  func.func @transform_6(%arg0: i32, %arg1: memref<3xi32, #tpu.memory_space<smem>>) -> (i32, i32, i32) {
    %0 = arith.index_cast %arg0 : i32 to index
    %1 = memref.load %arg1[%0] : memref<3xi32, #tpu.memory_space<smem>>
    %c0_i32 = arith.constant 0 : i32
    %c0_i32_0 = arith.constant 0 : i32
    %c0_i32_1 = arith.constant 0 : i32
    return %1, %c0_i32, %c0_i32_0 : i32, i32, i32
  }
  func.func @transform_7(%arg0: i32, %arg1: memref<3xi32, #tpu.memory_space<smem>>) -> (i32, i32, i32) {
    %0 = arith.index_cast %arg0 : i32 to index
    %1 = memref.load %arg1[%0] : memref<3xi32, #tpu.memory_space<smem>>
    %c0_i32 = arith.constant 0 : i32
    %c0_i32_0 = arith.constant 0 : i32
    %c0_i32_1 = arith.constant 0 : i32
    return %1, %c0_i32, %c0_i32_0 : i32, i32, i32
  }
  func.func @transform_8(%arg0: i32, %arg1: memref<3xi32, #tpu.memory_space<smem>>) -> (i32, i32, i32) {
    %0 = arith.index_cast %arg0 : i32 to index
    %1 = memref.load %arg1[%0] : memref<3xi32, #tpu.memory_space<smem>>
    %c0_i32 = arith.constant 0 : i32
    %c0_i32_0 = arith.constant 0 : i32
    %c0_i32_1 = arith.constant 0 : i32
    return %1, %c0_i32, %c0_i32_0 : i32, i32, i32
  }
  func.func @transform_9(%arg0: i32, %arg1: memref<3xi32, #tpu.memory_space<smem>>) -> (i32, i32) {
    %c0_i32 = arith.constant 0 : i32
    %c0_i32_0 = arith.constant 0 : i32
    return %arg0, %c0_i32 : i32, i32
  }
}

module attributes {stable_mosaic.version = 11 : i64} {
  func.func @cinpp_kernel(%arg0: i32, %arg1: memref<3xi32, #tpu.memory_space<smem>>, %arg2: memref<32x384xbf16, #tpu.memory_space<vmem>>, %arg3: memref<384x128xbf16, #tpu.memory_space<vmem>>, %arg4: memref<32x128xf32, #tpu.memory_space<vmem>>, %arg5: memref<1x128x128xbf16, #tpu.memory_space<vmem>>, %arg6: memref<1x1x128xf32, #tpu.memory_space<vmem>>, %arg7: memref<1x128x128xbf16, #tpu.memory_space<vmem>>, %arg8: memref<1x1x128xf32, #tpu.memory_space<vmem>>, %arg9: memref<1x128x128xbf16, #tpu.memory_space<vmem>>, %arg10: memref<1x1x128xf32, #tpu.memory_space<vmem>>, %arg11: memref<32x128xf32, #tpu.memory_space<vmem>>) attributes {dimension_semantics = [#tpu.dimension_semantics<parallel>], iteration_bounds = array<i64: 3>, scalar_prefetch = 1 : i64, scratch_operands = 0 : i64, tpu.core_type = #tpu.core_type<tc>, window_params = [{transform_indices = @transform_0, window_bounds = array<i64: 32, 384>}, {pipeline_mode = #tpu.pipeline_mode<synchronous>, transform_indices = @transform_1, window_bounds = array<i64: 384, 128>}, {transform_indices = @transform_2, window_bounds = array<i64: 32, 128>}, {transform_indices = @transform_3, window_bounds = array<i64: 1, 128, 128>}, {transform_indices = @transform_4, window_bounds = array<i64: 1, 1, 128>}, {transform_indices = @transform_5, window_bounds = array<i64: 1, 128, 128>}, {transform_indices = @transform_6, window_bounds = array<i64: 1, 1, 128>}, {transform_indices = @transform_7, window_bounds = array<i64: 1, 128, 128>}, {transform_indices = @transform_8, window_bounds = array<i64: 1, 1, 128>}, {transform_indices = @transform_9, window_bounds = array<i64: 32, 128>}]} {
    %c0 = arith.constant 0 : index
    %c0_0 = arith.constant 0 : index
    %0 = vector.load %arg2[%c0, %c0_0] : memref<32x384xbf16, #tpu.memory_space<vmem>>, vector<32x384xbf16>
    %c0_1 = arith.constant 0 : index
    %c0_2 = arith.constant 0 : index
    %1 = vector.load %arg3[%c0_1, %c0_2] : memref<384x128xbf16, #tpu.memory_space<vmem>>, vector<384x128xbf16>
    %cst = arith.constant dense<0.000000e+00> : vector<32x128xf32>
    %2 = tpu.matmul %0, %1, %cst {dimension_numbers = #tpu.dot_dimension_numbers<[1], [0], [0], [1], [0, 0, 1, 1], [], []>} : vector<32x384xbf16>, vector<384x128xbf16>, vector<32x128xf32> -> vector<32x128xf32>
    %c0_3 = arith.constant 0 : index
    %c0_4 = arith.constant 0 : index
    %3 = vector.load %arg4[%c0_3, %c0_4] : memref<32x128xf32, #tpu.memory_space<vmem>>, vector<32x128xf32>
    %4 = arith.addf %2, %3 : vector<32x128xf32>
    %5 = arith.truncf %4 : vector<32x128xf32> to vector<32x128xbf16>
    %c0_5 = arith.constant 0 : index
    %c0_6 = arith.constant 0 : index
    %c0_7 = arith.constant 0 : index
    %6 = vector.load %arg5[%c0_5, %c0_6, %c0_7] : memref<1x128x128xbf16, #tpu.memory_space<vmem>>, vector<1x128x128xbf16>
    %7 = vector.shape_cast %6 : vector<1x128x128xbf16> to vector<128x128xbf16>
    %cst_8 = arith.constant dense<0.000000e+00> : vector<32x128xf32>
    %8 = tpu.matmul %5, %7, %cst_8 {dimension_numbers = #tpu.dot_dimension_numbers<[1], [0], [0], [1], [0, 0, 1, 1], [], []>} : vector<32x128xbf16>, vector<128x128xbf16>, vector<32x128xf32> -> vector<32x128xf32>
    %c0_9 = arith.constant 0 : index
    %c0_10 = arith.constant 0 : index
    %c0_11 = arith.constant 0 : index
    %9 = vector.load %arg6[%c0_9, %c0_10, %c0_11] : memref<1x1x128xf32, #tpu.memory_space<vmem>>, vector<1x1x128xf32>
    %10 = vector.shape_cast %9 : vector<1x1x128xf32> to vector<1x128xf32>
    %11 = vector.broadcast %10 : vector<1x128xf32> to vector<32x128xf32>
    %12 = arith.addf %8, %11 : vector<32x128xf32>
    %cst_12 = arith.constant 0.000000e+00 : f32
    %13 = vector.broadcast %cst_12 : f32 to vector<32x128xf32>
    %14 = arith.maximumf %12, %13 : vector<32x128xf32>
    %15 = arith.truncf %14 : vector<32x128xf32> to vector<32x128xbf16>
    %c0_13 = arith.constant 0 : index
    %c0_14 = arith.constant 0 : index
    %c0_15 = arith.constant 0 : index
    %16 = vector.load %arg7[%c0_13, %c0_14, %c0_15] : memref<1x128x128xbf16, #tpu.memory_space<vmem>>, vector<1x128x128xbf16>
    %17 = vector.shape_cast %16 : vector<1x128x128xbf16> to vector<128x128xbf16>
    %cst_16 = arith.constant dense<0.000000e+00> : vector<32x128xf32>
    %18 = tpu.matmul %15, %17, %cst_16 {dimension_numbers = #tpu.dot_dimension_numbers<[1], [0], [0], [1], [0, 0, 1, 1], [], []>} : vector<32x128xbf16>, vector<128x128xbf16>, vector<32x128xf32> -> vector<32x128xf32>
    %c0_17 = arith.constant 0 : index
    %c0_18 = arith.constant 0 : index
    %c0_19 = arith.constant 0 : index
    %19 = vector.load %arg8[%c0_17, %c0_18, %c0_19] : memref<1x1x128xf32, #tpu.memory_space<vmem>>, vector<1x1x128xf32>
    %20 = vector.shape_cast %19 : vector<1x1x128xf32> to vector<1x128xf32>
    %21 = vector.broadcast %20 : vector<1x128xf32> to vector<32x128xf32>
    %22 = arith.addf %18, %21 : vector<32x128xf32>
    %cst_20 = arith.constant 0.000000e+00 : f32
    %23 = vector.broadcast %cst_20 : f32 to vector<32x128xf32>
    %24 = arith.maximumf %22, %23 : vector<32x128xf32>
    %25 = arith.truncf %24 : vector<32x128xf32> to vector<32x128xbf16>
    %c0_21 = arith.constant 0 : index
    %c0_22 = arith.constant 0 : index
    %c0_23 = arith.constant 0 : index
    %26 = vector.load %arg9[%c0_21, %c0_22, %c0_23] : memref<1x128x128xbf16, #tpu.memory_space<vmem>>, vector<1x128x128xbf16>
    %27 = vector.shape_cast %26 : vector<1x128x128xbf16> to vector<128x128xbf16>
    %cst_24 = arith.constant dense<0.000000e+00> : vector<32x128xf32>
    %28 = tpu.matmul %25, %27, %cst_24 {dimension_numbers = #tpu.dot_dimension_numbers<[1], [0], [0], [1], [0, 0, 1, 1], [], []>} : vector<32x128xbf16>, vector<128x128xbf16>, vector<32x128xf32> -> vector<32x128xf32>
    %c0_25 = arith.constant 0 : index
    %c0_26 = arith.constant 0 : index
    %c0_27 = arith.constant 0 : index
    %29 = vector.load %arg10[%c0_25, %c0_26, %c0_27] : memref<1x1x128xf32, #tpu.memory_space<vmem>>, vector<1x1x128xf32>
    %30 = vector.shape_cast %29 : vector<1x1x128xf32> to vector<1x128xf32>
    %31 = vector.broadcast %30 : vector<1x128xf32> to vector<32x128xf32>
    %32 = arith.addf %28, %31 : vector<32x128xf32>
    %cst_28 = arith.constant 0.000000e+00 : f32
    %33 = vector.broadcast %cst_28 : f32 to vector<32x128xf32>
    %34 = arith.maximumf %32, %33 : vector<32x128xf32>
    %c0_29 = arith.constant 0 : index
    %c0_30 = arith.constant 0 : index
    %35 = vector.load %arg11[%c0_29, %c0_30] : memref<32x128xf32, #tpu.memory_space<vmem>>, vector<32x128xf32>
    tpu.vector_store %arg11[%c0_29, %c0_30], %34 {strides = array<i32>} : memref<32x128xf32, #tpu.memory_space<vmem>>, vector<32x128xf32>,
    return
  }
  func.func @transform_0(%arg0: i32, %arg1: memref<3xi32, #tpu.memory_space<smem>>) -> (i32, i32) {
    %c0_i32 = arith.constant 0 : i32
    %c0_i32_0 = arith.constant 0 : i32
    return %arg0, %c0_i32 : i32, i32
  }
  func.func @transform_1(%arg0: i32, %arg1: memref<3xi32, #tpu.memory_space<smem>>) -> (i32, i32) {
    %c0_i32 = arith.constant 0 : i32
    %c0_i32_0 = arith.constant 0 : i32
    %c0_i32_1 = arith.constant 0 : i32
    return %c0_i32, %c0_i32_0 : i32, i32
  }
  func.func @transform_2(%arg0: i32, %arg1: memref<3xi32, #tpu.memory_space<smem>>) -> (i32, i32) {
    %c0_i32 = arith.constant 0 : i32
    %c0_i32_0 = arith.constant 0 : i32
    return %arg0, %c0_i32 : i32, i32
  }
  func.func @transform_3(%arg0: i32, %arg1: memref<3xi32, #tpu.memory_space<smem>>) -> (i32, i32, i32) {
    %0 = arith.index_cast %arg0 : i32 to index
    %1 = memref.load %arg1[%0] : memref<3xi32, #tpu.memory_space<smem>>
    %c0_i32 = arith.constant 0 : i32
    %c0_i32_0 = arith.constant 0 : i32
    %c0_i32_1 = arith.constant 0 : i32
    return %1, %c0_i32, %c0_i32_0 : i32, i32, i32
  }
  func.func @transform_4(%arg0: i32, %arg1: memref<3xi32, #tpu.memory_space<smem>>) -> (i32, i32, i32) {
    %0 = arith.index_cast %arg0 : i32 to index
    %1 = memref.load %arg1[%0] : memref<3xi32, #tpu.memory_space<smem>>
    %c0_i32 = arith.constant 0 : i32
    %c0_i32_0 = arith.constant 0 : i32
    %c0_i32_1 = arith.constant 0 : i32
    return %1, %c0_i32, %c0_i32_0 : i32, i32, i32
  }
  func.func @transform_5(%arg0: i32, %arg1: memref<3xi32, #tpu.memory_space<smem>>) -> (i32, i32, i32) {
    %0 = arith.index_cast %arg0 : i32 to index
    %1 = memref.load %arg1[%0] : memref<3xi32, #tpu.memory_space<smem>>
    %c0_i32 = arith.constant 0 : i32
    %c0_i32_0 = arith.constant 0 : i32
    %c0_i32_1 = arith.constant 0 : i32
    return %1, %c0_i32, %c0_i32_0 : i32, i32, i32
  }
  func.func @transform_6(%arg0: i32, %arg1: memref<3xi32, #tpu.memory_space<smem>>) -> (i32, i32, i32) {
    %0 = arith.index_cast %arg0 : i32 to index
    %1 = memref.load %arg1[%0] : memref<3xi32, #tpu.memory_space<smem>>
    %c0_i32 = arith.constant 0 : i32
    %c0_i32_0 = arith.constant 0 : i32
    %c0_i32_1 = arith.constant 0 : i32
    return %1, %c0_i32, %c0_i32_0 : i32, i32, i32
  }
  func.func @transform_7(%arg0: i32, %arg1: memref<3xi32, #tpu.memory_space<smem>>) -> (i32, i32, i32) {
    %0 = arith.index_cast %arg0 : i32 to index
    %1 = memref.load %arg1[%0] : memref<3xi32, #tpu.memory_space<smem>>
    %c0_i32 = arith.constant 0 : i32
    %c0_i32_0 = arith.constant 0 : i32
    %c0_i32_1 = arith.constant 0 : i32
    return %1, %c0_i32, %c0_i32_0 : i32, i32, i32
  }
  func.func @transform_8(%arg0: i32, %arg1: memref<3xi32, #tpu.memory_space<smem>>) -> (i32, i32, i32) {
    %0 = arith.index_cast %arg0 : i32 to index
    %1 = memref.load %arg1[%0] : memref<3xi32, #tpu.memory_space<smem>>
    %c0_i32 = arith.constant 0 : i32
    %c0_i32_0 = arith.constant 0 : i32
    %c0_i32_1 = arith.constant 0 : i32
    return %1, %c0_i32, %c0_i32_0 : i32, i32, i32
  }
  func.func @transform_9(%arg0: i32, %arg1: memref<3xi32, #tpu.memory_space<smem>>) -> (i32, i32) {
    %c0_i32 = arith.constant 0 : i32
    %c0_i32_0 = arith.constant 0 : i32
    return %arg0, %c0_i32 : i32, i32
  }
}

</mosaic_0001>

<llo_original>
// kernel: tpu_custom_call.1
$region0: #{tpu_custom_call.1}
  #allocation0 [shape = 'u32[]', space=smem, size = 0x4, offset = 0x4, fixed_abs, tag = 'smem constant byte address 0x4 - core index']
  #allocation1 [shape = 'u32[144,128]{1,0:T(1,128)}', space=vmem, size = 0x12000, scoped, tag = 'internal scratch']
  #allocation2 [shape = 's32[1]{0}', space=sflag, size = 0x4, scoped, tag = 'scoped memory for tpu_custom_call.1']
  #allocation3 [shape = 'u8[512]{0}', space=smem, size = 0x200, scoped, tag = 'prefetched SMEM operand 0']
  %s0 = inlined_call_operand.hbm [shape: s32[3], index: 0, kind: input, shape index: {}]
  %s1 = inlined_call_operand.hbm [shape: s8[96,384], index: 1, kind: input, shape index: {}]
  %s2 = inlined_call_operand.hbm [shape: bf16[384,128], index: 2, kind: input, shape index: {}]
  %s3 = inlined_call_operand.hbm [shape: f32[96,128], index: 3, kind: input, shape index: {}]
  %s4 = inlined_call_operand.hbm [shape: bf16[3,128,128], index: 4, kind: input, shape index: {}]
  %s5 = inlined_call_operand.vmem [shape: f32[3,1,128], index: 5, kind: input, shape index: {}]
  %s6 = inlined_call_operand.hbm [shape: bf16[3,128,128], index: 6, kind: input, shape index: {}]
  %s7 = inlined_call_operand.vmem [shape: f32[3,1,128], index: 7, kind: input, shape index: {}]
  %s8 = inlined_call_operand.hbm [shape: bf16[3,128,128], index: 8, kind: input, shape index: {}]
  %s9 = inlined_call_operand.vmem [shape: f32[3,1,128], index: 9, kind: input, shape index: {}]
  %s10 = inlined_call_operand.hbm [shape: f32[96,128], index: 10, kind: output, shape index: {}]
  %s11 = sld [smem:[#allocation0]]
  $region93: #{tpu_custom_call.1} parent=0
    _
  %s13 = ssub.s32 1, %s11
  %s14 = scalar_select 0, %s13, %s11
  %16 = dma.hbm_to_smem %s0, 16, [#allocation3], [#allocation2]
  %17 = dma.done [#allocation2], 16
  %18 = sfence
  $region1: #{tpu_custom_call.1} parent=0
    #allocation4 [shape = 'u8[24576]{0}', space=vmem, size = 0x6000, scoped, tag = 'input window, operand 1']
    #allocation5 [shape = 's32[2]{0}', space=sflag, size = 0x8, scoped, tag = 'scoped memory for tpu_custom_call.1']
    #allocation6 [shape = 's32[2]{0}', space=sflag, size = 0x8, scoped, tag = 'scoped memory for tpu_custom_call.1']
    #allocation7 [shape = 'u8[98304]{0}', space=vmem, size = 0x18000, scoped, tag = 'input window, operand 2, single buffered']
    #allocation8 [shape = 's32[1]{0}', space=sflag, size = 0x4, scoped, tag = 'scoped memory for tpu_custom_call.1']
    #allocation9 [shape = 'u8[32768]{0}', space=vmem, size = 0x8000, scoped, tag = 'input window, operand 3']
    #allocation10 [shape = 'u8[65536]{0}', space=vmem, size = 0x10000, scoped, tag = 'input window, operand 4']
    #allocation11 [shape = 'u8[65536]{0}', space=vmem, size = 0x10000, scoped, tag = 'input window, operand 6']
    #allocation12 [shape = 'u8[65536]{0}', space=vmem, size = 0x10000, scoped, tag = 'input window, operand 8']
    #allocation13 [shape = 'u8[32768]{0}', space=vmem, size = 0x8000, scoped, tag = 'output window, operand 0']
    %19 = vsyncpa [#allocation5], 0
    %s20 = scalar_lea.sflag [#allocation5], 1
    %21 = vsyncpa %s20, 0
    %22 = vsyncpa [#allocation8], 0
    %23 = vsyncpa [#allocation6], 0
    %s24 = scalar_lea.sflag [#allocation6], 1
    %25 = vsyncpa %s24, 0
    loop: start=0, step=1, limit=5
    $region2: #{tpu_custom_call.1} parent=1 // loop_pre_header
      _
    $region3: #{tpu_custom_call.1} parent=1 // loop_header
      %s27 = sphi 0, %s31
      %p28 = scmp.ge.s32.totalorder %s27, 5
      %s37 = sphi 0, %s39
      %s40 = sphi 0, %s37
      %s41 = sphi 0, %s40
      %s57 = sphi 0, %s41
      %s61 = sphi 0, %s61
      %s63 = sphi 0, %s61
      %s64 = sphi 0, %s63
      %s78 = sphi 0, %s64
      %s84 = sphi 0, %s86
      %s87 = sphi 0, %s84
      %s88 = sphi 0, %s87
      %s104 = sphi 0, %s88
      %s112 = sphi 0, %s114
      %s115 = sphi 0, %s112
      %s116 = sphi 0, %s115
      %s132 = sphi 0, %s116
      %s140 = sphi 0, %s142
      %s143 = sphi 0, %s140
      %s144 = sphi 0, %s143
      %s160 = sphi 0, %s144
      %s168 = sphi 0, %s170
      %s171 = sphi 0, %s168
      %s172 = sphi 0, %s171
      %s188 = sphi 0, %s172
      %s196 = sphi 0, %s198
      %s199 = sphi 0, %s196
      %s200 = sphi 0, %s199
      %s216 = sphi 0, %s200
      %s224 = sphi 0, %s226
      %s227 = sphi 0, %s224
      %s228 = sphi 0, %s227
      %s244 = sphi 0, %s228
      %s252 = sphi 0, %s254
      %s255 = sphi 0, %s252
      %s256 = sphi 0, %s255
      %s272 = sphi 0, %s256
      %s278 = sphi 0, %s280
      %s281 = sphi 0, %s278
      %s282 = sphi 0, %s281
      %s298 = sphi 0, %s282
    $region4: #{tpu_custom_call.1} parent=1 // loop_header_branch
      %30 = sbr.rel (%p28) target = $region8
    $region5: #{tpu_custom_call.1} parent=1 // loop_body
      %s32 = ssub.s32 %s27, 1
      %s33 = ssub.s32 %s27, 2
      %s34 = sadd.s32 %s27, 1
      %s35 = ssub.s32 %s27, %s34
      %p36 = scmp.eq.s32.totalorder %s35, 0
      %s38 = sadd.s32 %s37, 1
      %s39 = scalar_select %p36, %s37, %s38
      %p42 = pneg %p36
      %p43 = scmp.eq.s32.totalorder %s27, 2
      %p44 = por %p42, %p43
      %p45 = scmp.ne.s32.totalorder %s37, %s40
      %p46 = scmp.eq.s32.totalorder %s27, 0
      %p47 = por %p45, %p46
      %p48 = scmp.ne.s32.totalorder %s37, %s40
      %p49 = scmp.eq.s32.totalorder %s32, 2
      %p50 = por %p48, %p49
      %p51 = scmp.ne.s32.totalorder %s40, %s41
      %p52 = scmp.eq.s32.totalorder %s32, 0
      %p53 = por %p51, %p52
      %p54 = scmp.ne.s32.totalorder %s40, %s41
      %p55 = scmp.eq.s32.totalorder %s33, 2
      %p56 = por %p54, %p55
      %p58 = scmp.ne.s32.totalorder %s41, %s57
      %p59 = scmp.eq.s32.totalorder %s33, 0
      %p60 = por %p58, %p59
      %s62 = sadd.s32 %s61, 1
      %p65 = scmp.eq.s32.totalorder %s27, 2
      %p66 = scmp.ne.s32.totalorder %s61, %s63
      %p67 = scmp.eq.s32.totalorder %s27, 0
      %p68 = por %p66, %p67
      %p69 = scmp.ne.s32.totalorder %s61, %s63
      %p70 = scmp.eq.s32.totalorder %s32, 2
      %p71 = por %p69, %p70
      %p72 = scmp.ne.s32.totalorder %s63, %s64
      %p73 = scmp.eq.s32.totalorder %s32, 0
      %p74 = por %p72, %p73
      %p75 = scmp.ne.s32.totalorder %s63, %s64
      %p76 = scmp.eq.s32.totalorder %s33, 2
      %p77 = por %p75, %p76
      %p79 = scmp.ne.s32.totalorder %s64, %s78
      %p80 = scmp.eq.s32.totalorder %s33, 0
      %p81 = por %p79, %p80
      %s82 = ssub.s32 %s27, %s34
      %p83 = scmp.eq.s32.totalorder %s82, 0
      %s85 = sadd.s32 %s84, 1
      %s86 = scalar_select %p83, %s84, %s85
      %p89 = pneg %p83
      %p90 = scmp.eq.s32.totalorder %s27, 2
      %p91 = por %p89, %p90
      %p92 = scmp.ne.s32.totalorder %s84, %s87
      %p93 = scmp.eq.s32.totalorder %s27, 0
      %p94 = por %p92, %p93
      %p95 = scmp.ne.s32.totalorder %s84, %s87
      %p96 = scmp.eq.s32.totalorder %s32, 2
      %p97 = por %p95, %p96
      %p98 = scmp.ne.s32.totalorder %s87, %s88
      %p99 = scmp.eq.s32.totalorder %s32, 0
      %p100 = por %p98, %p99
      %p101 = scmp.ne.s32.totalorder %s87, %s88
      %p102 = scmp.eq.s32.totalorder %s33, 2
      %p103 = por %p101, %p102
      %p105 = scmp.ne.s32.totalorder %s88, %s104
      %p106 = scmp.eq.s32.totalorder %s33, 0
      %p107 = por %p105, %p106
      %s108 = sld [smem:[#allocation3 + %s27]]
      %s109 = sld [smem:[#allocation3 + %s34]]
      %s110 = ssub.s32 %s108, %s109
      %p111 = scmp.eq.s32.totalorder %s110, 0
      %s113 = sadd.s32 %s112, 1
      %s114 = scalar_select %p111, %s112, %s113
      %p117 = pneg %p111
      %p118 = scmp.eq.s32.totalorder %s27, 2
      %p119 = por %p117, %p118
      %p120 = scmp.ne.s32.totalorder %s112, %s115
      %p121 = scmp.eq.s32.totalorder %s27, 0
      %p122 = por %p120, %p121
      %p123 = scmp.ne.s32.totalorder %s112, %s115
      %p124 = scmp.eq.s32.totalorder %s32, 2
      %p125 = por %p123, %p124
      %p126 = scmp.ne.s32.totalorder %s115, %s116
      %p127 = scmp.eq.s32.totalorder %s32, 0
      %p128 = por %p126, %p127
      %p129 = scmp.ne.s32.totalorder %s115, %s116
      %p130 = scmp.eq.s32.totalorder %s33, 2
      %p131 = por %p129, %p130
      %p133 = scmp.ne.s32.totalorder %s116, %s132
      %p134 = scmp.eq.s32.totalorder %s33, 0
      %p135 = por %p133, %p134
      %s136 = sld [smem:[#allocation3 + %s27]]
      %s137 = sld [smem:[#allocation3 + %s34]]
      %s138 = ssub.s32 %s136, %s137
      %p139 = scmp.eq.s32.totalorder %s138, 0
      %s141 = sadd.s32 %s140, 1
      %s142 = scalar_select %p139, %s140, %s141
      %p145 = pneg %p139
      %p146 = scmp.eq.s32.totalorder %s27, 2
      %p147 = por %p145, %p146
      %p148 = scmp.ne.s32.totalorder %s140, %s143
      %p149 = scmp.eq.s32.totalorder %s27, 0
      %p150 = por %p148, %p149
      %p151 = scmp.ne.s32.totalorder %s140, %s143
      %p152 = scmp.eq.s32.totalorder %s32, 2
      %p153 = por %p151, %p152
      %p154 = scmp.ne.s32.totalorder %s143, %s144
      %p155 = scmp.eq.s32.totalorder %s32, 0
      %p156 = por %p154, %p155
      %p157 = scmp.ne.s32.totalorder %s143, %s144
      %p158 = scmp.eq.s32.totalorder %s33, 2
      %p159 = por %p157, %p158
      %p161 = scmp.ne.s32.totalorder %s144, %s160
      %p162 = scmp.eq.s32.totalorder %s33, 0
      %p163 = por %p161, %p162
      %s164 = sld [smem:[#allocation3 + %s27]]
      %s165 = sld [smem:[#allocation3 + %s34]]
      %s166 = ssub.s32 %s164, %s165
      %p167 = scmp.eq.s32.totalorder %s166, 0
      %s169 = sadd.s32 %s168, 1
      %s170 = scalar_select %p167, %s168, %s169
      %p173 = pneg %p167
      %p174 = scmp.eq.s32.totalorder %s27, 2
      %p175 = por %p173, %p174
      %p176 = scmp.ne.s32.totalorder %s168, %s171
      %p177 = scmp.eq.s32.totalorder %s27, 0
      %p178 = por %p176, %p177
      %p179 = scmp.ne.s32.totalorder %s168, %s171
      %p180 = scmp.eq.s32.totalorder %s32, 2
      %p181 = por %p179, %p180
      %p182 = scmp.ne.s32.totalorder %s171, %s172
      %p183 = scmp.eq.s32.totalorder %s32, 0
      %p184 = por %p182, %p183
      %p185 = scmp.ne.s32.totalorder %s171, %s172
      %p186 = scmp.eq.s32.totalorder %s33, 2
      %p187 = por %p185, %p186
      %p189 = scmp.ne.s32.totalorder %s172, %s188
      %p190 = scmp.eq.s32.totalorder %s33, 0
      %p191 = por %p189, %p190
      %s192 = sld [smem:[#allocation3 + %s27]]
      %s193 = sld [smem:[#allocation3 + %s34]]
      %s194 = ssub.s32 %s192, %s193
      %p195 = scmp.eq.s32.totalorder %s194, 0
      %s197 = sadd.s32 %s196, 1
      %s198 = scalar_select %p195, %s196, %s197
      %p201 = pneg %p195
      %p202 = scmp.eq.s32.totalorder %s27, 2
      %p203 = por %p201, %p202
      %p204 = scmp.ne.s32.totalorder %s196, %s199
      %p205 = scmp.eq.s32.totalorder %s27, 0
      %p206 = por %p204, %p205
      %p207 = scmp.ne.s32.totalorder %s196, %s199
      %p208 = scmp.eq.s32.totalorder %s32, 2
      %p209 = por %p207, %p208
      %p210 = scmp.ne.s32.totalorder %s199, %s200
      %p211 = scmp.eq.s32.totalorder %s32, 0
      %p212 = por %p210, %p211
      %p213 = scmp.ne.s32.totalorder %s199, %s200
      %p214 = scmp.eq.s32.totalorder %s33, 2
      %p215 = por %p213, %p214
      %p217 = scmp.ne.s32.totalorder %s200, %s216
      %p218 = scmp.eq.s32.totalorder %s33, 0
      %p219 = por %p217, %p218
      %s220 = sld [smem:[#allocation3 + %s27]]
      %s221 = sld [smem:[#allocation3 + %s34]]
      %s222 = ssub.s32 %s220, %s221
      %p223 = scmp.eq.s32.totalorder %s222, 0
      %s225 = sadd.s32 %s224, 1
      %s226 = scalar_select %p223, %s224, %s225
      %p229 = pneg %p223
      %p230 = scmp.eq.s32.totalorder %s27, 2
      %p231 = por %p229, %p230
      %p232 = scmp.ne.s32.totalorder %s224, %s227
      %p233 = scmp.eq.s32.totalorder %s27, 0
      %p234 = por %p232, %p233
      %p235 = scmp.ne.s32.totalorder %s224, %s227
      %p236 = scmp.eq.s32.totalorder %s32, 2
      %p237 = por %p235, %p236
      %p238 = scmp.ne.s32.totalorder %s227, %s228
      %p239 = scmp.eq.s32.totalorder %s32, 0
      %p240 = por %p238, %p239
      %p241 = scmp.ne.s32.totalorder %s227, %s228
      %p242 = scmp.eq.s32.totalorder %s33, 2
      %p243 = por %p241, %p242
      %p245 = scmp.ne.s32.totalorder %s228, %s244
      %p246 = scmp.eq.s32.totalorder %s33, 0
      %p247 = por %p245, %p246
      %s248 = sld [smem:[#allocation3 + %s27]]
      %s249 = sld [smem:[#allocation3 + %s34]]
      %s250 = ssub.s32 %s248, %s249
      %p251 = scmp.eq.s32.totalorder %s250, 0
      %s253 = sadd.s32 %s252, 1
      %s254 = scalar_select %p251, %s252, %s253
      %p257 = pneg %p251
      %p258 = scmp.eq.s32.totalorder %s27, 2
      %p259 = por %p257, %p258
      %p260 = scmp.ne.s32.totalorder %s252, %s255
      %p261 = scmp.eq.s32.totalorder %s27, 0
      %p262 = por %p260, %p261
      %p263 = scmp.ne.s32.totalorder %s252, %s255
      %p264 = scmp.eq.s32.totalorder %s32, 2
      %p265 = por %p263, %p264
      %p266 = scmp.ne.s32.totalorder %s255, %s256
      %p267 = scmp.eq.s32.totalorder %s32, 0
      %p268 = por %p266, %p267
      %p269 = scmp.ne.s32.totalorder %s255, %s256
      %p270 = scmp.eq.s32.totalorder %s33, 2
      %p271 = por %p269, %p270
      %p273 = scmp.ne.s32.totalorder %s256, %s272
      %p274 = scmp.eq.s32.totalorder %s33, 0
      %p275 = por %p273, %p274
      %s276 = ssub.s32 %s27, %s34
      %p277 = scmp.eq.s32.totalorder %s276, 0
      %s279 = sadd.s32 %s278, 1
      %s280 = scalar_select %p277, %s278, %s279
      %p283 = pneg %p277
      %p284 = scmp.eq.s32.totalorder %s27, 2
      %p285 = por %p283, %p284
      %p286 = scmp.ne.s32.totalorder %s278, %s281
      %p287 = scmp.eq.s32.totalorder %s27, 0
      %p288 = por %p286, %p287
      %p289 = scmp.ne.s32.totalorder %s278, %s281
      %p290 = scmp.eq.s32.totalorder %s32, 2
      %p291 = por %p289, %p290
      %p292 = scmp.ne.s32.totalorder %s281, %s282
      %p293 = scmp.eq.s32.totalorder %s32, 0
      %p294 = por %p292, %p293
      %p295 = scmp.ne.s32.totalorder %s281, %s282
      %p296 = scmp.eq.s32.totalorder %s33, 2
      %p297 = por %p295, %p296
      %p299 = scmp.ne.s32.totalorder %s282, %s298
      %p300 = scmp.eq.s32.totalorder %s33, 0
      %p301 = por %p299, %p300
      %p302 = scmp.le.s32.totalorder 1, %s27
      %p303 = scmp.lt.s32.totalorder %s27, 4
      %p304 = pnand %p302, %p303
      %p305 = pneg %p304
      // Predicated region
      $region9: #{tpu_custom_call.1} parent=5 // pred_check
        _
      $region10: #{tpu_custom_call.1} parent=5 // pred_check_branch
        %307 = sbr.rel (%p304) target = $region12
      $region11: #{tpu_custom_call.1} parent=5 // pred_region
        %s308 = ssub.s32 %s27, 1
        // Predicated region
        $region13: #{tpu_custom_call.1} parent=11 // pred_check
          %p309 = pneg %p74
        $region14: #{tpu_custom_call.1} parent=11 // pred_check_branch
          %311 = sbr.rel (%p309) target = $region16
        $region15: #{tpu_custom_call.1} parent=11 // pred_region
          %s313 = ssub.s32 3072, 3072
          %314 = vsyncadd [#allocation8], %s313
          %s315 = sshll.u32 [#allocation7], 4
          %s316 = int_to_ptr.vmem [resolvable:$true] %s315
          %321 = dma.hbm_to_vmem [thread:$0]  %s2, 3072, %s316, [#allocation8], 64, 64, 4
        $region16: #{tpu_custom_call.1} parent=11 // pred_fallthru
          _
      $region12: #{tpu_custom_call.1} parent=5 // pred_fallthru
        _
      %p322 = scmp.lt.s32.totalorder %s27, 3
      // Predicated region
      $region17: #{tpu_custom_call.1} parent=5 // pred_check
        %p323 = pneg %p322
      $region18: #{tpu_custom_call.1} parent=5 // pred_check_branch
        %325 = sbr.rel (%p323) target = $region20
      $region19: #{tpu_custom_call.1} parent=5 // pred_region
        // Predicated region
        $region21: #{tpu_custom_call.1} parent=19 // pred_check
          %p326 = pneg %p47
        $region22: #{tpu_custom_call.1} parent=19 // pred_check_branch
          %328 = sbr.rel (%p326) target = $region24
        $region23: #{tpu_custom_call.1} parent=19 // pred_region
          %s329 = sand.u32 %s27, 1
          %s330 = scalar_lea.sflag [#allocation5], %s329
          %s331 = sand.u32 %s37, 1
          %s332 = smul.addr %s331, 24
          %s333 = scalar_lea.vmem [#allocation4], %s332
          %s335 = ssub.s32 384, 384
          %336 = vsyncadd %s330, %s335
          %s337 = smul.addr %s27, 3
          %s338 = smul.addr %s337, 128
          %s339 = scalar_lea.hbm %s1, %s338
          %s341 = sshll.u32 %s333, 4
          %s342 = int_to_ptr.vmem [resolvable:$true] %s341
          %344 = dma.hbm_to_vmem [thread:$0]  %s339, 384, %s342, %s330
        $region24: #{tpu_custom_call.1} parent=19 // pred_fallthru
          _
        // Predicated region
        $region25: #{tpu_custom_call.1} parent=19 // pred_check
          %p345 = pneg %p94
        $region26: #{tpu_custom_call.1} parent=19 // pred_check_branch
          %347 = sbr.rel (%p345) target = $region28
        $region27: #{tpu_custom_call.1} parent=19 // pred_region
          %s348 = sand.u32 %s27, 1
          %s349 = scalar_lea.sflag [#allocation5], %s348
          %s350 = sand.u32 %s84, 1
          %s351 = smul.addr %s350, 32
          %s352 = scalar_lea.vmem [#allocation9], %s351
          %s353 = smul.u32 4, %s27
          %s355 = ssub.s32 512, 512
          %356 = vsyncadd %s349, %s355
          %s357 = smul.addr %s353, 128
          %s358 = scalar_lea.hbm %s3, %s357
          %s359 = sshll.u32 %s352, 4
          %s360 = int_to_ptr.vmem [resolvable:$true] %s359
          %365 = dma.hbm_to_vmem [thread:$0]  %s358, 512, %s360, %s349, 128, 128, 8
        $region28: #{tpu_custom_call.1} parent=19 // pred_fallthru
          _
        // Predicated region
        $region29: #{tpu_custom_call.1} parent=19 // pred_check
          %p366 = pneg %p122
        $region30: #{tpu_custom_call.1} parent=19 // pred_check_branch
          %368 = sbr.rel (%p366) target = $region32
        $region31: #{tpu_custom_call.1} parent=19 // pred_region
          %s369 = sand.u32 %s27, 1
          %s370 = scalar_lea.sflag [#allocation5], %s369
          %s371 = sand.u32 %s112, 1
          %s372 = smul.addr %s371, 64
          %s373 = scalar_lea.vmem [#allocation10], %s372
          %s374 = sld [smem:[#allocation3 + %s27]]
          %s376 = ssub.s32 1024, 1024
          %377 = vsyncadd %s370, %s376
          %s378 = smul.addr %s374, 16
          %s379 = smul.addr %s378, 64
          %s380 = scalar_lea.hbm %s4, %s379
          %s381 = sshll.u32 %s373, 4
          %s382 = int_to_ptr.vmem [resolvable:$true] %s381
          %387 = dma.hbm_to_vmem [thread:$0]  %s380, 1024, %s382, %s370, 64, 64, 4
        $region32: #{tpu_custom_call.1} parent=19 // pred_fallthru
          _
        // Predicated region
        $region33: #{tpu_custom_call.1} parent=19 // pred_check
          %p388 = pneg %p150
        $region34: #{tpu_custom_call.1} parent=19 // pred_check_branch
          %390 = sbr.rel (%p388) target = $region36
        $region35: #{tpu_custom_call.1} parent=19 // pred_region
          %s391 = sld [smem:[#allocation3 + %s27]]
          %p392 = scmp.lt.s32.totalorder %s391, 2
          %s393 = scalar_select %p392, %s391, 2
          %s394 = scalar_lea.vmem %s5, %s393
          %s395 = sld [smem:[#allocation3 + %s27]]
        $region36: #{tpu_custom_call.1} parent=19 // pred_fallthru
          _
        // Predicated region
        $region37: #{tpu_custom_call.1} parent=19 // pred_check
          %p396 = pneg %p178
        $region38: #{tpu_custom_call.1} parent=19 // pred_check_branch
          %398 = sbr.rel (%p396) target = $region40
        $region39: #{tpu_custom_call.1} parent=19 // pred_region
          %s399 = sand.u32 %s27, 1
          %s400 = scalar_lea.sflag [#allocation5], %s399
          %s401 = sand.u32 %s168, 1
          %s402 = smul.addr %s401, 64
          %s403 = scalar_lea.vmem [#allocation11], %s402
          %s404 = sld [smem:[#allocation3 + %s27]]
          %s406 = ssub.s32 1024, 1024
          %407 = vsyncadd %s400, %s406
          %s408 = smul.addr %s404, 16
          %s409 = smul.addr %s408, 64
          %s410 = scalar_lea.hbm %s6, %s409
          %s411 = sshll.u32 %s403, 4
          %s412 = int_to_ptr.vmem [resolvable:$true] %s411
          %417 = dma.hbm_to_vmem [thread:$0]  %s410, 1024, %s412, %s400, 64, 64, 4
        $region40: #{tpu_custom_call.1} parent=19 // pred_fallthru
          _
        // Predicated region
        $region41: #{tpu_custom_call.1} parent=19 // pred_check
          %p418 = pneg %p206
        $region42: #{tpu_custom_call.1} parent=19 // pred_check_branch
          %420 = sbr.rel (%p418) target = $region44
        $region43: #{tpu_custom_call.1} parent=19 // pred_region
          %s421 = sld [smem:[#allocation3 + %s27]]
          %p422 = scmp.lt.s32.totalorder %s421, 2
          %s423 = scalar_select %p422, %s421, 2
          %s424 = scalar_lea.vmem %s7, %s423
          %s425 = sld [smem:[#allocation3 + %s27]]
        $region44: #{tpu_custom_call.1} parent=19 // pred_fallthru
          _
        // Predicated region
        $region45: #{tpu_custom_call.1} parent=19 // pred_check
          %p426 = pneg %p234
        $region46: #{tpu_custom_call.1} parent=19 // pred_check_branch
          %428 = sbr.rel (%p426) target = $region48
        $region47: #{tpu_custom_call.1} parent=19 // pred_region
          %s429 = sand.u32 %s27, 1
          %s430 = scalar_lea.sflag [#allocation5], %s429
          %s431 = sand.u32 %s224, 1
          %s432 = smul.addr %s431, 64
          %s433 = scalar_lea.vmem [#allocation12], %s432
          %s434 = sld [smem:[#allocation3 + %s27]]
          %s436 = ssub.s32 1024, 1024
          %437 = vsyncadd %s430, %s436
          %s438 = smul.addr %s434, 16
          %s439 = smul.addr %s438, 64
          %s440 = scalar_lea.hbm %s8, %s439
          %s441 = sshll.u32 %s433, 4
          %s442 = int_to_ptr.vmem [resolvable:$true] %s441
          %447 = dma.hbm_to_vmem [thread:$0]  %s440, 1024, %s442, %s430, 64, 64, 4
        $region48: #{tpu_custom_call.1} parent=19 // pred_fallthru
          _
        // Predicated region
        $region49: #{tpu_custom_call.1} parent=19 // pred_check
          %p448 = pneg %p262
        $region50: #{tpu_custom_call.1} parent=19 // pred_check_branch
          %450 = sbr.rel (%p448) target = $region52
        $region51: #{tpu_custom_call.1} parent=19 // pred_region
          %s451 = sld [smem:[#allocation3 + %s27]]
          %p452 = scmp.lt.s32.totalorder %s451, 2
          %s453 = scalar_select %p452, %s451, 2
          %s454 = scalar_lea.vmem %s9, %s453
          %s455 = sld [smem:[#allocation3 + %s27]]
        $region52: #{tpu_custom_call.1} parent=19 // pred_fallthru
          _
      $region20: #{tpu_custom_call.1} parent=5 // pred_fallthru
        _
      %p456 = scmp.le.s32.totalorder 1, %s27
      %p457 = scmp.lt.s32.totalorder %s27, 4
      %p458 = pnand %p456, %p457
      %p459 = pneg %p458
      // Predicated region
      $region53: #{tpu_custom_call.1} parent=5 // pred_check
        _
      $region54: #{tpu_custom_call.1} parent=5 // pred_check_branch
        %461 = sbr.rel (%p458) target = $region56
      $region55: #{tpu_custom_call.1} parent=5 // pred_region
        %s462 = ssub.s32 %s27, 1
        %s463 = sand.u32 %s32, 1
        %s464 = scalar_lea.sflag [#allocation5], %s463
        %s465 = sand.u32 %s40, 1
        %s466 = smul.addr %s465, 24
        %s467 = scalar_lea.vmem [#allocation4], %s466
        // Predicated region
        $region57: #{tpu_custom_call.1} parent=55 // pred_check
          %p468 = pneg %p53
        $region58: #{tpu_custom_call.1} parent=55 // pred_check_branch
          %470 = sbr.rel (%p468) target = $region60
        $region59: #{tpu_custom_call.1} parent=55 // pred_region
          %471 = dma.done %s464, 384
        $region60: #{tpu_custom_call.1} parent=55 // pred_fallthru
          _
        // Predicated region
        $region61: #{tpu_custom_call.1} parent=55 // pred_check
          %p472 = pneg %p74
        $region62: #{tpu_custom_call.1} parent=55 // pred_check_branch
          %474 = sbr.rel (%p472) target = $region64
        $region63: #{tpu_custom_call.1} parent=55 // pred_region
          %475 = dma.done [#allocation8], 3072
        $region64: #{tpu_custom_call.1} parent=55 // pred_fallthru
          _
        %s476 = sand.u32 %s32, 1
        %s477 = scalar_lea.sflag [#allocation5], %s476
        %s478 = sand.u32 %s87, 1
        %s479 = smul.addr %s478, 32
        %s480 = scalar_lea.vmem [#allocation9], %s479
        // Predicated region
        $region65: #{tpu_custom_call.1} parent=55 // pred_check
          %p481 = pneg %p100
        $region66: #{tpu_custom_call.1} parent=55 // pred_check_branch
          %483 = sbr.rel (%p481) target = $region68
        $region67: #{tpu_custom_call.1} parent=55 // pred_region
          %484 = dma.done %s477, 512
        $region68: #{tpu_custom_call.1} parent=55 // pred_fallthru
          _
        %s485 = sand.u32 %s32, 1
        %s486 = scalar_lea.sflag [#allocation5], %s485
        %s487 = sand.u32 %s115, 1
        %s488 = smul.addr %s487, 64
        %s489 = scalar_lea.vmem [#allocation10], %s488
        // Predicated region
        $region69: #{tpu_custom_call.1} parent=55 // pred_check
          %p490 = pneg %p128
        $region70: #{tpu_custom_call.1} parent=55 // pred_check_branch
          %492 = sbr.rel (%p490) target = $region72
        $region71: #{tpu_custom_call.1} parent=55 // pred_region
          %493 = dma.done %s486, 1024
        $region72: #{tpu_custom_call.1} parent=55 // pred_fallthru
          _
        %s494 = sand.u32 %s32, 1
        %s495 = scalar_lea.sflag [#allocation5], %s494
        %s496 = sand.u32 %s171, 1
        %s497 = smul.addr %s496, 64
        %s498 = scalar_lea.vmem [#allocation11], %s497
        // Predicated region
        $region73: #{tpu_custom_call.1} parent=55 // pred_check
          %p499 = pneg %p184
        $region74: #{tpu_custom_call.1} parent=55 // pred_check_branch
          %501 = sbr.rel (%p499) target = $region76
        $region75: #{tpu_custom_call.1} parent=55 // pred_region
          %502 = dma.done %s495, 1024
        $region76: #{tpu_custom_call.1} parent=55 // pred_fallthru
          _
        %s503 = sand.u32 %s32, 1
        %s504 = scalar_lea.sflag [#allocation5], %s503
        %s505 = sand.u32 %s227, 1
        %s506 = smul.addr %s505, 64
        %s507 = scalar_lea.vmem [#allocation12], %s506
        // Predicated region
        $region77: #{tpu_custom_call.1} parent=55 // pred_check
          %p508 = pneg %p240
        $region78: #{tpu_custom_call.1} parent=55 // pred_check_branch
          %510 = sbr.rel (%p508) target = $region80
        $region79: #{tpu_custom_call.1} parent=55 // pred_region
          %511 = dma.done %s504, 1024
        $region80: #{tpu_custom_call.1} parent=55 // pred_fallthru
          _
        %s512 = sand.u32 %s32, 1
        %s513 = scalar_lea.sflag [#allocation5], %s512
        %s514 = sand.u32 %s40, 1
        %s515 = smul.addr %s514, 24
        %s516 = scalar_lea.vmem [#allocation4], %s515
        %p517 = pneg %p53
        %p518 = pneg %p50
        %p519 = pneg %p74
        %p520 = pneg %p71
        %s521 = sand.u32 %s32, 1
        %s522 = scalar_lea.sflag [#allocation5], %s521
        %s523 = sand.u32 %s87, 1
        %s524 = smul.addr %s523, 32
        %s525 = scalar_lea.vmem [#allocation9], %s524
        %p526 = pneg %p100
        %p527 = pneg %p97
        %s528 = sand.u32 %s32, 1
        %s529 = scalar_lea.sflag [#allocation5], %s528
        %s530 = sand.u32 %s115, 1
        %s531 = smul.addr %s530, 64
        %s532 = scalar_lea.vmem [#allocation10], %s531
        %p533 = pneg %p128
        %p534 = pneg %p125
        %s535 = sld [smem:[#allocation3 + %s32]]
        %p536 = scmp.lt.s32.totalorder %s535, 2
        %s537 = scalar_select %p536, %s535, 2
        %s538 = scalar_lea.vmem %s5, %s537
        %p539 = pneg %p156
        %p540 = pneg %p153
        %s541 = sand.u32 %s32, 1
        %s542 = scalar_lea.sflag [#allocation5], %s541
        %s543 = sand.u32 %s171, 1
        %s544 = smul.addr %s543, 64
        %s545 = scalar_lea.vmem [#allocation11], %s544
        %p546 = pneg %p184
        %p547 = pneg %p181
        %s548 = sld [smem:[#allocation3 + %s32]]
        %p549 = scmp.lt.s32.totalorder %s548, 2
        %s550 = scalar_select %p549, %s548, 2
        %s551 = scalar_lea.vmem %s7, %s550
        %p552 = pneg %p212
        %p553 = pneg %p209
        %s554 = sand.u32 %s32, 1
        %s555 = scalar_lea.sflag [#allocation5], %s554
        %s556 = sand.u32 %s227, 1
        %s557 = smul.addr %s556, 64
        %s558 = scalar_lea.vmem [#allocation12], %s557
        %p559 = pneg %p240
        %p560 = pneg %p237
        %s561 = sld [smem:[#allocation3 + %s32]]
        %p562 = scmp.lt.s32.totalorder %s561, 2
        %s563 = scalar_select %p562, %s561, 2
        %s564 = scalar_lea.vmem %s9, %s563
        %p565 = pneg %p268
        %p566 = pneg %p265
        %p567 = pneg %p294
        %p568 = pneg %p291
        %s569 = sand.u32 %s281, 1
        %s570 = scalar_lea.sflag [#allocation6], %s569
        %s571 = sand.u32 %s281, 1
        %s572 = smul.addr %s571, 32
        %s573 = scalar_lea.vmem [#allocation13], %s572
        %s574 = smul.u32 4, %s32
        %s575 = sld [smem:[#allocation3 + %s32]]
        %s576 = sld [smem:[#allocation3 + %s32]]
        %p577 = scmp.lt.s32.totalorder %s576, 2
        %s578 = scalar_select %p577, %s576, 2
        %s579 = scalar_lea.vmem %s5, %s578
        %s580 = sld [smem:[#allocation3 + %s32]]
        %s581 = sld [smem:[#allocation3 + %s32]]
        %s582 = sld [smem:[#allocation3 + %s32]]
        %p583 = scmp.lt.s32.totalorder %s582, 2
        %s584 = scalar_select %p583, %s582, 2
        %s585 = scalar_lea.vmem %s7, %s584
        %s586 = sld [smem:[#allocation3 + %s32]]
        %s587 = sld [smem:[#allocation3 + %s32]]
        %s588 = sld [smem:[#allocation3 + %s32]]
        %p589 = scmp.lt.s32.totalorder %s588, 2
        %s590 = scalar_select %p589, %s588, 2
        %s591 = scalar_lea.vmem %s9, %s590
        %s592 = sld [smem:[#allocation3 + %s32]]
        %s593 = smul.u32 4, %s32
        %v595 = vld [vmem:[%s467] sm:$0xff]
        %v596 = vld [vmem:[%s467 + $0x8] sm:$0xff]
        %v597 = vld [vmem:[%s467 + $0x10] sm:$0xff]
        %v598 = vunpack.c.l.s8.bf16 %v595
        %v599 = vunpack.c.l.s8.bf16 %v596
        %v600 = vunpack.c.l.s8.bf16 %v597
        %v601 = vunpack.c.h.s8.bf16 %v595
        %v602 = vunpack.c.h.s8.bf16 %v596
        %v603 = vunpack.c.h.s8.bf16 %v597
        %v604 = vld [vmem:[#allocation7] sm:$0xf]
        %v605 = vld [vmem:[#allocation7 + $0x4] sm:$0xf]
        %v606 = vld [vmem:[#allocation7 + $0x8] sm:$0xf]
        %v607 = vld [vmem:[#allocation7 + $0xc] sm:$0xf]
        %v608 = vld [vmem:[#allocation7 + $0x10] sm:$0xf]
        %v609 = vld [vmem:[#allocation7 + $0x14] sm:$0xf]
        %v610 = vld [vmem:[#allocation7 + $0x18] sm:$0xf]
        %v611 = vld [vmem:[#allocation7 + $0x1c] sm:$0xf]
        %v612 = vld [vmem:[#allocation7 + $0x20] sm:$0xf]
        %v613 = vld [vmem:[#allocation7 + $0x24] sm:$0xf]
        %v614 = vld [vmem:[#allocation7 + $0x28] sm:$0xf]
        %v615 = vld [vmem:[#allocation7 + $0x2c] sm:$0xf]
        %v616 = vld [vmem:[#allocation7 + $0x30] sm:$0xf]
        %v617 = vld [vmem:[#allocation7 + $0x34] sm:$0xf]
        %v618 = vld [vmem:[#allocation7 + $0x38] sm:$0xf]
        %v619 = vld [vmem:[#allocation7 + $0x3c] sm:$0xf]
        %v620 = vld [vmem:[#allocation7 + $0x40] sm:$0xf]
        %v621 = vld [vmem:[#allocation7 + $0x44] sm:$0xf]
        %v622 = vld [vmem:[#allocation7 + $0x48] sm:$0xf]
        %v623 = vld [vmem:[#allocation7 + $0x4c] sm:$0xf]
        %v624 = vld [vmem:[#allocation7 + $0x50] sm:$0xf]
        %v625 = vld [vmem:[#allocation7 + $0x54] sm:$0xf]
        %v626 = vld [vmem:[#allocation7 + $0x58] sm:$0xf]
        %v627 = vld [vmem:[#allocation7 + $0x5c] sm:$0xf]
        %v628 = vld [vmem:[#allocation7 + $0x60] sm:$0xf]
        %v629 = vld [vmem:[#allocation7 + $0x64] sm:$0xf]
        %v630 = vld [vmem:[#allocation7 + $0x68] sm:$0xf]
        %v631 = vld [vmem:[#allocation7 + $0x6c] sm:$0xf]
        %v632 = vld [vmem:[#allocation7 + $0x70] sm:$0xf]
        %v633 = vld [vmem:[#allocation7 + $0x74] sm:$0xf]
        %v634 = vld [vmem:[#allocation7 + $0x78] sm:$0xf]
        %v635 = vld [vmem:[#allocation7 + $0x7c] sm:$0xf]
        %v636 = vld [vmem:[#allocation7 + $0x80] sm:$0xf]
        %v637 = vld [vmem:[#allocation7 + $0x84] sm:$0xf]
        %v638 = vld [vmem:[#allocation7 + $0x88] sm:$0xf]
        %v639 = vld [vmem:[#allocation7 + $0x8c] sm:$0xf]
        %v640 = vld [vmem:[#allocation7 + $0x90] sm:$0xf]
        %v641 = vld [vmem:[#allocation7 + $0x94] sm:$0xf]
        %v642 = vld [vmem:[#allocation7 + $0x98] sm:$0xf]
        %v643 = vld [vmem:[#allocation7 + $0x9c] sm:$0xf]
        %v644 = vld [vmem:[#allocation7 + $0xa0] sm:$0xf]
        %v645 = vld [vmem:[#allocation7 + $0xa4] sm:$0xf]
        %v646 = vld [vmem:[#allocation7 + $0xa8] sm:$0xf]
        %v647 = vld [vmem:[#allocation7 + $0xac] sm:$0xf]
        %v648 = vld [vmem:[#allocation7 + $0xb0] sm:$0xf]
        %v649 = vld [vmem:[#allocation7 + $0xb4] sm:$0xf]
        %v650 = vld [vmem:[#allocation7 + $0xb8] sm:$0xf]
        %v651 = vld [vmem:[#allocation7 + $0xbc] sm:$0xf]
        %v652 = vld [vmem:[%s480] sm:$0xff]
        %v653 = vld [vmem:[%s480 + $0x8] sm:$0xff]
        %v654 = vld [vmem:[%s480 + $0x10] sm:$0xff]
        %v655 = vld [vmem:[%s480 + $0x18] sm:$0xff]
        %v704 = vunpack.c.l.b16 %v604
        %v705 = vunpack.c.l.b16 %v605
        %v706 = vunpack.c.l.b16 %v606
        %v707 = vunpack.c.l.b16 %v607
        %v708 = vunpack.c.l.b16 %v608
        %v709 = vunpack.c.l.b16 %v609
        %v710 = vunpack.c.l.b16 %v610
        %v711 = vunpack.c.l.b16 %v611
        %v712 = vunpack.c.l.b16 %v612
        %v713 = vunpack.c.l.b16 %v613
        %v714 = vunpack.c.l.b16 %v614
        %v715 = vunpack.c.l.b16 %v615
        %v716 = vunpack.c.l.b16 %v616
        %v717 = vunpack.c.l.b16 %v617
        %v718 = vunpack.c.l.b16 %v618
        %v719 = vunpack.c.l.b16 %v619
        %v720 = vunpack.c.l.b16 %v620
        %v721 = vunpack.c.l.b16 %v621
        %v722 = vunpack.c.l.b16 %v622
        %v723 = vunpack.c.l.b16 %v623
        %v724 = vunpack.c.l.b16 %v624
        %v725 = vunpack.c.l.b16 %v625
        %v726 = vunpack.c.l.b16 %v626
        %v727 = vunpack.c.l.b16 %v627
        %v728 = vunpack.c.l.b16 %v628
        %v729 = vunpack.c.l.b16 %v629
        %v730 = vunpack.c.l.b16 %v630
        %v731 = vunpack.c.l.b16 %v631
        %v732 = vunpack.c.l.b16 %v632
        %v733 = vunpack.c.l.b16 %v633
        %v734 = vunpack.c.l.b16 %v634
        %v735 = vunpack.c.l.b16 %v635
        %v736 = vunpack.c.l.b16 %v636
        %v737 = vunpack.c.l.b16 %v637
        %v738 = vunpack.c.l.b16 %v638
        %v739 = vunpack.c.l.b16 %v639
        %v740 = vunpack.c.l.b16 %v640
        %v741 = vunpack.c.l.b16 %v641
        %v742 = vunpack.c.l.b16 %v642
        %v743 = vunpack.c.l.b16 %v643
        %v744 = vunpack.c.l.b16 %v644
        %v745 = vunpack.c.l.b16 %v645
        %v746 = vunpack.c.l.b16 %v646
        %v747 = vunpack.c.l.b16 %v647
        %v748 = vunpack.c.l.b16 %v648
        %v749 = vunpack.c.l.b16 %v649
        %v750 = vunpack.c.l.b16 %v650
        %v751 = vunpack.c.l.b16 %v651
        %v752 = vpack.c.b16 %v705, %v704
        %v753 = vpack.c.b16 %v707, %v706
        %v754 = vpack.c.b16 %v709, %v708
        %v755 = vpack.c.b16 %v711, %v710
        %v756 = vpack.c.b16 %v713, %v712
        %v757 = vpack.c.b16 %v715, %v714
        %v758 = vpack.c.b16 %v717, %v716
        %v759 = vpack.c.b16 %v719, %v718
        %v760 = vpack.c.b16 %v721, %v720
        %v761 = vpack.c.b16 %v723, %v722
        %v762 = vpack.c.b16 %v725, %v724
        %v763 = vpack.c.b16 %v727, %v726
        %v764 = vpack.c.b16 %v729, %v728
        %v765 = vpack.c.b16 %v731, %v730
        %v766 = vpack.c.b16 %v733, %v732
        %v767 = vpack.c.b16 %v735, %v734
        %v768 = vpack.c.b16 %v737, %v736
        %v769 = vpack.c.b16 %v739, %v738
        %v770 = vpack.c.b16 %v741, %v740
        %v771 = vpack.c.b16 %v743, %v742
        %v772 = vpack.c.b16 %v745, %v744
        %v773 = vpack.c.b16 %v747, %v746
        %v774 = vpack.c.b16 %v749, %v748
        %v775 = vpack.c.b16 %v751, %v750
        %800 = vmatprep.subr.bf16.mxu0 0
        %801 = vmatpush1.bf16.msra.mxu0 %v752
        %802 = vmatprep.subr.bf16.mxu0 0
        %803 = vmatpush1.bf16.msra.mxu0 %v753
        %804 = vmatprep.subr.bf16.mxu0 0
        %805 = vmatpush1.bf16.msra.mxu0 %v754
        %806 = vmatprep.subr.bf16.mxu0 0
        %807 = vmatpush1.bf16.msra.mxu0 %v755
        %808 = vmatprep.subr.bf16.mxu0 0
        %809 = vmatpush1.bf16.msra.mxu0 %v756
        %810 = vmatprep.subr.bf16.mxu0 0
        %811 = vmatpush1.bf16.msra.mxu0 %v757
        %812 = vmatprep.subr.bf16.mxu0 0
        %813 = vmatpush1.bf16.msra.mxu0 %v758
        %814 = vmatprep.subr.bf16.mxu0 0
        %815 = vmatpush1.bf16.msra.mxu0 %v759
        %816 = vmatprep.subr.bf16.mxu0 0
        %817 = vmatpush1.bf16.msra.mxu0 %v760
        %818 = vmatprep.subr.bf16.mxu0 0
        %819 = vmatpush1.bf16.msra.mxu0 %v761
        %820 = vmatprep.subr.bf16.mxu0 0
        %821 = vmatpush1.bf16.msra.mxu0 %v762
        %822 = vmatprep.subr.bf16.mxu0 0
        %823 = vmatpush1.bf16.msra.mxu0 %v763
        %824 = vmatprep.subr.bf16.mxu0 0
        %825 = vmatpush1.bf16.msra.mxu0 %v764
        %826 = vmatprep.subr.bf16.mxu0 0
        %827 = vmatpush1.bf16.msra.mxu0 %v765
        %828 = vmatprep.subr.bf16.mxu0 0
        %829 = vmatpush1.bf16.msra.mxu0 %v766
        %830 = vmatprep.subr.bf16.mxu0 0
        %831 = vmatpush1.bf16.msra.mxu0 %v767
        %832 = vmatprep.mubr.bf16.mxu0 %v599
        %833 = vmatmul.mubr.bf16.gmra.mrb[0].mxu0 %v598
        %v834 = vpop.f32.mrb[0].mxu0
        %v835 = vadd.f32 %v652, %v834
        %v836 = vpop.f32.mrb[0].mxu0
        %v837 = vpop.f32.mrb[0].mxu0
        %v838 = vadd.f32 %v653, %v837
        %v839 = vpop.f32.mrb[0].mxu0
        %840 = vmatprep.mubr.bf16.mxu0 %v602
        %841 = vmatmul.mubr.bf16.gmra.mrb[0].mxu0 %v601
        %v842 = vpop.f32.mrb[0].mxu0
        %v843 = vadd.f32 %v654, %v842
        %v844 = vpop.f32.mrb[0].mxu0
        %v845 = vpop.f32.mrb[0].mxu0
        %v846 = vadd.f32 %v655, %v845
        %v847 = vpop.f32.mrb[0].mxu0
        %848 = vdwg.mxu0
        %849 = vmatprep.subr.bf16.mxu0 0
        %850 = vmatpush1.bf16.msra.mxu0 %v768
        %851 = vmatprep.subr.bf16.mxu0 0
        %852 = vmatpush1.bf16.msra.mxu0 %v769
        %853 = vmatprep.subr.bf16.mxu0 0
        %854 = vmatpush1.bf16.msra.mxu0 %v770
        %855 = vmatprep.subr.bf16.mxu0 0
        %856 = vmatpush1.bf16.msra.mxu0 %v771
        %857 = vmatprep.subr.bf16.mxu0 0
        %858 = vmatpush1.bf16.msra.mxu0 %v772
        %859 = vmatprep.subr.bf16.mxu0 0
        %860 = vmatpush1.bf16.msra.mxu0 %v773
        %861 = vmatprep.subr.bf16.mxu0 0
        %862 = vmatpush1.bf16.msra.mxu0 %v774
        %863 = vmatprep.subr.bf16.mxu0 0
        %864 = vmatpush1.bf16.msra.mxu0 %v775
        %865 = vmatprep.subr.bf16.mxu0 0
        %866 = vmatpush1.bf16.msra.mxu0 0
        %867 = vmatprep.subr.bf16.mxu0 0
        %868 = vmatpush1.bf16.msra.mxu0 0
        %869 = vmatprep.subr.bf16.mxu0 0
        %870 = vmatpush1.bf16.msra.mxu0 0
        %871 = vmatprep.subr.bf16.mxu0 0
        %872 = vmatpush1.bf16.msra.mxu0 0
        %873 = vmatprep.subr.bf16.mxu0 0
        %874 = vmatpush1.bf16.msra.mxu0 0
        %875 = vmatprep.subr.bf16.mxu0 0
        %876 = vmatpush1.bf16.msra.mxu0 0
        %877 = vmatprep.subr.bf16.mxu0 0
        %878 = vmatpush1.bf16.msra.mxu0 0
        %879 = vmatprep.subr.bf16.mxu0 0
        %880 = vmatpush1.bf16.msra.mxu0 0
        %881 = vmatprep.mubr.bf16.mxu0 0
        %882 = vmatmul.mubr.bf16.gmra.mrb[0].mxu0 %v600
        %v883 = vpop.f32.mrb[0].mxu0
        %v884 = vadd.f32 %v835, %v883
        %v885 = vpop.f32.mrb[0].mxu0
        %v886 = vpop.f32.mrb[0].mxu0
        %v887 = vadd.f32 %v838, %v886
        %v888 = vpop.f32.mrb[0].mxu0
        %889 = vmatprep.mubr.bf16.mxu0 0
        %890 = vmatmul.mubr.bf16.gmra.mrb[0].mxu0 %v603
        %v891 = vpop.f32.mrb[0].mxu0
        %v892 = vadd.f32 %v843, %v891
        %v893 = vpop.f32.mrb[0].mxu0
        %v894 = vpop.f32.mrb[0].mxu0
        %v895 = vadd.f32 %v846, %v894
        %v896 = vpop.f32.mrb[0].mxu0
        %897 = vdwg.mxu0
        %v898 = vpack.c.bf16 %v887, %v884
        %v899 = vpack.c.bf16 %v895, %v892
        %v900 = vld [vmem:[%s489] sm:$0xf]
        %v901 = vld [vmem:[%s489 + $0x4] sm:$0xf]
        %v902 = vld [vmem:[%s489 + $0x8] sm:$0xf]
        %v903 = vld [vmem:[%s489 + $0xc] sm:$0xf]
        %v904 = vld [vmem:[%s489 + $0x10] sm:$0xf]
        %v905 = vld [vmem:[%s489 + $0x14] sm:$0xf]
        %v906 = vld [vmem:[%s489 + $0x18] sm:$0xf]
        %v907 = vld [vmem:[%s489 + $0x1c] sm:$0xf]
        %v908 = vld [vmem:[%s489 + $0x20] sm:$0xf]
        %v909 = vld [vmem:[%s489 + $0x24] sm:$0xf]
        %v910 = vld [vmem:[%s489 + $0x28] sm:$0xf]
        %v911 = vld [vmem:[%s489 + $0x2c] sm:$0xf]
        %v912 = vld [vmem:[%s489 + $0x30] sm:$0xf]
        %v913 = vld [vmem:[%s489 + $0x34] sm:$0xf]
        %v914 = vld [vmem:[%s489 + $0x38] sm:$0xf]
        %v915 = vld [vmem:[%s489 + $0x3c] sm:$0xf]
        %v916 = vld [vmem:[%s579] sm:$0x1]
        %v918 = vlaneseq
        %v919 = vshrl.u32 %v918, 7
        %v920 = vsub.s32 0, %v919
        %v921 = vrot.slane %v916, %v920
        %v939 = vunpack.c.l.b16 %v900
        %v940 = vunpack.c.l.b16 %v901
        %v941 = vunpack.c.l.b16 %v902
        %v942 = vunpack.c.l.b16 %v903
        %v943 = vunpack.c.l.b16 %v904
        %v944 = vunpack.c.l.b16 %v905
        %v945 = vunpack.c.l.b16 %v906
        %v946 = vunpack.c.l.b16 %v907
        %v947 = vunpack.c.l.b16 %v908
        %v948 = vunpack.c.l.b16 %v909
        %v949 = vunpack.c.l.b16 %v910
        %v950 = vunpack.c.l.b16 %v911
        %v951 = vunpack.c.l.b16 %v912
        %v952 = vunpack.c.l.b16 %v913
        %v953 = vunpack.c.l.b16 %v914
        %v954 = vunpack.c.l.b16 %v915
        %v955 = vpack.c.b16 %v940, %v939
        %v956 = vpack.c.b16 %v942, %v941
        %v957 = vpack.c.b16 %v944, %v943
        %v958 = vpack.c.b16 %v946, %v945
        %v959 = vpack.c.b16 %v948, %v947
        %v960 = vpack.c.b16 %v950, %v949
        %v961 = vpack.c.b16 %v952, %v951
        %v962 = vpack.c.b16 %v954, %v953
        %971 = vmatprep.subr.bf16.mxu0 0
        %972 = vmatpush1.bf16.msra.mxu0 %v955
        %973 = vmatprep.subr.bf16.mxu0 0
        %974 = vmatpush1.bf16.msra.mxu0 %v956
        %975 = vmatprep.subr.bf16.mxu0 0
        %976 = vmatpush1.bf16.msra.mxu0 %v957
        %977 = vmatprep.subr.bf16.mxu0 0
        %978 = vmatpush1.bf16.msra.mxu0 %v958
        %979 = vmatprep.subr.bf16.mxu0 0
        %980 = vmatpush1.bf16.msra.mxu0 %v959
        %981 = vmatprep.subr.bf16.mxu0 0
        %982 = vmatpush1.bf16.msra.mxu0 %v960
        %983 = vmatprep.subr.bf16.mxu0 0
        %984 = vmatpush1.bf16.msra.mxu0 %v961
        %985 = vmatprep.subr.bf16.mxu0 0
        %986 = vmatpush1.bf16.msra.mxu0 %v962
        %987 = vmatprep.subr.bf16.mxu0 0
        %988 = vmatpush1.bf16.msra.mxu0 0
        %989 = vmatprep.subr.bf16.mxu0 0
        %990 = vmatpush1.bf16.msra.mxu0 0
        %991 = vmatprep.subr.bf16.mxu0 0
        %992 = vmatpush1.bf16.msra.mxu0 0
        %993 = vmatprep.subr.bf16.mxu0 0
        %994 = vmatpush1.bf16.msra.mxu0 0
        %995 = vmatprep.subr.bf16.mxu0 0
        %996 = vmatpush1.bf16.msra.mxu0 0
        %997 = vmatprep.subr.bf16.mxu0 0
        %998 = vmatpush1.bf16.msra.mxu0 0
        %999 = vmatprep.subr.bf16.mxu0 0
        %1000 = vmatpush1.bf16.msra.mxu0 0
        %1001 = vmatprep.subr.bf16.mxu0 0
        %1002 = vmatpush1.bf16.msra.mxu0 0
        %1003 = vmatprep.mubr.bf16.mxu0 0
        %1004 = vmatmul.mubr.bf16.gmra.mrb[0].mxu0 %v898
        %v1005 = vpop.f32.mrb[0].mxu0
        %v1006 = vadd.f32 %v921, %v1005
        %v1007 = vpop.f32.mrb[0].mxu0
        %v1008 = vpop.f32.mrb[0].mxu0
        %v1009 = vadd.f32 %v921, %v1008
        %v1010 = vpop.f32.mrb[0].mxu0
        %1011 = vmatprep.mubr.bf16.mxu0 0
        %1012 = vmatmul.mubr.bf16.gmra.mrb[0].mxu0 %v899
        %v1013 = vpop.f32.mrb[0].mxu0
        %v1014 = vadd.f32 %v921, %v1013
        %v1015 = vpop.f32.mrb[0].mxu0
        %v1016 = vpop.f32.mrb[0].mxu0
        %v1017 = vadd.f32 %v921, %v1016
        %v1018 = vpop.f32.mrb[0].mxu0
        %1019 = vdwg.mxu0
        %v1020 = vmax.f32 %v1006, 0.0
        %v1021 = vmax.f32 %v1009, 0.0
        %v1022 = vmax.f32 %v1014, 0.0
        %v1023 = vmax.f32 %v1017, 0.0
        %v1024 = vpack.c.bf16 %v1021, %v1020
        %v1025 = vpack.c.bf16 %v1023, %v1022
        %v1026 = vld [vmem:[%s498] sm:$0xf]
        %v1027 = vld [vmem:[%s498 + $0x4] sm:$0xf]
        %v1028 = vld [vmem:[%s498 + $0x8] sm:$0xf]
        %v1029 = vld [vmem:[%s498 + $0xc] sm:$0xf]
        %v1030 = vld [vmem:[%s498 + $0x10] sm:$0xf]
        %v1031 = vld [vmem:[%s498 + $0x14] sm:$0xf]
        %v1032 = vld [vmem:[%s498 + $0x18] sm:$0xf]
        %v1033 = vld [vmem:[%s498 + $0x1c] sm:$0xf]
        %v1034 = vld [vmem:[%s498 + $0x20] sm:$0xf]
        %v1035 = vld [vmem:[%s498 + $0x24] sm:$0xf]
        %v1036 = vld [vmem:[%s498 + $0x28] sm:$0xf]
        %v1037 = vld [vmem:[%s498 + $0x2c] sm:$0xf]
        %v1038 = vld [vmem:[%s498 + $0x30] sm:$0xf]
        %v1039 = vld [vmem:[%s498 + $0x34] sm:$0xf]
        %v1040 = vld [vmem:[%s498 + $0x38] sm:$0xf]
        %v1041 = vld [vmem:[%s498 + $0x3c] sm:$0xf]
        %v1042 = vld [vmem:[%s585] sm:$0x1]
        %v1044 = vlaneseq
        %v1045 = vshrl.u32 %v1044, 7
        %v1046 = vsub.s32 0, %v1045
        %v1047 = vrot.slane %v1042, %v1046
        %v1065 = vunpack.c.l.b16 %v1026
        %v1066 = vunpack.c.l.b16 %v1027
        %v1067 = vunpack.c.l.b16 %v1028
        %v1068 = vunpack.c.l.b16 %v1029
        %v1069 = vunpack.c.l.b16 %v1030
        %v1070 = vunpack.c.l.b16 %v1031
        %v1071 = vunpack.c.l.b16 %v1032
        %v1072 = vunpack.c.l.b16 %v1033
        %v1073 = vunpack.c.l.b16 %v1034
        %v1074 = vunpack.c.l.b16 %v1035
        %v1075 = vunpack.c.l.b16 %v1036
        %v1076 = vunpack.c.l.b16 %v1037
        %v1077 = vunpack.c.l.b16 %v1038
        %v1078 = vunpack.c.l.b16 %v1039
        %v1079 = vunpack.c.l.b16 %v1040
        %v1080 = vunpack.c.l.b16 %v1041
        %v1081 = vpack.c.b16 %v1066, %v1065
        %v1082 = vpack.c.b16 %v1068, %v1067
        %v1083 = vpack.c.b16 %v1070, %v1069
        %v1084 = vpack.c.b16 %v1072, %v1071
        %v1085 = vpack.c.b16 %v1074, %v1073
        %v1086 = vpack.c.b16 %v1076, %v1075
        %v1087 = vpack.c.b16 %v1078, %v1077
        %v1088 = vpack.c.b16 %v1080, %v1079
        %1097 = vmatprep.subr.bf16.mxu0 0
        %1098 = vmatpush1.bf16.msra.mxu0 %v1081
        %1099 = vmatprep.subr.bf16.mxu0 0
        %1100 = vmatpush1.bf16.msra.mxu0 %v1082
        %1101 = vmatprep.subr.bf16.mxu0 0
        %1102 = vmatpush1.bf16.msra.mxu0 %v1083
        %1103 = vmatprep.subr.bf16.mxu0 0
        %1104 = vmatpush1.bf16.msra.mxu0 %v1084
        %1105 = vmatprep.subr.bf16.mxu0 0
        %1106 = vmatpush1.bf16.msra.mxu0 %v1085
        %1107 = vmatprep.subr.bf16.mxu0 0
        %1108 = vmatpush1.bf16.msra.mxu0 %v1086
        %1109 = vmatprep.subr.bf16.mxu0 0
        %1110 = vmatpush1.bf16.msra.mxu0 %v1087
        %1111 = vmatprep.subr.bf16.mxu0 0
        %1112 = vmatpush1.bf16.msra.mxu0 %v1088
        %1113 = vmatprep.subr.bf16.mxu0 0
        %1114 = vmatpush1.bf16.msra.mxu0 0
        %1115 = vmatprep.subr.bf16.mxu0 0
        %1116 = vmatpush1.bf16.msra.mxu0 0
        %1117 = vmatprep.subr.bf16.mxu0 0
        %1118 = vmatpush1.bf16.msra.mxu0 0
        %1119 = vmatprep.subr.bf16.mxu0 0
        %1120 = vmatpush1.bf16.msra.mxu0 0
        %1121 = vmatprep.subr.bf16.mxu0 0
        %1122 = vmatpush1.bf16.msra.mxu0 0
        %1123 = vmatprep.subr.bf16.mxu0 0
        %1124 = vmatpush1.bf16.msra.mxu0 0
        %1125 = vmatprep.subr.bf16.mxu0 0
        %1126 = vmatpush1.bf16.msra.mxu0 0
        %1127 = vmatprep.subr.bf16.mxu0 0
        %1128 = vmatpush1.bf16.msra.mxu0 0
        %1129 = vmatprep.mubr.bf16.mxu0 0
        %1130 = vmatmul.mubr.bf16.gmra.mrb[0].mxu0 %v1024
        %v1131 = vpop.f32.mrb[0].mxu0
        %v1132 = vadd.f32 %v1047, %v1131
        %v1133 = vpop.f32.mrb[0].mxu0
        %v1134 = vpop.f32.mrb[0].mxu0
        %v1135 = vadd.f32 %v1047, %v1134
        %v1136 = vpop.f32.mrb[0].mxu0
        %1137 = vmatprep.mubr.bf16.mxu0 0
        %1138 = vmatmul.mubr.bf16.gmra.mrb[0].mxu0 %v1025
        %v1139 = vpop.f32.mrb[0].mxu0
        %v1140 = vadd.f32 %v1047, %v1139
        %v1141 = vpop.f32.mrb[0].mxu0
        %v1142 = vpop.f32.mrb[0].mxu0
        %v1143 = vadd.f32 %v1047, %v1142
        %v1144 = vpop.f32.mrb[0].mxu0
        %1145 = vdwg.mxu0
        %v1146 = vmax.f32 %v1132, 0.0
        %v1147 = vmax.f32 %v1135, 0.0
        %v1148 = vmax.f32 %v1140, 0.0
        %v1149 = vmax.f32 %v1143, 0.0
        %v1150 = vpack.c.bf16 %v1147, %v1146
        %v1151 = vpack.c.bf16 %v1149, %v1148
        %v1152 = vld [vmem:[%s507] sm:$0xf]
        %v1153 = vld [vmem:[%s507 + $0x4] sm:$0xf]
        %v1154 = vld [vmem:[%s507 + $0x8] sm:$0xf]
        %v1155 = vld [vmem:[%s507 + $0xc] sm:$0xf]
        %v1156 = vld [vmem:[%s507 + $0x10] sm:$0xf]
        %v1157 = vld [vmem:[%s507 + $0x14] sm:$0xf]
        %v1158 = vld [vmem:[%s507 + $0x18] sm:$0xf]
        %v1159 = vld [vmem:[%s507 + $0x1c] sm:$0xf]
        %v1160 = vld [vmem:[%s507 + $0x20] sm:$0xf]
        %v1161 = vld [vmem:[%s507 + $0x24] sm:$0xf]
        %v1162 = vld [vmem:[%s507 + $0x28] sm:$0xf]
        %v1163 = vld [vmem:[%s507 + $0x2c] sm:$0xf]
        %v1164 = vld [vmem:[%s507 + $0x30] sm:$0xf]
        %v1165 = vld [vmem:[%s507 + $0x34] sm:$0xf]
        %v1166 = vld [vmem:[%s507 + $0x38] sm:$0xf]
        %v1167 = vld [vmem:[%s507 + $0x3c] sm:$0xf]
        %v1168 = vld [vmem:[%s591] sm:$0x1]
        %v1170 = vlaneseq
        %v1171 = vshrl.u32 %v1170, 7
        %v1172 = vsub.s32 0, %v1171
        %v1173 = vrot.slane %v1168, %v1172
        %v1191 = vunpack.c.l.b16 %v1152
        %v1192 = vunpack.c.l.b16 %v1153
        %v1193 = vunpack.c.l.b16 %v1154
        %v1194 = vunpack.c.l.b16 %v1155
        %v1195 = vunpack.c.l.b16 %v1156
        %v1196 = vunpack.c.l.b16 %v1157
        %v1197 = vunpack.c.l.b16 %v1158
        %v1198 = vunpack.c.l.b16 %v1159
        %v1199 = vunpack.c.l.b16 %v1160
        %v1200 = vunpack.c.l.b16 %v1161
        %v1201 = vunpack.c.l.b16 %v1162
        %v1202 = vunpack.c.l.b16 %v1163
        %v1203 = vunpack.c.l.b16 %v1164
        %v1204 = vunpack.c.l.b16 %v1165
        %v1205 = vunpack.c.l.b16 %v1166
        %v1206 = vunpack.c.l.b16 %v1167
        %v1207 = vpack.c.b16 %v1192, %v1191
        %v1208 = vpack.c.b16 %v1194, %v1193
        %v1209 = vpack.c.b16 %v1196, %v1195
        %v1210 = vpack.c.b16 %v1198, %v1197
        %v1211 = vpack.c.b16 %v1200, %v1199
        %v1212 = vpack.c.b16 %v1202, %v1201
        %v1213 = vpack.c.b16 %v1204, %v1203
        %v1214 = vpack.c.b16 %v1206, %v1205
        %1223 = vmatprep.subr.bf16.mxu0 0
        %1224 = vmatpush1.bf16.msra.mxu0 %v1207
        %1225 = vmatprep.subr.bf16.mxu0 0
        %1226 = vmatpush1.bf16.msra.mxu0 %v1208
        %1227 = vmatprep.subr.bf16.mxu0 0
        %1228 = vmatpush1.bf16.msra.mxu0 %v1209
        %1229 = vmatprep.subr.bf16.mxu0 0
        %1230 = vmatpush1.bf16.msra.mxu0 %v1210
        %1231 = vmatprep.subr.bf16.mxu0 0
        %1232 = vmatpush1.bf16.msra.mxu0 %v1211
        %1233 = vmatprep.subr.bf16.mxu0 0
        %1234 = vmatpush1.bf16.msra.mxu0 %v1212
        %1235 = vmatprep.subr.bf16.mxu0 0
        %1236 = vmatpush1.bf16.msra.mxu0 %v1213
        %1237 = vmatprep.subr.bf16.mxu0 0
        %1238 = vmatpush1.bf16.msra.mxu0 %v1214
        %1239 = vmatprep.subr.bf16.mxu0 0
        %1240 = vmatpush1.bf16.msra.mxu0 0
        %1241 = vmatprep.subr.bf16.mxu0 0
        %1242 = vmatpush1.bf16.msra.mxu0 0
        %1243 = vmatprep.subr.bf16.mxu0 0
        %1244 = vmatpush1.bf16.msra.mxu0 0
        %1245 = vmatprep.subr.bf16.mxu0 0
        %1246 = vmatpush1.bf16.msra.mxu0 0
        %1247 = vmatprep.subr.bf16.mxu0 0
        %1248 = vmatpush1.bf16.msra.mxu0 0
        %1249 = vmatprep.subr.bf16.mxu0 0
        %1250 = vmatpush1.bf16.msra.mxu0 0
        %1251 = vmatprep.subr.bf16.mxu0 0
        %1252 = vmatpush1.bf16.msra.mxu0 0
        %1253 = vmatprep.subr.bf16.mxu0 0
        %1254 = vmatpush1.bf16.msra.mxu0 0
        %1255 = vmatprep.mubr.bf16.mxu0 0
        %1256 = vmatmul.mubr.bf16.gmra.mrb[0].mxu0 %v1150
        %v1257 = vpop.f32.mrb[0].mxu0
        %v1258 = vadd.f32 %v1173, %v1257
        %v1259 = vpop.f32.mrb[0].mxu0
        %v1260 = vpop.f32.mrb[0].mxu0
        %v1261 = vadd.f32 %v1173, %v1260
        %v1262 = vpop.f32.mrb[0].mxu0
        %1263 = vmatprep.mubr.bf16.mxu0 0
        %1264 = vmatmul.mubr.bf16.gmra.mrb[0].mxu0 %v1151
        %v1265 = vpop.f32.mrb[0].mxu0
        %v1266 = vadd.f32 %v1173, %v1265
        %v1267 = vpop.f32.mrb[0].mxu0
        %v1268 = vpop.f32.mrb[0].mxu0
        %v1269 = vadd.f32 %v1173, %v1268
        %v1270 = vpop.f32.mrb[0].mxu0
        %1271 = vdwg.mxu0
        %v1272 = vmax.f32 %v1258, 0.0
        %v1273 = vmax.f32 %v1261, 0.0
        %v1274 = vmax.f32 %v1266, 0.0
        %v1275 = vmax.f32 %v1269, 0.0
        %1276 = vst [vmem:[%s573] sm:$0xff] %v1272
        %1277 = vst [vmem:[%s573 + $0x8] sm:$0xff] %v1273
        %1278 = vst [vmem:[%s573 + $0x10] sm:$0xff] %v1274
        %1279 = vst [vmem:[%s573 + $0x18] sm:$0xff] %v1275
        %s1280 = sand.u32 %s281, 1
        %s1281 = scalar_lea.sflag [#allocation6], %s1280
        %s1282 = sand.u32 %s281, 1
        %s1283 = smul.addr %s1282, 32
        %s1284 = scalar_lea.vmem [#allocation13], %s1283
        // Predicated region
        $region81: #{tpu_custom_call.1} parent=55 // pred_check
          %p1285 = pneg %p291
        $region82: #{tpu_custom_call.1} parent=55 // pred_check_branch
          %1287 = sbr.rel (%p1285) target = $region84
        $region83: #{tpu_custom_call.1} parent=55 // pred_region
          %s1288 = smul.u32 4, %s32
          %s1290 = ssub.s32 512, 512
          %1291 = vsyncadd %s1281, %s1290
          %s1292 = smul.addr %s1288, 128
          %s1293 = scalar_lea.hbm %s10, %s1292
          %s1294 = sshll.u32 %s1284, 4
          %s1295 = int_to_ptr.vmem [resolvable:$true] %s1294
          %1300 = dma.vmem_to_hbm [thread:$0]  %s1295, 512, %s1293, %s1281, 128, 128, 8
        $region84: #{tpu_custom_call.1} parent=55 // pred_fallthru
          _
      $region56: #{tpu_custom_call.1} parent=5 // pred_fallthru
        _
      %p1301 = scmp.le.s32.totalorder 2, %s27
      // Predicated region
      $region85: #{tpu_custom_call.1} parent=5 // pred_check
        %p1302 = pneg %p1301
      $region86: #{tpu_custom_call.1} parent=5 // pred_check_branch
        %1304 = sbr.rel (%p1302) target = $region88
      $region87: #{tpu_custom_call.1} parent=5 // pred_region
        %s1305 = ssub.s32 %s27, 2
        // Predicated region
        $region89: #{tpu_custom_call.1} parent=87 // pred_check
          %p1306 = pneg %p297
        $region90: #{tpu_custom_call.1} parent=87 // pred_check_branch
          %1308 = sbr.rel (%p1306) target = $region92
        $region91: #{tpu_custom_call.1} parent=87 // pred_region
          %s1309 = sand.u32 %s282, 1
          %s1310 = scalar_lea.sflag [#allocation6], %s1309
          %s1311 = sand.u32 %s282, 1
          %s1312 = smul.addr %s1311, 32
          %s1313 = scalar_lea.vmem [#allocation13], %s1312
          %1314 = dma.done %s1310, 512
        $region92: #{tpu_custom_call.1} parent=87 // pred_fallthru
          _
      $region88: #{tpu_custom_call.1} parent=5 // pred_fallthru
        _
    $region6: #{tpu_custom_call.1} parent=1 // loop_footer
      %s31 = sadd.s32 1, %s27
    $region7: #{tpu_custom_call.1} parent=1 // loop_footer_branch
      %26 = sbr.rel target = $region3
    $region8: #{tpu_custom_call.1} parent=1 // loop_exit
      _
    %1315 = vsyncpa [#allocation5], 1
    %s1316 = scalar_lea.sflag [#allocation5], 1
    %1317 = vsyncpa %s1316, 1
    %1318 = vsyncpa [#allocation8], 1
    %1319 = vsyncpa [#allocation6], 1
    %s1320 = scalar_lea.sflag [#allocation6], 1
    %1321 = vsyncpa %s1320, 1

// kernel: tpu_custom_call.1
$region0: #{tpu_custom_call.1}
  #allocation0 [shape = 'u32[]', space=smem, size = 0x4, offset = 0x4, fixed_abs, tag = 'smem constant byte address 0x4 - core index']
  #allocation1 [shape = 'u32[144,128]{1,0:T(1,128)}', space=vmem, size = 0x12000, scoped, tag = 'internal scratch']
  #allocation2 [shape = 's32[1]{0}', space=sflag, size = 0x4, scoped, tag = 'scoped memory for tpu_custom_call.1']
  #allocation3 [shape = 'u8[512]{0}', space=smem, size = 0x200, scoped, tag = 'prefetched SMEM operand 0']
  %s0 = inlined_call_operand.hbm [shape: s32[3], index: 0, kind: input, shape index: {}]
  %s1 = inlined_call_operand.hbm [shape: s8[96,384], index: 1, kind: input, shape index: {}]
  %s2 = inlined_call_operand.hbm [shape: bf16[384,128], index: 2, kind: input, shape index: {}]
  %s3 = inlined_call_operand.hbm [shape: f32[96,128], index: 3, kind: input, shape index: {}]
  %s4 = inlined_call_operand.hbm [shape: bf16[3,128,128], index: 4, kind: input, shape index: {}]
  %s5 = inlined_call_operand.vmem [shape: f32[3,1,128], index: 5, kind: input, shape index: {}]
  %s6 = inlined_call_operand.hbm [shape: bf16[3,128,128], index: 6, kind: input, shape index: {}]
  %s7 = inlined_call_operand.vmem [shape: f32[3,1,128], index: 7, kind: input, shape index: {}]
  %s8 = inlined_call_operand.hbm [shape: bf16[3,128,128], index: 8, kind: input, shape index: {}]
  %s9 = inlined_call_operand.vmem [shape: f32[3,1,128], index: 9, kind: input, shape index: {}]
  %s10 = inlined_call_operand.hbm [shape: f32[96,128], index: 10, kind: output, shape index: {}]
  %s11 = sld [smem:[#allocation0]]
  $region93: #{tpu_custom_call.1} parent=0
    _
  %s13 = ssub.s32 1, %s11
  %s14 = scalar_select 0, %s13, %s11
  %16 = dma.hbm_to_smem %s0, 16, [#allocation3], [#allocation2]
  %17 = dma.done [#allocation2], 16
  %18 = sfence
  $region1: #{tpu_custom_call.1} parent=0
    #allocation4 [shape = 'u8[24576]{0}', space=vmem, size = 0x6000, scoped, tag = 'input window, operand 1']
    #allocation5 [shape = 's32[2]{0}', space=sflag, size = 0x8, scoped, tag = 'scoped memory for tpu_custom_call.1']
    #allocation6 [shape = 's32[2]{0}', space=sflag, size = 0x8, scoped, tag = 'scoped memory for tpu_custom_call.1']
    #allocation7 [shape = 'u8[98304]{0}', space=vmem, size = 0x18000, scoped, tag = 'input window, operand 2, single buffered']
    #allocation8 [shape = 's32[1]{0}', space=sflag, size = 0x4, scoped, tag = 'scoped memory for tpu_custom_call.1']
    #allocation9 [shape = 'u8[32768]{0}', space=vmem, size = 0x8000, scoped, tag = 'input window, operand 3']
    #allocation10 [shape = 'u8[65536]{0}', space=vmem, size = 0x10000, scoped, tag = 'input window, operand 4']
    #allocation11 [shape = 'u8[65536]{0}', space=vmem, size = 0x10000, scoped, tag = 'input window, operand 6']
    #allocation12 [shape = 'u8[65536]{0}', space=vmem, size = 0x10000, scoped, tag = 'input window, operand 8']
    #allocation13 [shape = 'u8[32768]{0}', space=vmem, size = 0x8000, scoped, tag = 'output window, operand 0']
    %19 = vsyncpa [#allocation5], 0
    %s20 = scalar_lea.sflag [#allocation5], 1
    %21 = vsyncpa %s20, 0
    %22 = vsyncpa [#allocation8], 0
    %23 = vsyncpa [#allocation6], 0
    %s24 = scalar_lea.sflag [#allocation6], 1
    %25 = vsyncpa %s24, 0
    loop: start=0, step=1, limit=5
    $region2: #{tpu_custom_call.1} parent=1 // loop_pre_header
      _
    $region3: #{tpu_custom_call.1} parent=1 // loop_header
      %s27 = sphi 0, %s31
      %p28 = scmp.ge.s32.totalorder %s27, 5
      %s37 = sphi 0, %s39
      %s40 = sphi 0, %s37
      %s41 = sphi 0, %s40
      %s57 = sphi 0, %s41
      %s61 = sphi 0, %s61
      %s63 = sphi 0, %s61
      %s64 = sphi 0, %s63
      %s78 = sphi 0, %s64
      %s84 = sphi 0, %s86
      %s87 = sphi 0, %s84
      %s88 = sphi 0, %s87
      %s104 = sphi 0, %s88
      %s112 = sphi 0, %s114
      %s115 = sphi 0, %s112
      %s116 = sphi 0, %s115
      %s132 = sphi 0, %s116
      %s140 = sphi 0, %s142
      %s143 = sphi 0, %s140
      %s144 = sphi 0, %s143
      %s160 = sphi 0, %s144
      %s168 = sphi 0, %s170
      %s171 = sphi 0, %s168
      %s172 = sphi 0, %s171
      %s188 = sphi 0, %s172
      %s196 = sphi 0, %s198
      %s199 = sphi 0, %s196
      %s200 = sphi 0, %s199
      %s216 = sphi 0, %s200
      %s224 = sphi 0, %s226
      %s227 = sphi 0, %s224
      %s228 = sphi 0, %s227
      %s244 = sphi 0, %s228
      %s252 = sphi 0, %s254
      %s255 = sphi 0, %s252
      %s256 = sphi 0, %s255
      %s272 = sphi 0, %s256
      %s278 = sphi 0, %s280
      %s281 = sphi 0, %s278
      %s282 = sphi 0, %s281
      %s298 = sphi 0, %s282
    $region4: #{tpu_custom_call.1} parent=1 // loop_header_branch
      %30 = sbr.rel (%p28) target = $region8
    $region5: #{tpu_custom_call.1} parent=1 // loop_body
      %s32 = ssub.s32 %s27, 1
      %s33 = ssub.s32 %s27, 2
      %s34 = sadd.s32 %s27, 1
      %s35 = ssub.s32 %s27, %s34
      %p36 = scmp.eq.s32.totalorder %s35, 0
      %s38 = sadd.s32 %s37, 1
      %s39 = scalar_select %p36, %s37, %s38
      %p42 = pneg %p36
      %p43 = scmp.eq.s32.totalorder %s27, 2
      %p44 = por %p42, %p43
      %p45 = scmp.ne.s32.totalorder %s37, %s40
      %p46 = scmp.eq.s32.totalorder %s27, 0
      %p47 = por %p45, %p46
      %p48 = scmp.ne.s32.totalorder %s37, %s40
      %p49 = scmp.eq.s32.totalorder %s32, 2
      %p50 = por %p48, %p49
      %p51 = scmp.ne.s32.totalorder %s40, %s41
      %p52 = scmp.eq.s32.totalorder %s32, 0
      %p53 = por %p51, %p52
      %p54 = scmp.ne.s32.totalorder %s40, %s41
      %p55 = scmp.eq.s32.totalorder %s33, 2
      %p56 = por %p54, %p55
      %p58 = scmp.ne.s32.totalorder %s41, %s57
      %p59 = scmp.eq.s32.totalorder %s33, 0
      %p60 = por %p58, %p59
      %s62 = sadd.s32 %s61, 1
      %p65 = scmp.eq.s32.totalorder %s27, 2
      %p66 = scmp.ne.s32.totalorder %s61, %s63
      %p67 = scmp.eq.s32.totalorder %s27, 0
      %p68 = por %p66, %p67
      %p69 = scmp.ne.s32.totalorder %s61, %s63
      %p70 = scmp.eq.s32.totalorder %s32, 2
      %p71 = por %p69, %p70
      %p72 = scmp.ne.s32.totalorder %s63, %s64
      %p73 = scmp.eq.s32.totalorder %s32, 0
      %p74 = por %p72, %p73
      %p75 = scmp.ne.s32.totalorder %s63, %s64
      %p76 = scmp.eq.s32.totalorder %s33, 2
      %p77 = por %p75, %p76
      %p79 = scmp.ne.s32.totalorder %s64, %s78
      %p80 = scmp.eq.s32.totalorder %s33, 0
      %p81 = por %p79, %p80
      %s82 = ssub.s32 %s27, %s34
      %p83 = scmp.eq.s32.totalorder %s82, 0
      %s85 = sadd.s32 %s84, 1
      %s86 = scalar_select %p83, %s84, %s85
      %p89 = pneg %p83
      %p90 = scmp.eq.s32.totalorder %s27, 2
      %p91 = por %p89, %p90
      %p92 = scmp.ne.s32.totalorder %s84, %s87
      %p93 = scmp.eq.s32.totalorder %s27, 0
      %p94 = por %p92, %p93
      %p95 = scmp.ne.s32.totalorder %s84, %s87
      %p96 = scmp.eq.s32.totalorder %s32, 2
      %p97 = por %p95, %p96
      %p98 = scmp.ne.s32.totalorder %s87, %s88
      %p99 = scmp.eq.s32.totalorder %s32, 0
      %p100 = por %p98, %p99
      %p101 = scmp.ne.s32.totalorder %s87, %s88
      %p102 = scmp.eq.s32.totalorder %s33, 2
      %p103 = por %p101, %p102
      %p105 = scmp.ne.s32.totalorder %s88, %s104
      %p106 = scmp.eq.s32.totalorder %s33, 0
      %p107 = por %p105, %p106
      %s108 = sld [smem:[#allocation3 + %s27]]
      %s109 = sld [smem:[#allocation3 + %s34]]
      %s110 = ssub.s32 %s108, %s109
      %p111 = scmp.eq.s32.totalorder %s110, 0
      %s113 = sadd.s32 %s112, 1
      %s114 = scalar_select %p111, %s112, %s113
      %p117 = pneg %p111
      %p118 = scmp.eq.s32.totalorder %s27, 2
      %p119 = por %p117, %p118
      %p120 = scmp.ne.s32.totalorder %s112, %s115
      %p121 = scmp.eq.s32.totalorder %s27, 0
      %p122 = por %p120, %p121
      %p123 = scmp.ne.s32.totalorder %s112, %s115
      %p124 = scmp.eq.s32.totalorder %s32, 2
      %p125 = por %p123, %p124
      %p126 = scmp.ne.s32.totalorder %s115, %s116
      %p127 = scmp.eq.s32.totalorder %s32, 0
      %p128 = por %p126, %p127
      %p129 = scmp.ne.s32.totalorder %s115, %s116
      %p130 = scmp.eq.s32.totalorder %s33, 2
      %p131 = por %p129, %p130
      %p133 = scmp.ne.s32.totalorder %s116, %s132
      %p134 = scmp.eq.s32.totalorder %s33, 0
      %p135 = por %p133, %p134
      %s136 = sld [smem:[#allocation3 + %s27]]
      %s137 = sld [smem:[#allocation3 + %s34]]
      %s138 = ssub.s32 %s136, %s137
      %p139 = scmp.eq.s32.totalorder %s138, 0
      %s141 = sadd.s32 %s140, 1
      %s142 = scalar_select %p139, %s140, %s141
      %p145 = pneg %p139
      %p146 = scmp.eq.s32.totalorder %s27, 2
      %p147 = por %p145, %p146
      %p148 = scmp.ne.s32.totalorder %s140, %s143
      %p149 = scmp.eq.s32.totalorder %s27, 0
      %p150 = por %p148, %p149
      %p151 = scmp.ne.s32.totalorder %s140, %s143
      %p152 = scmp.eq.s32.totalorder %s32, 2
      %p153 = por %p151, %p152
      %p154 = scmp.ne.s32.totalorder %s143, %s144
      %p155 = scmp.eq.s32.totalorder %s32, 0
      %p156 = por %p154, %p155
      %p157 = scmp.ne.s32.totalorder %s143, %s144
      %p158 = scmp.eq.s32.totalorder %s33, 2
      %p159 = por %p157, %p158
      %p161 = scmp.ne.s32.totalorder %s144, %s160
      %p162 = scmp.eq.s32.totalorder %s33, 0
      %p163 = por %p161, %p162
      %s164 = sld [smem:[#allocation3 + %s27]]
      %s165 = sld [smem:[#allocation3 + %s34]]
      %s166 = ssub.s32 %s164, %s165
      %p167 = scmp.eq.s32.totalorder %s166, 0
      %s169 = sadd.s32 %s168, 1
      %s170 = scalar_select %p167, %s168, %s169
      %p173 = pneg %p167
      %p174 = scmp.eq.s32.totalorder %s27, 2
      %p175 = por %p173, %p174
      %p176 = scmp.ne.s32.totalorder %s168, %s171
      %p177 = scmp.eq.s32.totalorder %s27, 0
      %p178 = por %p176, %p177
      %p179 = scmp.ne.s32.totalorder %s168, %s171
      %p180 = scmp.eq.s32.totalorder %s32, 2
      %p181 = por %p179, %p180
      %p182 = scmp.ne.s32.totalorder %s171, %s172
      %p183 = scmp.eq.s32.totalorder %s32, 0
      %p184 = por %p182, %p183
      %p185 = scmp.ne.s32.totalorder %s171, %s172
      %p186 = scmp.eq.s32.totalorder %s33, 2
      %p187 = por %p185, %p186
      %p189 = scmp.ne.s32.totalorder %s172, %s188
      %p190 = scmp.eq.s32.totalorder %s33, 0
      %p191 = por %p189, %p190
      %s192 = sld [smem:[#allocation3 + %s27]]
      %s193 = sld [smem:[#allocation3 + %s34]]
      %s194 = ssub.s32 %s192, %s193
      %p195 = scmp.eq.s32.totalorder %s194, 0
      %s197 = sadd.s32 %s196, 1
      %s198 = scalar_select %p195, %s196, %s197
      %p201 = pneg %p195
      %p202 = scmp.eq.s32.totalorder %s27, 2
      %p203 = por %p201, %p202
      %p204 = scmp.ne.s32.totalorder %s196, %s199
      %p205 = scmp.eq.s32.totalorder %s27, 0
      %p206 = por %p204, %p205
      %p207 = scmp.ne.s32.totalorder %s196, %s199
      %p208 = scmp.eq.s32.totalorder %s32, 2
      %p209 = por %p207, %p208
      %p210 = scmp.ne.s32.totalorder %s199, %s200
      %p211 = scmp.eq.s32.totalorder %s32, 0
      %p212 = por %p210, %p211
      %p213 = scmp.ne.s32.totalorder %s199, %s200
      %p214 = scmp.eq.s32.totalorder %s33, 2
      %p215 = por %p213, %p214
      %p217 = scmp.ne.s32.totalorder %s200, %s216
      %p218 = scmp.eq.s32.totalorder %s33, 0
      %p219 = por %p217, %p218
      %s220 = sld [smem:[#allocation3 + %s27]]
      %s221 = sld [smem:[#allocation3 + %s34]]
      %s222 = ssub.s32 %s220, %s221
      %p223 = scmp.eq.s32.totalorder %s222, 0
      %s225 = sadd.s32 %s224, 1
      %s226 = scalar_select %p223, %s224, %s225
      %p229 = pneg %p223
      %p230 = scmp.eq.s32.totalorder %s27, 2
      %p231 = por %p229, %p230
      %p232 = scmp.ne.s32.totalorder %s224, %s227
      %p233 = scmp.eq.s32.totalorder %s27, 0
      %p234 = por %p232, %p233
      %p235 = scmp.ne.s32.totalorder %s224, %s227
      %p236 = scmp.eq.s32.totalorder %s32, 2
      %p237 = por %p235, %p236
      %p238 = scmp.ne.s32.totalorder %s227, %s228
      %p239 = scmp.eq.s32.totalorder %s32, 0
      %p240 = por %p238, %p239
      %p241 = scmp.ne.s32.totalorder %s227, %s228
      %p242 = scmp.eq.s32.totalorder %s33, 2
      %p243 = por %p241, %p242
      %p245 = scmp.ne.s32.totalorder %s228, %s244
      %p246 = scmp.eq.s32.totalorder %s33, 0
      %p247 = por %p245, %p246
      %s248 = sld [smem:[#allocation3 + %s27]]
      %s249 = sld [smem:[#allocation3 + %s34]]
      %s250 = ssub.s32 %s248, %s249
      %p251 = scmp.eq.s32.totalorder %s250, 0
      %s253 = sadd.s32 %s252, 1
      %s254 = scalar_select %p251, %s252, %s253
      %p257 = pneg %p251
      %p258 = scmp.eq.s32.totalorder %s27, 2
      %p259 = por %p257, %p258
      %p260 = scmp.ne.s32.totalorder %s252, %s255
      %p261 = scmp.eq.s32.totalorder %s27, 0
      %p262 = por %p260, %p261
      %p263 = scmp.ne.s32.totalorder %s252, %s255
      %p264 = scmp.eq.s32.totalorder %s32, 2
      %p265 = por %p263, %p264
      %p266 = scmp.ne.s32.totalorder %s255, %s256
      %p267 = scmp.eq.s32.totalorder %s32, 0
      %p268 = por %p266, %p267
      %p269 = scmp.ne.s32.totalorder %s255, %s256
      %p270 = scmp.eq.s32.totalorder %s33, 2
      %p271 = por %p269, %p270
      %p273 = scmp.ne.s32.totalorder %s256, %s272
      %p274 = scmp.eq.s32.totalorder %s33, 0
      %p275 = por %p273, %p274
      %s276 = ssub.s32 %s27, %s34
      %p277 = scmp.eq.s32.totalorder %s276, 0
      %s279 = sadd.s32 %s278, 1
      %s280 = scalar_select %p277, %s278, %s279
      %p283 = pneg %p277
      %p284 = scmp.eq.s32.totalorder %s27, 2
      %p285 = por %p283, %p284
      %p286 = scmp.ne.s32.totalorder %s278, %s281
      %p287 = scmp.eq.s32.totalorder %s27, 0
      %p288 = por %p286, %p287
      %p289 = scmp.ne.s32.totalorder %s278, %s281
      %p290 = scmp.eq.s32.totalorder %s32, 2
      %p291 = por %p289, %p290
      %p292 = scmp.ne.s32.totalorder %s281, %s282
      %p293 = scmp.eq.s32.totalorder %s32, 0
      %p294 = por %p292, %p293
      %p295 = scmp.ne.s32.totalorder %s281, %s282
      %p296 = scmp.eq.s32.totalorder %s33, 2
      %p297 = por %p295, %p296
      %p299 = scmp.ne.s32.totalorder %s282, %s298
      %p300 = scmp.eq.s32.totalorder %s33, 0
      %p301 = por %p299, %p300
      %p302 = scmp.le.s32.totalorder 1, %s27
      %p303 = scmp.lt.s32.totalorder %s27, 4
      %p304 = pnand %p302, %p303
      %p305 = pneg %p304
      // Predicated region
      $region9: #{tpu_custom_call.1} parent=5 // pred_check
        _
      $region10: #{tpu_custom_call.1} parent=5 // pred_check_branch
        %307 = sbr.rel (%p304) target = $region12
      $region11: #{tpu_custom_call.1} parent=5 // pred_region
        %s308 = ssub.s32 %s27, 1
        // Predicated region
        $region13: #{tpu_custom_call.1} parent=11 // pred_check
          %p309 = pneg %p74
        $region14: #{tpu_custom_call.1} parent=11 // pred_check_branch
          %311 = sbr.rel (%p309) target = $region16
        $region15: #{tpu_custom_call.1} parent=11 // pred_region
          %s313 = ssub.s32 3072, 3072
          %314 = vsyncadd [#allocation8], %s313
          %s315 = sshll.u32 [#allocation7], 4
          %s316 = int_to_ptr.vmem [resolvable:$true] %s315
          %321 = dma.hbm_to_vmem [thread:$0]  %s2, 3072, %s316, [#allocation8], 64, 64, 4
        $region16: #{tpu_custom_call.1} parent=11 // pred_fallthru
          _
      $region12: #{tpu_custom_call.1} parent=5 // pred_fallthru
        _
      %p322 = scmp.lt.s32.totalorder %s27, 3
      // Predicated region
      $region17: #{tpu_custom_call.1} parent=5 // pred_check
        %p323 = pneg %p322
      $region18: #{tpu_custom_call.1} parent=5 // pred_check_branch
        %325 = sbr.rel (%p323) target = $region20
      $region19: #{tpu_custom_call.1} parent=5 // pred_region
        // Predicated region
        $region21: #{tpu_custom_call.1} parent=19 // pred_check
          %p326 = pneg %p47
        $region22: #{tpu_custom_call.1} parent=19 // pred_check_branch
          %328 = sbr.rel (%p326) target = $region24
        $region23: #{tpu_custom_call.1} parent=19 // pred_region
          %s329 = sand.u32 %s27, 1
          %s330 = scalar_lea.sflag [#allocation5], %s329
          %s331 = sand.u32 %s37, 1
          %s332 = smul.addr %s331, 24
          %s333 = scalar_lea.vmem [#allocation4], %s332
          %s335 = ssub.s32 384, 384
          %336 = vsyncadd %s330, %s335
          %s337 = smul.addr %s27, 3
          %s338 = smul.addr %s337, 128
          %s339 = scalar_lea.hbm %s1, %s338
          %s341 = sshll.u32 %s333, 4
          %s342 = int_to_ptr.vmem [resolvable:$true] %s341
          %344 = dma.hbm_to_vmem [thread:$0]  %s339, 384, %s342, %s330
        $region24: #{tpu_custom_call.1} parent=19 // pred_fallthru
          _
        // Predicated region
        $region25: #{tpu_custom_call.1} parent=19 // pred_check
          %p345 = pneg %p94
        $region26: #{tpu_custom_call.1} parent=19 // pred_check_branch
          %347 = sbr.rel (%p345) target = $region28
        $region27: #{tpu_custom_call.1} parent=19 // pred_region
          %s348 = sand.u32 %s27, 1
          %s349 = scalar_lea.sflag [#allocation5], %s348
          %s350 = sand.u32 %s84, 1
          %s351 = smul.addr %s350, 32
          %s352 = scalar_lea.vmem [#allocation9], %s351
          %s353 = smul.u32 4, %s27
          %s355 = ssub.s32 512, 512
          %356 = vsyncadd %s349, %s355
          %s357 = smul.addr %s353, 128
          %s358 = scalar_lea.hbm %s3, %s357
          %s359 = sshll.u32 %s352, 4
          %s360 = int_to_ptr.vmem [resolvable:$true] %s359
          %365 = dma.hbm_to_vmem [thread:$0]  %s358, 512, %s360, %s349, 128, 128, 8
        $region28: #{tpu_custom_call.1} parent=19 // pred_fallthru
          _
        // Predicated region
        $region29: #{tpu_custom_call.1} parent=19 // pred_check
          %p366 = pneg %p122
        $region30: #{tpu_custom_call.1} parent=19 // pred_check_branch
          %368 = sbr.rel (%p366) target = $region32
        $region31: #{tpu_custom_call.1} parent=19 // pred_region
          %s369 = sand.u32 %s27, 1
          %s370 = scalar_lea.sflag [#allocation5], %s369
          %s371 = sand.u32 %s112, 1
          %s372 = smul.addr %s371, 64
          %s373 = scalar_lea.vmem [#allocation10], %s372
          %s374 = sld [smem:[#allocation3 + %s27]]
          %s376 = ssub.s32 1024, 1024
          %377 = vsyncadd %s370, %s376
          %s378 = smul.addr %s374, 16
          %s379 = smul.addr %s378, 64
          %s380 = scalar_lea.hbm %s4, %s379
          %s381 = sshll.u32 %s373, 4
          %s382 = int_to_ptr.vmem [resolvable:$true] %s381
          %387 = dma.hbm_to_vmem [thread:$0]  %s380, 1024, %s382, %s370, 64, 64, 4
        $region32: #{tpu_custom_call.1} parent=19 // pred_fallthru
          _
        // Predicated region
        $region33: #{tpu_custom_call.1} parent=19 // pred_check
          %p388 = pneg %p150
        $region34: #{tpu_custom_call.1} parent=19 // pred_check_branch
          %390 = sbr.rel (%p388) target = $region36
        $region35: #{tpu_custom_call.1} parent=19 // pred_region
          %s391 = sld [smem:[#allocation3 + %s27]]
          %p392 = scmp.lt.s32.totalorder %s391, 2
          %s393 = scalar_select %p392, %s391, 2
          %s394 = scalar_lea.vmem %s5, %s393
          %s395 = sld [smem:[#allocation3 + %s27]]
        $region36: #{tpu_custom_call.1} parent=19 // pred_fallthru
          _
        // Predicated region
        $region37: #{tpu_custom_call.1} parent=19 // pred_check
          %p396 = pneg %p178
        $region38: #{tpu_custom_call.1} parent=19 // pred_check_branch
          %398 = sbr.rel (%p396) target = $region40
        $region39: #{tpu_custom_call.1} parent=19 // pred_region
          %s399 = sand.u32 %s27, 1
          %s400 = scalar_lea.sflag [#allocation5], %s399
          %s401 = sand.u32 %s168, 1
          %s402 = smul.addr %s401, 64
          %s403 = scalar_lea.vmem [#allocation11], %s402
          %s404 = sld [smem:[#allocation3 + %s27]]
          %s406 = ssub.s32 1024, 1024
          %407 = vsyncadd %s400, %s406
          %s408 = smul.addr %s404, 16
          %s409 = smul.addr %s408, 64
          %s410 = scalar_lea.hbm %s6, %s409
          %s411 = sshll.u32 %s403, 4
          %s412 = int_to_ptr.vmem [resolvable:$true] %s411
          %417 = dma.hbm_to_vmem [thread:$0]  %s410, 1024, %s412, %s400, 64, 64, 4
        $region40: #{tpu_custom_call.1} parent=19 // pred_fallthru
          _
        // Predicated region
        $region41: #{tpu_custom_call.1} parent=19 // pred_check
          %p418 = pneg %p206
        $region42: #{tpu_custom_call.1} parent=19 // pred_check_branch
          %420 = sbr.rel (%p418) target = $region44
        $region43: #{tpu_custom_call.1} parent=19 // pred_region
          %s421 = sld [smem:[#allocation3 + %s27]]
          %p422 = scmp.lt.s32.totalorder %s421, 2
          %s423 = scalar_select %p422, %s421, 2
          %s424 = scalar_lea.vmem %s7, %s423
          %s425 = sld [smem:[#allocation3 + %s27]]
        $region44: #{tpu_custom_call.1} parent=19 // pred_fallthru
          _
        // Predicated region
        $region45: #{tpu_custom_call.1} parent=19 // pred_check
          %p426 = pneg %p234
        $region46: #{tpu_custom_call.1} parent=19 // pred_check_branch
          %428 = sbr.rel (%p426) target = $region48
        $region47: #{tpu_custom_call.1} parent=19 // pred_region
          %s429 = sand.u32 %s27, 1
          %s430 = scalar_lea.sflag [#allocation5], %s429
          %s431 = sand.u32 %s224, 1
          %s432 = smul.addr %s431, 64
          %s433 = scalar_lea.vmem [#allocation12], %s432
          %s434 = sld [smem:[#allocation3 + %s27]]
          %s436 = ssub.s32 1024, 1024
          %437 = vsyncadd %s430, %s436
          %s438 = smul.addr %s434, 16
          %s439 = smul.addr %s438, 64
          %s440 = scalar_lea.hbm %s8, %s439
          %s441 = sshll.u32 %s433, 4
          %s442 = int_to_ptr.vmem [resolvable:$true] %s441
          %447 = dma.hbm_to_vmem [thread:$0]  %s440, 1024, %s442, %s430, 64, 64, 4
        $region48: #{tpu_custom_call.1} parent=19 // pred_fallthru
          _
        // Predicated region
        $region49: #{tpu_custom_call.1} parent=19 // pred_check
          %p448 = pneg %p262
        $region50: #{tpu_custom_call.1} parent=19 // pred_check_branch
          %450 = sbr.rel (%p448) target = $region52
        $region51: #{tpu_custom_call.1} parent=19 // pred_region
          %s451 = sld [smem:[#allocation3 + %s27]]
          %p452 = scmp.lt.s32.totalorder %s451, 2
          %s453 = scalar_select %p452, %s451, 2
          %s454 = scalar_lea.vmem %s9, %s453
          %s455 = sld [smem:[#allocation3 + %s27]]
        $region52: #{tpu_custom_call.1} parent=19 // pred_fallthru
          _
      $region20: #{tpu_custom_call.1} parent=5 // pred_fallthru
        _
      %p456 = scmp.le.s32.totalorder 1, %s27
      %p457 = scmp.lt.s32.totalorder %s27, 4
      %p458 = pnand %p456, %p457
      %p459 = pneg %p458
      // Predicated region
      $region53: #{tpu_custom_call.1} parent=5 // pred_check
        _
      $region54: #{tpu_custom_call.1} parent=5 // pred_check_branch
        %461 = sbr.rel (%p458) target = $region56
      $region55: #{tpu_custom_call.1} parent=5 // pred_region
        %s462 = ssub.s32 %s27, 1
        %s463 = sand.u32 %s32, 1
        %s464 = scalar_lea.sflag [#allocation5], %s463
        %s465 = sand.u32 %s40, 1
        %s466 = smul.addr %s465, 24
        %s467 = scalar_lea.vmem [#allocation4], %s466
        // Predicated region
        $region57: #{tpu_custom_call.1} parent=55 // pred_check
          %p468 = pneg %p53
        $region58: #{tpu_custom_call.1} parent=55 // pred_check_branch
          %470 = sbr.rel (%p468) target = $region60
        $region59: #{tpu_custom_call.1} parent=55 // pred_region
          %471 = dma.done %s464, 384
        $region60: #{tpu_custom_call.1} parent=55 // pred_fallthru
          _
        // Predicated region
        $region61: #{tpu_custom_call.1} parent=55 // pred_check
          %p472 = pneg %p74
        $region62: #{tpu_custom_call.1} parent=55 // pred_check_branch
          %474 = sbr.rel (%p472) target = $region64
        $region63: #{tpu_custom_call.1} parent=55 // pred_region
          %475 = dma.done [#allocation8], 3072
        $region64: #{tpu_custom_call.1} parent=55 // pred_fallthru
          _
        %s476 = sand.u32 %s32, 1
        %s477 = scalar_lea.sflag [#allocation5], %s476
        %s478 = sand.u32 %s87, 1
        %s479 = smul.addr %s478, 32
        %s480 = scalar_lea.vmem [#allocation9], %s479
        // Predicated region
        $region65: #{tpu_custom_call.1} parent=55 // pred_check
          %p481 = pneg %p100
        $region66: #{tpu_custom_call.1} parent=55 // pred_check_branch
          %483 = sbr.rel (%p481) target = $region68
        $region67: #{tpu_custom_call.1} parent=55 // pred_region
          %484 = dma.done %s477, 512
        $region68: #{tpu_custom_call.1} parent=55 // pred_fallthru
          _
        %s485 = sand.u32 %s32, 1
        %s486 = scalar_lea.sflag [#allocation5], %s485
        %s487 = sand.u32 %s115, 1
        %s488 = smul.addr %s487, 64
        %s489 = scalar_lea.vmem [#allocation10], %s488
        // Predicated region
        $region69: #{tpu_custom_call.1} parent=55 // pred_check
          %p490 = pneg %p128
        $region70: #{tpu_custom_call.1} parent=55 // pred_check_branch
          %492 = sbr.rel (%p490) target = $region72
        $region71: #{tpu_custom_call.1} parent=55 // pred_region
          %493 = dma.done %s486, 1024
        $region72: #{tpu_custom_call.1} parent=55 // pred_fallthru
          _
        %s494 = sand.u32 %s32, 1
        %s495 = scalar_lea.sflag [#allocation5], %s494
        %s496 = sand.u32 %s171, 1
        %s497 = smul.addr %s496, 64
        %s498 = scalar_lea.vmem [#allocation11], %s497
        // Predicated region
        $region73: #{tpu_custom_call.1} parent=55 // pred_check
          %p499 = pneg %p184
        $region74: #{tpu_custom_call.1} parent=55 // pred_check_branch
          %501 = sbr.rel (%p499) target = $region76
        $region75: #{tpu_custom_call.1} parent=55 // pred_region
          %502 = dma.done %s495, 1024
        $region76: #{tpu_custom_call.1} parent=55 // pred_fallthru
          _
        %s503 = sand.u32 %s32, 1
        %s504 = scalar_lea.sflag [#allocation5], %s503
        %s505 = sand.u32 %s227, 1
        %s506 = smul.addr %s505, 64
        %s507 = scalar_lea.vmem [#allocation12], %s506
        // Predicated region
        $region77: #{tpu_custom_call.1} parent=55 // pred_check
          %p508 = pneg %p240
        $region78: #{tpu_custom_call.1} parent=55 // pred_check_branch
          %510 = sbr.rel (%p508) target = $region80
        $region79: #{tpu_custom_call.1} parent=55 // pred_region
          %511 = dma.done %s504, 1024
        $region80: #{tpu_custom_call.1} parent=55 // pred_fallthru
          _
        %s512 = sand.u32 %s32, 1
        %s513 = scalar_lea.sflag [#allocation5], %s512
        %s514 = sand.u32 %s40, 1
        %s515 = smul.addr %s514, 24
        %s516 = scalar_lea.vmem [#allocation4], %s515
        %p517 = pneg %p53
        %p518 = pneg %p50
        %p519 = pneg %p74
        %p520 = pneg %p71
        %s521 = sand.u32 %s32, 1
        %s522 = scalar_lea.sflag [#allocation5], %s521
        %s523 = sand.u32 %s87, 1
        %s524 = smul.addr %s523, 32
        %s525 = scalar_lea.vmem [#allocation9], %s524
        %p526 = pneg %p100
        %p527 = pneg %p97
        %s528 = sand.u32 %s32, 1
        %s529 = scalar_lea.sflag [#allocation5], %s528
        %s530 = sand.u32 %s115, 1
        %s531 = smul.addr %s530, 64
        %s532 = scalar_lea.vmem [#allocation10], %s531
        %p533 = pneg %p128
        %p534 = pneg %p125
        %s535 = sld [smem:[#allocation3 + %s32]]
        %p536 = scmp.lt.s32.totalorder %s535, 2
        %s537 = scalar_select %p536, %s535, 2
        %s538 = scalar_lea.vmem %s5, %s537
        %p539 = pneg %p156
        %p540 = pneg %p153
        %s541 = sand.u32 %s32, 1
        %s542 = scalar_lea.sflag [#allocation5], %s541
        %s543 = sand.u32 %s171, 1
        %s544 = smul.addr %s543, 64
        %s545 = scalar_lea.vmem [#allocation11], %s544
        %p546 = pneg %p184
        %p547 = pneg %p181
        %s548 = sld [smem:[#allocation3 + %s32]]
        %p549 = scmp.lt.s32.totalorder %s548, 2
        %s550 = scalar_select %p549, %s548, 2
        %s551 = scalar_lea.vmem %s7, %s550
        %p552 = pneg %p212
        %p553 = pneg %p209
        %s554 = sand.u32 %s32, 1
        %s555 = scalar_lea.sflag [#allocation5], %s554
        %s556 = sand.u32 %s227, 1
        %s557 = smul.addr %s556, 64
        %s558 = scalar_lea.vmem [#allocation12], %s557
        %p559 = pneg %p240
        %p560 = pneg %p237
        %s561 = sld [smem:[#allocation3 + %s32]]
        %p562 = scmp.lt.s32.totalorder %s561, 2
        %s563 = scalar_select %p562, %s561, 2
        %s564 = scalar_lea.vmem %s9, %s563
        %p565 = pneg %p268
        %p566 = pneg %p265
        %p567 = pneg %p294
        %p568 = pneg %p291
        %s569 = sand.u32 %s281, 1
        %s570 = scalar_lea.sflag [#allocation6], %s569
        %s571 = sand.u32 %s281, 1
        %s572 = smul.addr %s571, 32
        %s573 = scalar_lea.vmem [#allocation13], %s572
        %s574 = smul.u32 4, %s32
        %s575 = sld [smem:[#allocation3 + %s32]]
        %s576 = sld [smem:[#allocation3 + %s32]]
        %p577 = scmp.lt.s32.totalorder %s576, 2
        %s578 = scalar_select %p577, %s576, 2
        %s579 = scalar_lea.vmem %s5, %s578
        %s580 = sld [smem:[#allocation3 + %s32]]
        %s581 = sld [smem:[#allocation3 + %s32]]
        %s582 = sld [smem:[#allocation3 + %s32]]
        %p583 = scmp.lt.s32.totalorder %s582, 2
        %s584 = scalar_select %p583, %s582, 2
        %s585 = scalar_lea.vmem %s7, %s584
        %s586 = sld [smem:[#allocation3 + %s32]]
        %s587 = sld [smem:[#allocation3 + %s32]]
        %s588 = sld [smem:[#allocation3 + %s32]]
        %p589 = scmp.lt.s32.totalorder %s588, 2
        %s590 = scalar_select %p589, %s588, 2
        %s591 = scalar_lea.vmem %s9, %s590
        %s592 = sld [smem:[#allocation3 + %s32]]
        %s593 = smul.u32 4, %s32
        %v595 = vld [vmem:[%s467] sm:$0xff]
        %v596 = vld [vmem:[%s467 + $0x8] sm:$0xff]
        %v597 = vld [vmem:[%s467 + $0x10] sm:$0xff]
        %v598 = vunpack.c.l.s8.bf16 %v595
        %v599 = vunpack.c.l.s8.bf16 %v596
        %v600 = vunpack.c.l.s8.bf16 %v597
        %v601 = vunpack.c.h.s8.bf16 %v595
        %v602 = vunpack.c.h.s8.bf16 %v596
        %v603 = vunpack.c.h.s8.bf16 %v597
        %v604 = vld [vmem:[#allocation7] sm:$0xf]
        %v605 = vld [vmem:[#allocation7 + $0x4] sm:$0xf]
        %v606 = vld [vmem:[#allocation7 + $0x8] sm:$0xf]
        %v607 = vld [vmem:[#allocation7 + $0xc] sm:$0xf]
        %v608 = vld [vmem:[#allocation7 + $0x10] sm:$0xf]
        %v609 = vld [vmem:[#allocation7 + $0x14] sm:$0xf]
        %v610 = vld [vmem:[#allocation7 + $0x18] sm:$0xf]
        %v611 = vld [vmem:[#allocation7 + $0x1c] sm:$0xf]
        %v612 = vld [vmem:[#allocation7 + $0x20] sm:$0xf]
        %v613 = vld [vmem:[#allocation7 + $0x24] sm:$0xf]
        %v614 = vld [vmem:[#allocation7 + $0x28] sm:$0xf]
        %v615 = vld [vmem:[#allocation7 + $0x2c] sm:$0xf]
        %v616 = vld [vmem:[#allocation7 + $0x30] sm:$0xf]
        %v617 = vld [vmem:[#allocation7 + $0x34] sm:$0xf]
        %v618 = vld [vmem:[#allocation7 + $0x38] sm:$0xf]
        %v619 = vld [vmem:[#allocation7 + $0x3c] sm:$0xf]
        %v620 = vld [vmem:[#allocation7 + $0x40] sm:$0xf]
        %v621 = vld [vmem:[#allocation7 + $0x44] sm:$0xf]
        %v622 = vld [vmem:[#allocation7 + $0x48] sm:$0xf]
        %v623 = vld [vmem:[#allocation7 + $0x4c] sm:$0xf]
        %v624 = vld [vmem:[#allocation7 + $0x50] sm:$0xf]
        %v625 = vld [vmem:[#allocation7 + $0x54] sm:$0xf]
        %v626 = vld [vmem:[#allocation7 + $0x58] sm:$0xf]
        %v627 = vld [vmem:[#allocation7 + $0x5c] sm:$0xf]
        %v628 = vld [vmem:[#allocation7 + $0x60] sm:$0xf]
        %v629 = vld [vmem:[#allocation7 + $0x64] sm:$0xf]
        %v630 = vld [vmem:[#allocation7 + $0x68] sm:$0xf]
        %v631 = vld [vmem:[#allocation7 + $0x6c] sm:$0xf]
        %v632 = vld [vmem:[#allocation7 + $0x70] sm:$0xf]
        %v633 = vld [vmem:[#allocation7 + $0x74] sm:$0xf]
        %v634 = vld [vmem:[#allocation7 + $0x78] sm:$0xf]
        %v635 = vld [vmem:[#allocation7 + $0x7c] sm:$0xf]
        %v636 = vld [vmem:[#allocation7 + $0x80] sm:$0xf]
        %v637 = vld [vmem:[#allocation7 + $0x84] sm:$0xf]
        %v638 = vld [vmem:[#allocation7 + $0x88] sm:$0xf]
        %v639 = vld [vmem:[#allocation7 + $0x8c] sm:$0xf]
        %v640 = vld [vmem:[#allocation7 + $0x90] sm:$0xf]
        %v641 = vld [vmem:[#allocation7 + $0x94] sm:$0xf]
        %v642 = vld [vmem:[#allocation7 + $0x98] sm:$0xf]
        %v643 = vld [vmem:[#allocation7 + $0x9c] sm:$0xf]
        %v644 = vld [vmem:[#allocation7 + $0xa0] sm:$0xf]
        %v645 = vld [vmem:[#allocation7 + $0xa4] sm:$0xf]
        %v646 = vld [vmem:[#allocation7 + $0xa8] sm:$0xf]
        %v647 = vld [vmem:[#allocation7 + $0xac] sm:$0xf]
        %v648 = vld [vmem:[#allocation7 + $0xb0] sm:$0xf]
        %v649 = vld [vmem:[#allocation7 + $0xb4] sm:$0xf]
        %v650 = vld [vmem:[#allocation7 + $0xb8] sm:$0xf]
        %v651 = vld [vmem:[#allocation7 + $0xbc] sm:$0xf]
        %v652 = vld [vmem:[%s480] sm:$0xff]
        %v653 = vld [vmem:[%s480 + $0x8] sm:$0xff]
        %v654 = vld [vmem:[%s480 + $0x10] sm:$0xff]
        %v655 = vld [vmem:[%s480 + $0x18] sm:$0xff]
        %v704 = vunpack.c.l.b16 %v604
        %v705 = vunpack.c.l.b16 %v605
        %v706 = vunpack.c.l.b16 %v606
        %v707 = vunpack.c.l.b16 %v607
        %v708 = vunpack.c.l.b16 %v608
        %v709 = vunpack.c.l.b16 %v609
        %v710 = vunpack.c.l.b16 %v610
        %v711 = vunpack.c.l.b16 %v611
        %v712 = vunpack.c.l.b16 %v612
        %v713 = vunpack.c.l.b16 %v613
        %v714 = vunpack.c.l.b16 %v614
        %v715 = vunpack.c.l.b16 %v615
        %v716 = vunpack.c.l.b16 %v616
        %v717 = vunpack.c.l.b16 %v617
        %v718 = vunpack.c.l.b16 %v618
        %v719 = vunpack.c.l.b16 %v619
        %v720 = vunpack.c.l.b16 %v620
        %v721 = vunpack.c.l.b16 %v621
        %v722 = vunpack.c.l.b16 %v622
        %v723 = vunpack.c.l.b16 %v623
        %v724 = vunpack.c.l.b16 %v624
        %v725 = vunpack.c.l.b16 %v625
        %v726 = vunpack.c.l.b16 %v626
        %v727 = vunpack.c.l.b16 %v627
        %v728 = vunpack.c.l.b16 %v628
        %v729 = vunpack.c.l.b16 %v629
        %v730 = vunpack.c.l.b16 %v630
        %v731 = vunpack.c.l.b16 %v631
        %v732 = vunpack.c.l.b16 %v632
        %v733 = vunpack.c.l.b16 %v633
        %v734 = vunpack.c.l.b16 %v634
        %v735 = vunpack.c.l.b16 %v635
        %v736 = vunpack.c.l.b16 %v636
        %v737 = vunpack.c.l.b16 %v637
        %v738 = vunpack.c.l.b16 %v638
        %v739 = vunpack.c.l.b16 %v639
        %v740 = vunpack.c.l.b16 %v640
        %v741 = vunpack.c.l.b16 %v641
        %v742 = vunpack.c.l.b16 %v642
        %v743 = vunpack.c.l.b16 %v643
        %v744 = vunpack.c.l.b16 %v644
        %v745 = vunpack.c.l.b16 %v645
        %v746 = vunpack.c.l.b16 %v646
        %v747 = vunpack.c.l.b16 %v647
        %v748 = vunpack.c.l.b16 %v648
        %v749 = vunpack.c.l.b16 %v649
        %v750 = vunpack.c.l.b16 %v650
        %v751 = vunpack.c.l.b16 %v651
        %v752 = vpack.c.b16 %v705, %v704
        %v753 = vpack.c.b16 %v707, %v706
        %v754 = vpack.c.b16 %v709, %v708
        %v755 = vpack.c.b16 %v711, %v710
        %v756 = vpack.c.b16 %v713, %v712
        %v757 = vpack.c.b16 %v715, %v714
        %v758 = vpack.c.b16 %v717, %v716
        %v759 = vpack.c.b16 %v719, %v718
        %v760 = vpack.c.b16 %v721, %v720
        %v761 = vpack.c.b16 %v723, %v722
        %v762 = vpack.c.b16 %v725, %v724
        %v763 = vpack.c.b16 %v727, %v726
        %v764 = vpack.c.b16 %v729, %v728
        %v765 = vpack.c.b16 %v731, %v730
        %v766 = vpack.c.b16 %v733, %v732
        %v767 = vpack.c.b16 %v735, %v734
        %v768 = vpack.c.b16 %v737, %v736
        %v769 = vpack.c.b16 %v739, %v738
        %v770 = vpack.c.b16 %v741, %v740
        %v771 = vpack.c.b16 %v743, %v742
        %v772 = vpack.c.b16 %v745, %v744
        %v773 = vpack.c.b16 %v747, %v746
        %v774 = vpack.c.b16 %v749, %v748
        %v775 = vpack.c.b16 %v751, %v750
        %800 = vmatprep.subr.bf16.mxu0 0
        %801 = vmatpush1.bf16.msra.mxu0 %v752
        %802 = vmatprep.subr.bf16.mxu0 0
        %803 = vmatpush1.bf16.msra.mxu0 %v753
        %804 = vmatprep.subr.bf16.mxu0 0
        %805 = vmatpush1.bf16.msra.mxu0 %v754
        %806 = vmatprep.subr.bf16.mxu0 0
        %807 = vmatpush1.bf16.msra.mxu0 %v755
        %808 = vmatprep.subr.bf16.mxu0 0
        %809 = vmatpush1.bf16.msra.mxu0 %v756
        %810 = vmatprep.subr.bf16.mxu0 0
        %811 = vmatpush1.bf16.msra.mxu0 %v757
        %812 = vmatprep.subr.bf16.mxu0 0
        %813 = vmatpush1.bf16.msra.mxu0 %v758
        %814 = vmatprep.subr.bf16.mxu0 0
        %815 = vmatpush1.bf16.msra.mxu0 %v759
        %816 = vmatprep.subr.bf16.mxu0 0
        %817 = vmatpush1.bf16.msra.mxu0 %v760
        %818 = vmatprep.subr.bf16.mxu0 0
        %819 = vmatpush1.bf16.msra.mxu0 %v761
        %820 = vmatprep.subr.bf16.mxu0 0
        %821 = vmatpush1.bf16.msra.mxu0 %v762
        %822 = vmatprep.subr.bf16.mxu0 0
        %823 = vmatpush1.bf16.msra.mxu0 %v763
        %824 = vmatprep.subr.bf16.mxu0 0
        %825 = vmatpush1.bf16.msra.mxu0 %v764
        %826 = vmatprep.subr.bf16.mxu0 0
        %827 = vmatpush1.bf16.msra.mxu0 %v765
        %828 = vmatprep.subr.bf16.mxu0 0
        %829 = vmatpush1.bf16.msra.mxu0 %v766
        %830 = vmatprep.subr.bf16.mxu0 0
        %831 = vmatpush1.bf16.msra.mxu0 %v767
        %832 = vmatprep.mubr.bf16.mxu0 %v599
        %833 = vmatmul.mubr.bf16.gmra.mrb[0].mxu0 %v598
        %v834 = vpop.f32.mrb[0].mxu0
        %v835 = vadd.f32 %v652, %v834
        %v836 = vpop.f32.mrb[0].mxu0
        %v837 = vpop.f32.mrb[0].mxu0
        %v838 = vadd.f32 %v653, %v837
        %v839 = vpop.f32.mrb[0].mxu0
        %840 = vmatprep.mubr.bf16.mxu0 %v602
        %841 = vmatmul.mubr.bf16.gmra.mrb[0].mxu0 %v601
        %v842 = vpop.f32.mrb[0].mxu0
        %v843 = vadd.f32 %v654, %v842
        %v844 = vpop.f32.mrb[0].mxu0
        %v845 = vpop.f32.mrb[0].mxu0
        %v846 = vadd.f32 %v655, %v845
        %v847 = vpop.f32.mrb[0].mxu0
        %848 = vdwg.mxu0
        %849 = vmatprep.subr.bf16.mxu0 0
        %850 = vmatpush1.bf16.msra.mxu0 %v768
        %851 = vmatprep.subr.bf16.mxu0 0
        %852 = vmatpush1.bf16.msra.mxu0 %v769
        %853 = vmatprep.subr.bf16.mxu0 0
        %854 = vmatpush1.bf16.msra.mxu0 %v770
        %855 = vmatprep.subr.bf16.mxu0 0
        %856 = vmatpush1.bf16.msra.mxu0 %v771
        %857 = vmatprep.subr.bf16.mxu0 0
        %858 = vmatpush1.bf16.msra.mxu0 %v772
        %859 = vmatprep.subr.bf16.mxu0 0
        %860 = vmatpush1.bf16.msra.mxu0 %v773
        %861 = vmatprep.subr.bf16.mxu0 0
        %862 = vmatpush1.bf16.msra.mxu0 %v774
        %863 = vmatprep.subr.bf16.mxu0 0
        %864 = vmatpush1.bf16.msra.mxu0 %v775
        %865 = vmatprep.subr.bf16.mxu0 0
        %866 = vmatpush1.bf16.msra.mxu0 0
        %867 = vmatprep.subr.bf16.mxu0 0
        %868 = vmatpush1.bf16.msra.mxu0 0
        %869 = vmatprep.subr.bf16.mxu0 0
        %870 = vmatpush1.bf16.msra.mxu0 0
        %871 = vmatprep.subr.bf16.mxu0 0
        %872 = vmatpush1.bf16.msra.mxu0 0
        %873 = vmatprep.subr.bf16.mxu0 0
        %874 = vmatpush1.bf16.msra.mxu0 0
        %875 = vmatprep.subr.bf16.mxu0 0
        %876 = vmatpush1.bf16.msra.mxu0 0
        %877 = vmatprep.subr.bf16.mxu0 0
        %878 = vmatpush1.bf16.msra.mxu0 0
        %879 = vmatprep.subr.bf16.mxu0 0
        %880 = vmatpush1.bf16.msra.mxu0 0
        %881 = vmatprep.mubr.bf16.mxu0 0
        %882 = vmatmul.mubr.bf16.gmra.mrb[0].mxu0 %v600
        %v883 = vpop.f32.mrb[0].mxu0
        %v884 = vadd.f32 %v835, %v883
        %v885 = vpop.f32.mrb[0].mxu0
        %v886 = vpop.f32.mrb[0].mxu0
        %v887 = vadd.f32 %v838, %v886
        %v888 = vpop.f32.mrb[0].mxu0
        %889 = vmatprep.mubr.bf16.mxu0 0
        %890 = vmatmul.mubr.bf16.gmra.mrb[0].mxu0 %v603
        %v891 = vpop.f32.mrb[0].mxu0
        %v892 = vadd.f32 %v843, %v891
        %v893 = vpop.f32.mrb[0].mxu0
        %v894 = vpop.f32.mrb[0].mxu0
        %v895 = vadd.f32 %v846, %v894
        %v896 = vpop.f32.mrb[0].mxu0
        %897 = vdwg.mxu0
        %v898 = vpack.c.bf16 %v887, %v884
        %v899 = vpack.c.bf16 %v895, %v892
        %v900 = vld [vmem:[%s489] sm:$0xf]
        %v901 = vld [vmem:[%s489 + $0x4] sm:$0xf]
        %v902 = vld [vmem:[%s489 + $0x8] sm:$0xf]
        %v903 = vld [vmem:[%s489 + $0xc] sm:$0xf]
        %v904 = vld [vmem:[%s489 + $0x10] sm:$0xf]
        %v905 = vld [vmem:[%s489 + $0x14] sm:$0xf]
        %v906 = vld [vmem:[%s489 + $0x18] sm:$0xf]
        %v907 = vld [vmem:[%s489 + $0x1c] sm:$0xf]
        %v908 = vld [vmem:[%s489 + $0x20] sm:$0xf]
        %v909 = vld [vmem:[%s489 + $0x24] sm:$0xf]
        %v910 = vld [vmem:[%s489 + $0x28] sm:$0xf]
        %v911 = vld [vmem:[%s489 + $0x2c] sm:$0xf]
        %v912 = vld [vmem:[%s489 + $0x30] sm:$0xf]
        %v913 = vld [vmem:[%s489 + $0x34] sm:$0xf]
        %v914 = vld [vmem:[%s489 + $0x38] sm:$0xf]
        %v915 = vld [vmem:[%s489 + $0x3c] sm:$0xf]
        %v916 = vld [vmem:[%s579] sm:$0x1]
        %v918 = vlaneseq
        %v919 = vshrl.u32 %v918, 7
        %v920 = vsub.s32 0, %v919
        %v921 = vrot.slane %v916, %v920
        %v939 = vunpack.c.l.b16 %v900
        %v940 = vunpack.c.l.b16 %v901
        %v941 = vunpack.c.l.b16 %v902
        %v942 = vunpack.c.l.b16 %v903
        %v943 = vunpack.c.l.b16 %v904
        %v944 = vunpack.c.l.b16 %v905
        %v945 = vunpack.c.l.b16 %v906
        %v946 = vunpack.c.l.b16 %v907
        %v947 = vunpack.c.l.b16 %v908
        %v948 = vunpack.c.l.b16 %v909
        %v949 = vunpack.c.l.b16 %v910
        %v950 = vunpack.c.l.b16 %v911
        %v951 = vunpack.c.l.b16 %v912
        %v952 = vunpack.c.l.b16 %v913
        %v953 = vunpack.c.l.b16 %v914
        %v954 = vunpack.c.l.b16 %v915
        %v955 = vpack.c.b16 %v940, %v939
        %v956 = vpack.c.b16 %v942, %v941
        %v957 = vpack.c.b16 %v944, %v943
        %v958 = vpack.c.b16 %v946, %v945
        %v959 = vpack.c.b16 %v948, %v947
        %v960 = vpack.c.b16 %v950, %v949
        %v961 = vpack.c.b16 %v952, %v951
        %v962 = vpack.c.b16 %v954, %v953
        %971 = vmatprep.subr.bf16.mxu0 0
        %972 = vmatpush1.bf16.msra.mxu0 %v955
        %973 = vmatprep.subr.bf16.mxu0 0
        %974 = vmatpush1.bf16.msra.mxu0 %v956
        %975 = vmatprep.subr.bf16.mxu0 0
        %976 = vmatpush1.bf16.msra.mxu0 %v957
        %977 = vmatprep.subr.bf16.mxu0 0
        %978 = vmatpush1.bf16.msra.mxu0 %v958
        %979 = vmatprep.subr.bf16.mxu0 0
        %980 = vmatpush1.bf16.msra.mxu0 %v959
        %981 = vmatprep.subr.bf16.mxu0 0
        %982 = vmatpush1.bf16.msra.mxu0 %v960
        %983 = vmatprep.subr.bf16.mxu0 0
        %984 = vmatpush1.bf16.msra.mxu0 %v961
        %985 = vmatprep.subr.bf16.mxu0 0
        %986 = vmatpush1.bf16.msra.mxu0 %v962
        %987 = vmatprep.subr.bf16.mxu0 0
        %988 = vmatpush1.bf16.msra.mxu0 0
        %989 = vmatprep.subr.bf16.mxu0 0
        %990 = vmatpush1.bf16.msra.mxu0 0
        %991 = vmatprep.subr.bf16.mxu0 0
        %992 = vmatpush1.bf16.msra.mxu0 0
        %993 = vmatprep.subr.bf16.mxu0 0
        %994 = vmatpush1.bf16.msra.mxu0 0
        %995 = vmatprep.subr.bf16.mxu0 0
        %996 = vmatpush1.bf16.msra.mxu0 0
        %997 = vmatprep.subr.bf16.mxu0 0
        %998 = vmatpush1.bf16.msra.mxu0 0
        %999 = vmatprep.subr.bf16.mxu0 0
        %1000 = vmatpush1.bf16.msra.mxu0 0
        %1001 = vmatprep.subr.bf16.mxu0 0
        %1002 = vmatpush1.bf16.msra.mxu0 0
        %1003 = vmatprep.mubr.bf16.mxu0 0
        %1004 = vmatmul.mubr.bf16.gmra.mrb[0].mxu0 %v898
        %v1005 = vpop.f32.mrb[0].mxu0
        %v1006 = vadd.f32 %v921, %v1005
        %v1007 = vpop.f32.mrb[0].mxu0
        %v1008 = vpop.f32.mrb[0].mxu0
        %v1009 = vadd.f32 %v921, %v1008
        %v1010 = vpop.f32.mrb[0].mxu0
        %1011 = vmatprep.mubr.bf16.mxu0 0
        %1012 = vmatmul.mubr.bf16.gmra.mrb[0].mxu0 %v899
        %v1013 = vpop.f32.mrb[0].mxu0
        %v1014 = vadd.f32 %v921, %v1013
        %v1015 = vpop.f32.mrb[0].mxu0
        %v1016 = vpop.f32.mrb[0].mxu0
        %v1017 = vadd.f32 %v921, %v1016
        %v1018 = vpop.f32.mrb[0].mxu0
        %1019 = vdwg.mxu0
        %v1020 = vmax.f32 %v1006, 0.0
        %v1021 = vmax.f32 %v1009, 0.0
        %v1022 = vmax.f32 %v1014, 0.0
        %v1023 = vmax.f32 %v1017, 0.0
        %v1024 = vpack.c.bf16 %v1021, %v1020
        %v1025 = vpack.c.bf16 %v1023, %v1022
        %v1026 = vld [vmem:[%s498] sm:$0xf]
        %v1027 = vld [vmem:[%s498 + $0x4] sm:$0xf]
        %v1028 = vld [vmem:[%s498 + $0x8] sm:$0xf]
        %v1029 = vld [vmem:[%s498 + $0xc] sm:$0xf]
        %v1030 = vld [vmem:[%s498 + $0x10] sm:$0xf]
        %v1031 = vld [vmem:[%s498 + $0x14] sm:$0xf]
        %v1032 = vld [vmem:[%s498 + $0x18] sm:$0xf]
        %v1033 = vld [vmem:[%s498 + $0x1c] sm:$0xf]
        %v1034 = vld [vmem:[%s498 + $0x20] sm:$0xf]
        %v1035 = vld [vmem:[%s498 + $0x24] sm:$0xf]
        %v1036 = vld [vmem:[%s498 + $0x28] sm:$0xf]
        %v1037 = vld [vmem:[%s498 + $0x2c] sm:$0xf]
        %v1038 = vld [vmem:[%s498 + $0x30] sm:$0xf]
        %v1039 = vld [vmem:[%s498 + $0x34] sm:$0xf]
        %v1040 = vld [vmem:[%s498 + $0x38] sm:$0xf]
        %v1041 = vld [vmem:[%s498 + $0x3c] sm:$0xf]
        %v1042 = vld [vmem:[%s585] sm:$0x1]
        %v1044 = vlaneseq
        %v1045 = vshrl.u32 %v1044, 7
        %v1046 = vsub.s32 0, %v1045
        %v1047 = vrot.slane %v1042, %v1046
        %v1065 = vunpack.c.l.b16 %v1026
        %v1066 = vunpack.c.l.b16 %v1027
        %v1067 = vunpack.c.l.b16 %v1028
        %v1068 = vunpack.c.l.b16 %v1029
        %v1069 = vunpack.c.l.b16 %v1030
        %v1070 = vunpack.c.l.b16 %v1031
        %v1071 = vunpack.c.l.b16 %v1032
        %v1072 = vunpack.c.l.b16 %v1033
        %v1073 = vunpack.c.l.b16 %v1034
        %v1074 = vunpack.c.l.b16 %v1035
        %v1075 = vunpack.c.l.b16 %v1036
        %v1076 = vunpack.c.l.b16 %v1037
        %v1077 = vunpack.c.l.b16 %v1038
        %v1078 = vunpack.c.l.b16 %v1039
        %v1079 = vunpack.c.l.b16 %v1040
        %v1080 = vunpack.c.l.b16 %v1041
        %v1081 = vpack.c.b16 %v1066, %v1065
        %v1082 = vpack.c.b16 %v1068, %v1067
        %v1083 = vpack.c.b16 %v1070, %v1069
        %v1084 = vpack.c.b16 %v1072, %v1071
        %v1085 = vpack.c.b16 %v1074, %v1073
        %v1086 = vpack.c.b16 %v1076, %v1075
        %v1087 = vpack.c.b16 %v1078, %v1077
        %v1088 = vpack.c.b16 %v1080, %v1079
        %1097 = vmatprep.subr.bf16.mxu0 0
        %1098 = vmatpush1.bf16.msra.mxu0 %v1081
        %1099 = vmatprep.subr.bf16.mxu0 0
        %1100 = vmatpush1.bf16.msra.mxu0 %v1082
        %1101 = vmatprep.subr.bf16.mxu0 0
        %1102 = vmatpush1.bf16.msra.mxu0 %v1083
        %1103 = vmatprep.subr.bf16.mxu0 0
        %1104 = vmatpush1.bf16.msra.mxu0 %v1084
        %1105 = vmatprep.subr.bf16.mxu0 0
        %1106 = vmatpush1.bf16.msra.mxu0 %v1085
        %1107 = vmatprep.subr.bf16.mxu0 0
        %1108 = vmatpush1.bf16.msra.mxu0 %v1086
        %1109 = vmatprep.subr.bf16.mxu0 0
        %1110 = vmatpush1.bf16.msra.mxu0 %v1087
        %1111 = vmatprep.subr.bf16.mxu0 0
        %1112 = vmatpush1.bf16.msra.mxu0 %v1088
        %1113 = vmatprep.subr.bf16.mxu0 0
        %1114 = vmatpush1.bf16.msra.mxu0 0
        %1115 = vmatprep.subr.bf16.mxu0 0
        %1116 = vmatpush1.bf16.msra.mxu0 0
        %1117 = vmatprep.subr.bf16.mxu0 0
        %1118 = vmatpush1.bf16.msra.mxu0 0
        %1119 = vmatprep.subr.bf16.mxu0 0
        %1120 = vmatpush1.bf16.msra.mxu0 0
        %1121 = vmatprep.subr.bf16.mxu0 0
        %1122 = vmatpush1.bf16.msra.mxu0 0
        %1123 = vmatprep.subr.bf16.mxu0 0
        %1124 = vmatpush1.bf16.msra.mxu0 0
        %1125 = vmatprep.subr.bf16.mxu0 0
        %1126 = vmatpush1.bf16.msra.mxu0 0
        %1127 = vmatprep.subr.bf16.mxu0 0
        %1128 = vmatpush1.bf16.msra.mxu0 0
        %1129 = vmatprep.mubr.bf16.mxu0 0
        %1130 = vmatmul.mubr.bf16.gmra.mrb[0].mxu0 %v1024
        %v1131 = vpop.f32.mrb[0].mxu0
        %v1132 = vadd.f32 %v1047, %v1131
        %v1133 = vpop.f32.mrb[0].mxu0
        %v1134 = vpop.f32.mrb[0].mxu0
        %v1135 = vadd.f32 %v1047, %v1134
        %v1136 = vpop.f32.mrb[0].mxu0
        %1137 = vmatprep.mubr.bf16.mxu0 0
        %1138 = vmatmul.mubr.bf16.gmra.mrb[0].mxu0 %v1025
        %v1139 = vpop.f32.mrb[0].mxu0
        %v1140 = vadd.f32 %v1047, %v1139
        %v1141 = vpop.f32.mrb[0].mxu0
        %v1142 = vpop.f32.mrb[0].mxu0
        %v1143 = vadd.f32 %v1047, %v1142
        %v1144 = vpop.f32.mrb[0].mxu0
        %1145 = vdwg.mxu0
        %v1146 = vmax.f32 %v1132, 0.0
        %v1147 = vmax.f32 %v1135, 0.0
        %v1148 = vmax.f32 %v1140, 0.0
        %v1149 = vmax.f32 %v1143, 0.0
        %v1150 = vpack.c.bf16 %v1147, %v1146
        %v1151 = vpack.c.bf16 %v1149, %v1148
        %v1152 = vld [vmem:[%s507] sm:$0xf]
        %v1153 = vld [vmem:[%s507 + $0x4] sm:$0xf]
        %v1154 = vld [vmem:[%s507 + $0x8] sm:$0xf]
        %v1155 = vld [vmem:[%s507 + $0xc] sm:$0xf]
        %v1156 = vld [vmem:[%s507 + $0x10] sm:$0xf]
        %v1157 = vld [vmem:[%s507 + $0x14] sm:$0xf]
        %v1158 = vld [vmem:[%s507 + $0x18] sm:$0xf]
        %v1159 = vld [vmem:[%s507 + $0x1c] sm:$0xf]
        %v1160 = vld [vmem:[%s507 + $0x20] sm:$0xf]
        %v1161 = vld [vmem:[%s507 + $0x24] sm:$0xf]
        %v1162 = vld [vmem:[%s507 + $0x28] sm:$0xf]
        %v1163 = vld [vmem:[%s507 + $0x2c] sm:$0xf]
        %v1164 = vld [vmem:[%s507 + $0x30] sm:$0xf]
        %v1165 = vld [vmem:[%s507 + $0x34] sm:$0xf]
        %v1166 = vld [vmem:[%s507 + $0x38] sm:$0xf]
        %v1167 = vld [vmem:[%s507 + $0x3c] sm:$0xf]
        %v1168 = vld [vmem:[%s591] sm:$0x1]
        %v1170 = vlaneseq
        %v1171 = vshrl.u32 %v1170, 7
        %v1172 = vsub.s32 0, %v1171
        %v1173 = vrot.slane %v1168, %v1172
        %v1191 = vunpack.c.l.b16 %v1152
        %v1192 = vunpack.c.l.b16 %v1153
        %v1193 = vunpack.c.l.b16 %v1154
        %v1194 = vunpack.c.l.b16 %v1155
        %v1195 = vunpack.c.l.b16 %v1156
        %v1196 = vunpack.c.l.b16 %v1157
        %v1197 = vunpack.c.l.b16 %v1158
        %v1198 = vunpack.c.l.b16 %v1159
        %v1199 = vunpack.c.l.b16 %v1160
        %v1200 = vunpack.c.l.b16 %v1161
        %v1201 = vunpack.c.l.b16 %v1162
        %v1202 = vunpack.c.l.b16 %v1163
        %v1203 = vunpack.c.l.b16 %v1164
        %v1204 = vunpack.c.l.b16 %v1165
        %v1205 = vunpack.c.l.b16 %v1166
        %v1206 = vunpack.c.l.b16 %v1167
        %v1207 = vpack.c.b16 %v1192, %v1191
        %v1208 = vpack.c.b16 %v1194, %v1193
        %v1209 = vpack.c.b16 %v1196, %v1195
        %v1210 = vpack.c.b16 %v1198, %v1197
        %v1211 = vpack.c.b16 %v1200, %v1199
        %v1212 = vpack.c.b16 %v1202, %v1201
        %v1213 = vpack.c.b16 %v1204, %v1203
        %v1214 = vpack.c.b16 %v1206, %v1205
        %1223 = vmatprep.subr.bf16.mxu0 0
        %1224 = vmatpush1.bf16.msra.mxu0 %v1207
        %1225 = vmatprep.subr.bf16.mxu0 0
        %1226 = vmatpush1.bf16.msra.mxu0 %v1208
        %1227 = vmatprep.subr.bf16.mxu0 0
        %1228 = vmatpush1.bf16.msra.mxu0 %v1209
        %1229 = vmatprep.subr.bf16.mxu0 0
        %1230 = vmatpush1.bf16.msra.mxu0 %v1210
        %1231 = vmatprep.subr.bf16.mxu0 0
        %1232 = vmatpush1.bf16.msra.mxu0 %v1211
        %1233 = vmatprep.subr.bf16.mxu0 0
        %1234 = vmatpush1.bf16.msra.mxu0 %v1212
        %1235 = vmatprep.subr.bf16.mxu0 0
        %1236 = vmatpush1.bf16.msra.mxu0 %v1213
        %1237 = vmatprep.subr.bf16.mxu0 0
        %1238 = vmatpush1.bf16.msra.mxu0 %v1214
        %1239 = vmatprep.subr.bf16.mxu0 0
        %1240 = vmatpush1.bf16.msra.mxu0 0
        %1241 = vmatprep.subr.bf16.mxu0 0
        %1242 = vmatpush1.bf16.msra.mxu0 0
        %1243 = vmatprep.subr.bf16.mxu0 0
        %1244 = vmatpush1.bf16.msra.mxu0 0
        %1245 = vmatprep.subr.bf16.mxu0 0
        %1246 = vmatpush1.bf16.msra.mxu0 0
        %1247 = vmatprep.subr.bf16.mxu0 0
        %1248 = vmatpush1.bf16.msra.mxu0 0
        %1249 = vmatprep.subr.bf16.mxu0 0
        %1250 = vmatpush1.bf16.msra.mxu0 0
        %1251 = vmatprep.subr.bf16.mxu0 0
        %1252 = vmatpush1.bf16.msra.mxu0 0
        %1253 = vmatprep.subr.bf16.mxu0 0
        %1254 = vmatpush1.bf16.msra.mxu0 0
        %1255 = vmatprep.mubr.bf16.mxu0 0
        %1256 = vmatmul.mubr.bf16.gmra.mrb[0].mxu0 %v1150
        %v1257 = vpop.f32.mrb[0].mxu0
        %v1258 = vadd.f32 %v1173, %v1257
        %v1259 = vpop.f32.mrb[0].mxu0
        %v1260 = vpop.f32.mrb[0].mxu0
        %v1261 = vadd.f32 %v1173, %v1260
        %v1262 = vpop.f32.mrb[0].mxu0
        %1263 = vmatprep.mubr.bf16.mxu0 0
        %1264 = vmatmul.mubr.bf16.gmra.mrb[0].mxu0 %v1151
        %v1265 = vpop.f32.mrb[0].mxu0
        %v1266 = vadd.f32 %v1173, %v1265
        %v1267 = vpop.f32.mrb[0].mxu0
        %v1268 = vpop.f32.mrb[0].mxu0
        %v1269 = vadd.f32 %v1173, %v1268
        %v1270 = vpop.f32.mrb[0].mxu0
        %1271 = vdwg.mxu0
        %v1272 = vmax.f32 %v1258, 0.0
        %v1273 = vmax.f32 %v1261, 0.0
        %v1274 = vmax.f32 %v1266, 0.0
        %v1275 = vmax.f32 %v1269, 0.0
        %1276 = vst [vmem:[%s573] sm:$0xff] %v1272
        %1277 = vst [vmem:[%s573 + $0x8] sm:$0xff] %v1273
        %1278 = vst [vmem:[%s573 + $0x10] sm:$0xff] %v1274
        %1279 = vst [vmem:[%s573 + $0x18] sm:$0xff] %v1275
        %s1280 = sand.u32 %s281, 1
        %s1281 = scalar_lea.sflag [#allocation6], %s1280
        %s1282 = sand.u32 %s281, 1
        %s1283 = smul.addr %s1282, 32
        %s1284 = scalar_lea.vmem [#allocation13], %s1283
        // Predicated region
        $region81: #{tpu_custom_call.1} parent=55 // pred_check
          %p1285 = pneg %p291
        $region82: #{tpu_custom_call.1} parent=55 // pred_check_branch
          %1287 = sbr.rel (%p1285) target = $region84
        $region83: #{tpu_custom_call.1} parent=55 // pred_region
          %s1288 = smul.u32 4, %s32
          %s1290 = ssub.s32 512, 512
          %1291 = vsyncadd %s1281, %s1290
          %s1292 = smul.addr %s1288, 128
          %s1293 = scalar_lea.hbm %s10, %s1292
          %s1294 = sshll.u32 %s1284, 4
          %s1295 = int_to_ptr.vmem [resolvable:$true] %s1294
          %1300 = dma.vmem_to_hbm [thread:$0]  %s1295, 512, %s1293, %s1281, 128, 128, 8
        $region84: #{tpu_custom_call.1} parent=55 // pred_fallthru
          _
      $region56: #{tpu_custom_call.1} parent=5 // pred_fallthru
        _
      %p1301 = scmp.le.s32.totalorder 2, %s27
      // Predicated region
      $region85: #{tpu_custom_call.1} parent=5 // pred_check
        %p1302 = pneg %p1301
      $region86: #{tpu_custom_call.1} parent=5 // pred_check_branch
        %1304 = sbr.rel (%p1302) target = $region88
      $region87: #{tpu_custom_call.1} parent=5 // pred_region
        %s1305 = ssub.s32 %s27, 2
        // Predicated region
        $region89: #{tpu_custom_call.1} parent=87 // pred_check
          %p1306 = pneg %p297
        $region90: #{tpu_custom_call.1} parent=87 // pred_check_branch
          %1308 = sbr.rel (%p1306) target = $region92
        $region91: #{tpu_custom_call.1} parent=87 // pred_region
          %s1309 = sand.u32 %s282, 1
          %s1310 = scalar_lea.sflag [#allocation6], %s1309
          %s1311 = sand.u32 %s282, 1
          %s1312 = smul.addr %s1311, 32
          %s1313 = scalar_lea.vmem [#allocation13], %s1312
          %1314 = dma.done %s1310, 512
        $region92: #{tpu_custom_call.1} parent=87 // pred_fallthru
          _
      $region88: #{tpu_custom_call.1} parent=5 // pred_fallthru
        _
    $region6: #{tpu_custom_call.1} parent=1 // loop_footer
      %s31 = sadd.s32 1, %s27
    $region7: #{tpu_custom_call.1} parent=1 // loop_footer_branch
      %26 = sbr.rel target = $region3
    $region8: #{tpu_custom_call.1} parent=1 // loop_exit
      _
    %1315 = vsyncpa [#allocation5], 1
    %s1316 = scalar_lea.sflag [#allocation5], 1
    %1317 = vsyncpa %s1316, 1
    %1318 = vsyncpa [#allocation8], 1
    %1319 = vsyncpa [#allocation6], 1
    %s1320 = scalar_lea.sflag [#allocation6], 1
    %1321 = vsyncpa %s1320, 1

// kernel: tpu_custom_call.1
$region0: #{tpu_custom_call.1}
  #allocation0 [shape = 'u32[]', space=smem, size = 0x4, offset = 0x4, fixed_abs, tag = 'smem constant byte address 0x4 - core index']
  #allocation1 [shape = 'u32[144,128]{1,0:T(1,128)}', space=vmem, size = 0x12000, scoped, tag = 'internal scratch']
  #allocation2 [shape = 's32[1]{0}', space=sflag, size = 0x4, scoped, tag = 'scoped memory for tpu_custom_call.1']
  #allocation3 [shape = 'u8[512]{0}', space=smem, size = 0x200, scoped, tag = 'prefetched SMEM operand 0']
  %s0 = inlined_call_operand.hbm [shape: s32[3], index: 0, kind: input, shape index: {}]
  %s1 = inlined_call_operand.hbm [shape: bf16[96,384], index: 1, kind: input, shape index: {}]
  %s2 = inlined_call_operand.hbm [shape: bf16[384,128], index: 2, kind: input, shape index: {}]
  %s3 = inlined_call_operand.hbm [shape: f32[96,128], index: 3, kind: input, shape index: {}]
  %s4 = inlined_call_operand.hbm [shape: bf16[3,128,128], index: 4, kind: input, shape index: {}]
  %s5 = inlined_call_operand.vmem [shape: f32[3,1,128], index: 5, kind: input, shape index: {}]
  %s6 = inlined_call_operand.hbm [shape: bf16[3,128,128], index: 6, kind: input, shape index: {}]
  %s7 = inlined_call_operand.vmem [shape: f32[3,1,128], index: 7, kind: input, shape index: {}]
  %s8 = inlined_call_operand.hbm [shape: bf16[3,128,128], index: 8, kind: input, shape index: {}]
  %s9 = inlined_call_operand.vmem [shape: f32[3,1,128], index: 9, kind: input, shape index: {}]
  %s10 = inlined_call_operand.hbm [shape: f32[96,128], index: 10, kind: output, shape index: {}]
  %s11 = sld [smem:[#allocation0]]
  $region93: #{tpu_custom_call.1} parent=0
    _
  %s13 = ssub.s32 1, %s11
  %s14 = scalar_select 0, %s13, %s11
  %16 = dma.hbm_to_smem %s0, 16, [#allocation3], [#allocation2]
  %17 = dma.done [#allocation2], 16
  %18 = sfence
  $region1: #{tpu_custom_call.1} parent=0
    #allocation4 [shape = 'u8[49152]{0}', space=vmem, size = 0xc000, scoped, tag = 'input window, operand 1']
    #allocation5 [shape = 's32[2]{0}', space=sflag, size = 0x8, scoped, tag = 'scoped memory for tpu_custom_call.1']
    #allocation6 [shape = 's32[2]{0}', space=sflag, size = 0x8, scoped, tag = 'scoped memory for tpu_custom_call.1']
    #allocation7 [shape = 'u8[98304]{0}', space=vmem, size = 0x18000, scoped, tag = 'input window, operand 2, single buffered']
    #allocation8 [shape = 's32[1]{0}', space=sflag, size = 0x4, scoped, tag = 'scoped memory for tpu_custom_call.1']
    #allocation9 [shape = 'u8[32768]{0}', space=vmem, size = 0x8000, scoped, tag = 'input window, operand 3']
    #allocation10 [shape = 'u8[65536]{0}', space=vmem, size = 0x10000, scoped, tag = 'input window, operand 4']
    #allocation11 [shape = 'u8[65536]{0}', space=vmem, size = 0x10000, scoped, tag = 'input window, operand 6']
    #allocation12 [shape = 'u8[65536]{0}', space=vmem, size = 0x10000, scoped, tag = 'input window, operand 8']
    #allocation13 [shape = 'u8[32768]{0}', space=vmem, size = 0x8000, scoped, tag = 'output window, operand 0']
    %19 = vsyncpa [#allocation5], 0
    %s20 = scalar_lea.sflag [#allocation5], 1
    %21 = vsyncpa %s20, 0
    %22 = vsyncpa [#allocation8], 0
    %23 = vsyncpa [#allocation6], 0
    %s24 = scalar_lea.sflag [#allocation6], 1
    %25 = vsyncpa %s24, 0
    loop: start=0, step=1, limit=5
    $region2: #{tpu_custom_call.1} parent=1 // loop_pre_header
      _
    $region3: #{tpu_custom_call.1} parent=1 // loop_header
      %s27 = sphi 0, %s31
      %p28 = scmp.ge.s32.totalorder %s27, 5
      %s37 = sphi 0, %s39
      %s40 = sphi 0, %s37
      %s41 = sphi 0, %s40
      %s57 = sphi 0, %s41
      %s61 = sphi 0, %s61
      %s63 = sphi 0, %s61
      %s64 = sphi 0, %s63
      %s78 = sphi 0, %s64
      %s84 = sphi 0, %s86
      %s87 = sphi 0, %s84
      %s88 = sphi 0, %s87
      %s104 = sphi 0, %s88
      %s112 = sphi 0, %s114
      %s115 = sphi 0, %s112
      %s116 = sphi 0, %s115
      %s132 = sphi 0, %s116
      %s140 = sphi 0, %s142
      %s143 = sphi 0, %s140
      %s144 = sphi 0, %s143
      %s160 = sphi 0, %s144
      %s168 = sphi 0, %s170
      %s171 = sphi 0, %s168
      %s172 = sphi 0, %s171
      %s188 = sphi 0, %s172
      %s196 = sphi 0, %s198
      %s199 = sphi 0, %s196
      %s200 = sphi 0, %s199
      %s216 = sphi 0, %s200
      %s224 = sphi 0, %s226
      %s227 = sphi 0, %s224
      %s228 = sphi 0, %s227
      %s244 = sphi 0, %s228
      %s252 = sphi 0, %s254
      %s255 = sphi 0, %s252
      %s256 = sphi 0, %s255
      %s272 = sphi 0, %s256
      %s278 = sphi 0, %s280
      %s281 = sphi 0, %s278
      %s282 = sphi 0, %s281
      %s298 = sphi 0, %s282
    $region4: #{tpu_custom_call.1} parent=1 // loop_header_branch
      %30 = sbr.rel (%p28) target = $region8
    $region5: #{tpu_custom_call.1} parent=1 // loop_body
      %s32 = ssub.s32 %s27, 1
      %s33 = ssub.s32 %s27, 2
      %s34 = sadd.s32 %s27, 1
      %s35 = ssub.s32 %s27, %s34
      %p36 = scmp.eq.s32.totalorder %s35, 0
      %s38 = sadd.s32 %s37, 1
      %s39 = scalar_select %p36, %s37, %s38
      %p42 = pneg %p36
      %p43 = scmp.eq.s32.totalorder %s27, 2
      %p44 = por %p42, %p43
      %p45 = scmp.ne.s32.totalorder %s37, %s40
      %p46 = scmp.eq.s32.totalorder %s27, 0
      %p47 = por %p45, %p46
      %p48 = scmp.ne.s32.totalorder %s37, %s40
      %p49 = scmp.eq.s32.totalorder %s32, 2
      %p50 = por %p48, %p49
      %p51 = scmp.ne.s32.totalorder %s40, %s41
      %p52 = scmp.eq.s32.totalorder %s32, 0
      %p53 = por %p51, %p52
      %p54 = scmp.ne.s32.totalorder %s40, %s41
      %p55 = scmp.eq.s32.totalorder %s33, 2
      %p56 = por %p54, %p55
      %p58 = scmp.ne.s32.totalorder %s41, %s57
      %p59 = scmp.eq.s32.totalorder %s33, 0
      %p60 = por %p58, %p59
      %s62 = sadd.s32 %s61, 1
      %p65 = scmp.eq.s32.totalorder %s27, 2
      %p66 = scmp.ne.s32.totalorder %s61, %s63
      %p67 = scmp.eq.s32.totalorder %s27, 0
      %p68 = por %p66, %p67
      %p69 = scmp.ne.s32.totalorder %s61, %s63
      %p70 = scmp.eq.s32.totalorder %s32, 2
      %p71 = por %p69, %p70
      %p72 = scmp.ne.s32.totalorder %s63, %s64
      %p73 = scmp.eq.s32.totalorder %s32, 0
      %p74 = por %p72, %p73
      %p75 = scmp.ne.s32.totalorder %s63, %s64
      %p76 = scmp.eq.s32.totalorder %s33, 2
      %p77 = por %p75, %p76
      %p79 = scmp.ne.s32.totalorder %s64, %s78
      %p80 = scmp.eq.s32.totalorder %s33, 0
      %p81 = por %p79, %p80
      %s82 = ssub.s32 %s27, %s34
      %p83 = scmp.eq.s32.totalorder %s82, 0
      %s85 = sadd.s32 %s84, 1
      %s86 = scalar_select %p83, %s84, %s85
      %p89 = pneg %p83
      %p90 = scmp.eq.s32.totalorder %s27, 2
      %p91 = por %p89, %p90
      %p92 = scmp.ne.s32.totalorder %s84, %s87
      %p93 = scmp.eq.s32.totalorder %s27, 0
      %p94 = por %p92, %p93
      %p95 = scmp.ne.s32.totalorder %s84, %s87
      %p96 = scmp.eq.s32.totalorder %s32, 2
      %p97 = por %p95, %p96
      %p98 = scmp.ne.s32.totalorder %s87, %s88
      %p99 = scmp.eq.s32.totalorder %s32, 0
      %p100 = por %p98, %p99
      %p101 = scmp.ne.s32.totalorder %s87, %s88
      %p102 = scmp.eq.s32.totalorder %s33, 2
      %p103 = por %p101, %p102
      %p105 = scmp.ne.s32.totalorder %s88, %s104
      %p106 = scmp.eq.s32.totalorder %s33, 0
      %p107 = por %p105, %p106
      %s108 = sld [smem:[#allocation3 + %s27]]
      %s109 = sld [smem:[#allocation3 + %s34]]
      %s110 = ssub.s32 %s108, %s109
      %p111 = scmp.eq.s32.totalorder %s110, 0
      %s113 = sadd.s32 %s112, 1
      %s114 = scalar_select %p111, %s112, %s113
      %p117 = pneg %p111
      %p118 = scmp.eq.s32.totalorder %s27, 2
      %p119 = por %p117, %p118
      %p120 = scmp.ne.s32.totalorder %s112, %s115
      %p121 = scmp.eq.s32.totalorder %s27, 0
      %p122 = por %p120, %p121
      %p123 = scmp.ne.s32.totalorder %s112, %s115
      %p124 = scmp.eq.s32.totalorder %s32, 2
      %p125 = por %p123, %p124
      %p126 = scmp.ne.s32.totalorder %s115, %s116
      %p127 = scmp.eq.s32.totalorder %s32, 0
      %p128 = por %p126, %p127
      %p129 = scmp.ne.s32.totalorder %s115, %s116
      %p130 = scmp.eq.s32.totalorder %s33, 2
      %p131 = por %p129, %p130
      %p133 = scmp.ne.s32.totalorder %s116, %s132
      %p134 = scmp.eq.s32.totalorder %s33, 0
      %p135 = por %p133, %p134
      %s136 = sld [smem:[#allocation3 + %s27]]
      %s137 = sld [smem:[#allocation3 + %s34]]
      %s138 = ssub.s32 %s136, %s137
      %p139 = scmp.eq.s32.totalorder %s138, 0
      %s141 = sadd.s32 %s140, 1
      %s142 = scalar_select %p139, %s140, %s141
      %p145 = pneg %p139
      %p146 = scmp.eq.s32.totalorder %s27, 2
      %p147 = por %p145, %p146
      %p148 = scmp.ne.s32.totalorder %s140, %s143
      %p149 = scmp.eq.s32.totalorder %s27, 0
      %p150 = por %p148, %p149
      %p151 = scmp.ne.s32.totalorder %s140, %s143
      %p152 = scmp.eq.s32.totalorder %s32, 2
      %p153 = por %p151, %p152
      %p154 = scmp.ne.s32.totalorder %s143, %s144
      %p155 = scmp.eq.s32.totalorder %s32, 0
      %p156 = por %p154, %p155
      %p157 = scmp.ne.s32.totalorder %s143, %s144
      %p158 = scmp.eq.s32.totalorder %s33, 2
      %p159 = por %p157, %p158
      %p161 = scmp.ne.s32.totalorder %s144, %s160
      %p162 = scmp.eq.s32.totalorder %s33, 0
      %p163 = por %p161, %p162
      %s164 = sld [smem:[#allocation3 + %s27]]
      %s165 = sld [smem:[#allocation3 + %s34]]
      %s166 = ssub.s32 %s164, %s165
      %p167 = scmp.eq.s32.totalorder %s166, 0
      %s169 = sadd.s32 %s168, 1
      %s170 = scalar_select %p167, %s168, %s169
      %p173 = pneg %p167
      %p174 = scmp.eq.s32.totalorder %s27, 2
      %p175 = por %p173, %p174
      %p176 = scmp.ne.s32.totalorder %s168, %s171
      %p177 = scmp.eq.s32.totalorder %s27, 0
      %p178 = por %p176, %p177
      %p179 = scmp.ne.s32.totalorder %s168, %s171
      %p180 = scmp.eq.s32.totalorder %s32, 2
      %p181 = por %p179, %p180
      %p182 = scmp.ne.s32.totalorder %s171, %s172
      %p183 = scmp.eq.s32.totalorder %s32, 0
      %p184 = por %p182, %p183
      %p185 = scmp.ne.s32.totalorder %s171, %s172
      %p186 = scmp.eq.s32.totalorder %s33, 2
      %p187 = por %p185, %p186
      %p189 = scmp.ne.s32.totalorder %s172, %s188
      %p190 = scmp.eq.s32.totalorder %s33, 0
      %p191 = por %p189, %p190
      %s192 = sld [smem:[#allocation3 + %s27]]
      %s193 = sld [smem:[#allocation3 + %s34]]
      %s194 = ssub.s32 %s192, %s193
      %p195 = scmp.eq.s32.totalorder %s194, 0
      %s197 = sadd.s32 %s196, 1
      %s198 = scalar_select %p195, %s196, %s197
      %p201 = pneg %p195
      %p202 = scmp.eq.s32.totalorder %s27, 2
      %p203 = por %p201, %p202
      %p204 = scmp.ne.s32.totalorder %s196, %s199
      %p205 = scmp.eq.s32.totalorder %s27, 0
      %p206 = por %p204, %p205
      %p207 = scmp.ne.s32.totalorder %s196, %s199
      %p208 = scmp.eq.s32.totalorder %s32, 2
      %p209 = por %p207, %p208
      %p210 = scmp.ne.s32.totalorder %s199, %s200
      %p211 = scmp.eq.s32.totalorder %s32, 0
      %p212 = por %p210, %p211
      %p213 = scmp.ne.s32.totalorder %s199, %s200
      %p214 = scmp.eq.s32.totalorder %s33, 2
      %p215 = por %p213, %p214
      %p217 = scmp.ne.s32.totalorder %s200, %s216
      %p218 = scmp.eq.s32.totalorder %s33, 0
      %p219 = por %p217, %p218
      %s220 = sld [smem:[#allocation3 + %s27]]
      %s221 = sld [smem:[#allocation3 + %s34]]
      %s222 = ssub.s32 %s220, %s221
      %p223 = scmp.eq.s32.totalorder %s222, 0
      %s225 = sadd.s32 %s224, 1
      %s226 = scalar_select %p223, %s224, %s225
      %p229 = pneg %p223
      %p230 = scmp.eq.s32.totalorder %s27, 2
      %p231 = por %p229, %p230
      %p232 = scmp.ne.s32.totalorder %s224, %s227
      %p233 = scmp.eq.s32.totalorder %s27, 0
      %p234 = por %p232, %p233
      %p235 = scmp.ne.s32.totalorder %s224, %s227
      %p236 = scmp.eq.s32.totalorder %s32, 2
      %p237 = por %p235, %p236
      %p238 = scmp.ne.s32.totalorder %s227, %s228
      %p239 = scmp.eq.s32.totalorder %s32, 0
      %p240 = por %p238, %p239
      %p241 = scmp.ne.s32.totalorder %s227, %s228
      %p242 = scmp.eq.s32.totalorder %s33, 2
      %p243 = por %p241, %p242
      %p245 = scmp.ne.s32.totalorder %s228, %s244
      %p246 = scmp.eq.s32.totalorder %s33, 0
      %p247 = por %p245, %p246
      %s248 = sld [smem:[#allocation3 + %s27]]
      %s249 = sld [smem:[#allocation3 + %s34]]
      %s250 = ssub.s32 %s248, %s249
      %p251 = scmp.eq.s32.totalorder %s250, 0
      %s253 = sadd.s32 %s252, 1
      %s254 = scalar_select %p251, %s252, %s253
      %p257 = pneg %p251
      %p258 = scmp.eq.s32.totalorder %s27, 2
      %p259 = por %p257, %p258
      %p260 = scmp.ne.s32.totalorder %s252, %s255
      %p261 = scmp.eq.s32.totalorder %s27, 0
      %p262 = por %p260, %p261
      %p263 = scmp.ne.s32.totalorder %s252, %s255
      %p264 = scmp.eq.s32.totalorder %s32, 2
      %p265 = por %p263, %p264
      %p266 = scmp.ne.s32.totalorder %s255, %s256
      %p267 = scmp.eq.s32.totalorder %s32, 0
      %p268 = por %p266, %p267
      %p269 = scmp.ne.s32.totalorder %s255, %s256
      %p270 = scmp.eq.s32.totalorder %s33, 2
      %p271 = por %p269, %p270
      %p273 = scmp.ne.s32.totalorder %s256, %s272
      %p274 = scmp.eq.s32.totalorder %s33, 0
      %p275 = por %p273, %p274
      %s276 = ssub.s32 %s27, %s34
      %p277 = scmp.eq.s32.totalorder %s276, 0
      %s279 = sadd.s32 %s278, 1
      %s280 = scalar_select %p277, %s278, %s279
      %p283 = pneg %p277
      %p284 = scmp.eq.s32.totalorder %s27, 2
      %p285 = por %p283, %p284
      %p286 = scmp.ne.s32.totalorder %s278, %s281
      %p287 = scmp.eq.s32.totalorder %s27, 0
      %p288 = por %p286, %p287
      %p289 = scmp.ne.s32.totalorder %s278, %s281
      %p290 = scmp.eq.s32.totalorder %s32, 2
      %p291 = por %p289, %p290
      %p292 = scmp.ne.s32.totalorder %s281, %s282
      %p293 = scmp.eq.s32.totalorder %s32, 0
      %p294 = por %p292, %p293
      %p295 = scmp.ne.s32.totalorder %s281, %s282
      %p296 = scmp.eq.s32.totalorder %s33, 2
      %p297 = por %p295, %p296
      %p299 = scmp.ne.s32.totalorder %s282, %s298
      %p300 = scmp.eq.s32.totalorder %s33, 0
      %p301 = por %p299, %p300
      %p302 = scmp.le.s32.totalorder 1, %s27
      %p303 = scmp.lt.s32.totalorder %s27, 4
      %p304 = pnand %p302, %p303
      %p305 = pneg %p304
      // Predicated region
      $region9: #{tpu_custom_call.1} parent=5 // pred_check
        _
      $region10: #{tpu_custom_call.1} parent=5 // pred_check_branch
        %307 = sbr.rel (%p304) target = $region12
      $region11: #{tpu_custom_call.1} parent=5 // pred_region
        %s308 = ssub.s32 %s27, 1
        // Predicated region
        $region13: #{tpu_custom_call.1} parent=11 // pred_check
          %p309 = pneg %p74
        $region14: #{tpu_custom_call.1} parent=11 // pred_check_branch
          %311 = sbr.rel (%p309) target = $region16
        $region15: #{tpu_custom_call.1} parent=11 // pred_region
          %s313 = ssub.s32 3072, 3072
          %314 = vsyncadd [#allocation8], %s313
          %s315 = sshll.u32 [#allocation7], 4
          %s316 = int_to_ptr.vmem [resolvable:$true] %s315
          %321 = dma.hbm_to_vmem [thread:$0]  %s2, 3072, %s316, [#allocation8], 64, 64, 4
        $region16: #{tpu_custom_call.1} parent=11 // pred_fallthru
          _
      $region12: #{tpu_custom_call.1} parent=5 // pred_fallthru
        _
      %p322 = scmp.lt.s32.totalorder %s27, 3
      // Predicated region
      $region17: #{tpu_custom_call.1} parent=5 // pred_check
        %p323 = pneg %p322
      $region18: #{tpu_custom_call.1} parent=5 // pred_check_branch
        %325 = sbr.rel (%p323) target = $region20
      $region19: #{tpu_custom_call.1} parent=5 // pred_region
        // Predicated region
        $region21: #{tpu_custom_call.1} parent=19 // pred_check
          %p326 = pneg %p47
        $region22: #{tpu_custom_call.1} parent=19 // pred_check_branch
          %328 = sbr.rel (%p326) target = $region24
        $region23: #{tpu_custom_call.1} parent=19 // pred_region
          %s329 = sand.u32 %s27, 1
          %s330 = scalar_lea.sflag [#allocation5], %s329
          %s331 = sand.u32 %s37, 1
          %s332 = smul.addr %s331, 48
          %s333 = scalar_lea.vmem [#allocation4], %s332
          %s334 = smul.u32 4, %s27
          %s336 = ssub.s32 768, 768
          %337 = vsyncadd %s330, %s336
          %s338 = smul.addr %s334, 3
          %s339 = smul.addr %s338, 64
          %s340 = scalar_lea.hbm %s1, %s339
          %s341 = sshll.u32 %s333, 4
          %s342 = int_to_ptr.vmem [resolvable:$true] %s341
          %347 = dma.hbm_to_vmem [thread:$0]  %s340, 768, %s342, %s330, 192, 192, 12
        $region24: #{tpu_custom_call.1} parent=19 // pred_fallthru
          _
        // Predicated region
        $region25: #{tpu_custom_call.1} parent=19 // pred_check
          %p348 = pneg %p94
        $region26: #{tpu_custom_call.1} parent=19 // pred_check_branch
          %350 = sbr.rel (%p348) target = $region28
        $region27: #{tpu_custom_call.1} parent=19 // pred_region
          %s351 = sand.u32 %s27, 1
          %s352 = scalar_lea.sflag [#allocation5], %s351
          %s353 = sand.u32 %s84, 1
          %s354 = smul.addr %s353, 32
          %s355 = scalar_lea.vmem [#allocation9], %s354
          %s356 = smul.u32 4, %s27
          %s358 = ssub.s32 512, 512
          %359 = vsyncadd %s352, %s358
          %s360 = smul.addr %s356, 128
          %s361 = scalar_lea.hbm %s3, %s360
          %s362 = sshll.u32 %s355, 4
          %s363 = int_to_ptr.vmem [resolvable:$true] %s362
          %368 = dma.hbm_to_vmem [thread:$0]  %s361, 512, %s363, %s352, 128, 128, 8
        $region28: #{tpu_custom_call.1} parent=19 // pred_fallthru
          _
        // Predicated region
        $region29: #{tpu_custom_call.1} parent=19 // pred_check
          %p369 = pneg %p122
        $region30: #{tpu_custom_call.1} parent=19 // pred_check_branch
          %371 = sbr.rel (%p369) target = $region32
        $region31: #{tpu_custom_call.1} parent=19 // pred_region
          %s372 = sand.u32 %s27, 1
          %s373 = scalar_lea.sflag [#allocation5], %s372
          %s374 = sand.u32 %s112, 1
          %s375 = smul.addr %s374, 64
          %s376 = scalar_lea.vmem [#allocation10], %s375
          %s377 = sld [smem:[#allocation3 + %s27]]
          %s379 = ssub.s32 1024, 1024
          %380 = vsyncadd %s373, %s379
          %s381 = smul.addr %s377, 16
          %s382 = smul.addr %s381, 64
          %s383 = scalar_lea.hbm %s4, %s382
          %s384 = sshll.u32 %s376, 4
          %s385 = int_to_ptr.vmem [resolvable:$true] %s384
          %390 = dma.hbm_to_vmem [thread:$0]  %s383, 1024, %s385, %s373, 64, 64, 4
        $region32: #{tpu_custom_call.1} parent=19 // pred_fallthru
          _
        // Predicated region
        $region33: #{tpu_custom_call.1} parent=19 // pred_check
          %p391 = pneg %p150
        $region34: #{tpu_custom_call.1} parent=19 // pred_check_branch
          %393 = sbr.rel (%p391) target = $region36
        $region35: #{tpu_custom_call.1} parent=19 // pred_region
          %s394 = sld [smem:[#allocation3 + %s27]]
          %p395 = scmp.lt.s32.totalorder %s394, 2
          %s396 = scalar_select %p395, %s394, 2
          %s397 = scalar_lea.vmem %s5, %s396
          %s398 = sld [smem:[#allocation3 + %s27]]
        $region36: #{tpu_custom_call.1} parent=19 // pred_fallthru
          _
        // Predicated region
        $region37: #{tpu_custom_call.1} parent=19 // pred_check
          %p399 = pneg %p178
        $region38: #{tpu_custom_call.1} parent=19 // pred_check_branch
          %401 = sbr.rel (%p399) target = $region40
        $region39: #{tpu_custom_call.1} parent=19 // pred_region
          %s402 = sand.u32 %s27, 1
          %s403 = scalar_lea.sflag [#allocation5], %s402
          %s404 = sand.u32 %s168, 1
          %s405 = smul.addr %s404, 64
          %s406 = scalar_lea.vmem [#allocation11], %s405
          %s407 = sld [smem:[#allocation3 + %s27]]
          %s409 = ssub.s32 1024, 1024
          %410 = vsyncadd %s403, %s409
          %s411 = smul.addr %s407, 16
          %s412 = smul.addr %s411, 64
          %s413 = scalar_lea.hbm %s6, %s412
          %s414 = sshll.u32 %s406, 4
          %s415 = int_to_ptr.vmem [resolvable:$true] %s414
          %420 = dma.hbm_to_vmem [thread:$0]  %s413, 1024, %s415, %s403, 64, 64, 4
        $region40: #{tpu_custom_call.1} parent=19 // pred_fallthru
          _
        // Predicated region
        $region41: #{tpu_custom_call.1} parent=19 // pred_check
          %p421 = pneg %p206
        $region42: #{tpu_custom_call.1} parent=19 // pred_check_branch
          %423 = sbr.rel (%p421) target = $region44
        $region43: #{tpu_custom_call.1} parent=19 // pred_region
          %s424 = sld [smem:[#allocation3 + %s27]]
          %p425 = scmp.lt.s32.totalorder %s424, 2
          %s426 = scalar_select %p425, %s424, 2
          %s427 = scalar_lea.vmem %s7, %s426
          %s428 = sld [smem:[#allocation3 + %s27]]
        $region44: #{tpu_custom_call.1} parent=19 // pred_fallthru
          _
        // Predicated region
        $region45: #{tpu_custom_call.1} parent=19 // pred_check
          %p429 = pneg %p234
        $region46: #{tpu_custom_call.1} parent=19 // pred_check_branch
          %431 = sbr.rel (%p429) target = $region48
        $region47: #{tpu_custom_call.1} parent=19 // pred_region
          %s432 = sand.u32 %s27, 1
          %s433 = scalar_lea.sflag [#allocation5], %s432
          %s434 = sand.u32 %s224, 1
          %s435 = smul.addr %s434, 64
          %s436 = scalar_lea.vmem [#allocation12], %s435
          %s437 = sld [smem:[#allocation3 + %s27]]
          %s439 = ssub.s32 1024, 1024
          %440 = vsyncadd %s433, %s439
          %s441 = smul.addr %s437, 16
          %s442 = smul.addr %s441, 64
          %s443 = scalar_lea.hbm %s8, %s442
          %s444 = sshll.u32 %s436, 4
          %s445 = int_to_ptr.vmem [resolvable:$true] %s444
          %450 = dma.hbm_to_vmem [thread:$0]  %s443, 1024, %s445, %s433, 64, 64, 4
        $region48: #{tpu_custom_call.1} parent=19 // pred_fallthru
          _
        // Predicated region
        $region49: #{tpu_custom_call.1} parent=19 // pred_check
          %p451 = pneg %p262
        $region50: #{tpu_custom_call.1} parent=19 // pred_check_branch
          %453 = sbr.rel (%p451) target = $region52
        $region51: #{tpu_custom_call.1} parent=19 // pred_region
          %s454 = sld [smem:[#allocation3 + %s27]]
          %p455 = scmp.lt.s32.totalorder %s454, 2
          %s456 = scalar_select %p455, %s454, 2
          %s457 = scalar_lea.vmem %s9, %s456
          %s458 = sld [smem:[#allocation3 + %s27]]
        $region52: #{tpu_custom_call.1} parent=19 // pred_fallthru
          _
      $region20: #{tpu_custom_call.1} parent=5 // pred_fallthru
        _
      %p459 = scmp.le.s32.totalorder 1, %s27
      %p460 = scmp.lt.s32.totalorder %s27, 4
      %p461 = pnand %p459, %p460
      %p462 = pneg %p461
      // Predicated region
      $region53: #{tpu_custom_call.1} parent=5 // pred_check
        _
      $region54: #{tpu_custom_call.1} parent=5 // pred_check_branch
        %464 = sbr.rel (%p461) target = $region56
      $region55: #{tpu_custom_call.1} parent=5 // pred_region
        %s465 = ssub.s32 %s27, 1
        %s466 = sand.u32 %s32, 1
        %s467 = scalar_lea.sflag [#allocation5], %s466
        %s468 = sand.u32 %s40, 1
        %s469 = smul.addr %s468, 48
        %s470 = scalar_lea.vmem [#allocation4], %s469
        // Predicated region
        $region57: #{tpu_custom_call.1} parent=55 // pred_check
          %p471 = pneg %p53
        $region58: #{tpu_custom_call.1} parent=55 // pred_check_branch
          %473 = sbr.rel (%p471) target = $region60
        $region59: #{tpu_custom_call.1} parent=55 // pred_region
          %474 = dma.done %s467, 768
        $region60: #{tpu_custom_call.1} parent=55 // pred_fallthru
          _
        // Predicated region
        $region61: #{tpu_custom_call.1} parent=55 // pred_check
          %p475 = pneg %p74
        $region62: #{tpu_custom_call.1} parent=55 // pred_check_branch
          %477 = sbr.rel (%p475) target = $region64
        $region63: #{tpu_custom_call.1} parent=55 // pred_region
          %478 = dma.done [#allocation8], 3072
        $region64: #{tpu_custom_call.1} parent=55 // pred_fallthru
          _
        %s479 = sand.u32 %s32, 1
        %s480 = scalar_lea.sflag [#allocation5], %s479
        %s481 = sand.u32 %s87, 1
        %s482 = smul.addr %s481, 32
        %s483 = scalar_lea.vmem [#allocation9], %s482
        // Predicated region
        $region65: #{tpu_custom_call.1} parent=55 // pred_check
          %p484 = pneg %p100
        $region66: #{tpu_custom_call.1} parent=55 // pred_check_branch
          %486 = sbr.rel (%p484) target = $region68
        $region67: #{tpu_custom_call.1} parent=55 // pred_region
          %487 = dma.done %s480, 512
        $region68: #{tpu_custom_call.1} parent=55 // pred_fallthru
          _
        %s488 = sand.u32 %s32, 1
        %s489 = scalar_lea.sflag [#allocation5], %s488
        %s490 = sand.u32 %s115, 1
        %s491 = smul.addr %s490, 64
        %s492 = scalar_lea.vmem [#allocation10], %s491
        // Predicated region
        $region69: #{tpu_custom_call.1} parent=55 // pred_check
          %p493 = pneg %p128
        $region70: #{tpu_custom_call.1} parent=55 // pred_check_branch
          %495 = sbr.rel (%p493) target = $region72
        $region71: #{tpu_custom_call.1} parent=55 // pred_region
          %496 = dma.done %s489, 1024
        $region72: #{tpu_custom_call.1} parent=55 // pred_fallthru
          _
        %s497 = sand.u32 %s32, 1
        %s498 = scalar_lea.sflag [#allocation5], %s497
        %s499 = sand.u32 %s171, 1
        %s500 = smul.addr %s499, 64
        %s501 = scalar_lea.vmem [#allocation11], %s500
        // Predicated region
        $region73: #{tpu_custom_call.1} parent=55 // pred_check
          %p502 = pneg %p184
        $region74: #{tpu_custom_call.1} parent=55 // pred_check_branch
          %504 = sbr.rel (%p502) target = $region76
        $region75: #{tpu_custom_call.1} parent=55 // pred_region
          %505 = dma.done %s498, 1024
        $region76: #{tpu_custom_call.1} parent=55 // pred_fallthru
          _
        %s506 = sand.u32 %s32, 1
        %s507 = scalar_lea.sflag [#allocation5], %s506
        %s508 = sand.u32 %s227, 1
        %s509 = smul.addr %s508, 64
        %s510 = scalar_lea.vmem [#allocation12], %s509
        // Predicated region
        $region77: #{tpu_custom_call.1} parent=55 // pred_check
          %p511 = pneg %p240
        $region78: #{tpu_custom_call.1} parent=55 // pred_check_branch
          %513 = sbr.rel (%p511) target = $region80
        $region79: #{tpu_custom_call.1} parent=55 // pred_region
          %514 = dma.done %s507, 1024
        $region80: #{tpu_custom_call.1} parent=55 // pred_fallthru
          _
        %s515 = sand.u32 %s32, 1
        %s516 = scalar_lea.sflag [#allocation5], %s515
        %s517 = sand.u32 %s40, 1
        %s518 = smul.addr %s517, 48
        %s519 = scalar_lea.vmem [#allocation4], %s518
        %p520 = pneg %p53
        %p521 = pneg %p50
        %p522 = pneg %p74
        %p523 = pneg %p71
        %s524 = sand.u32 %s32, 1
        %s525 = scalar_lea.sflag [#allocation5], %s524
        %s526 = sand.u32 %s87, 1
        %s527 = smul.addr %s526, 32
        %s528 = scalar_lea.vmem [#allocation9], %s527
        %p529 = pneg %p100
        %p530 = pneg %p97
        %s531 = sand.u32 %s32, 1
        %s532 = scalar_lea.sflag [#allocation5], %s531
        %s533 = sand.u32 %s115, 1
        %s534 = smul.addr %s533, 64
        %s535 = scalar_lea.vmem [#allocation10], %s534
        %p536 = pneg %p128
        %p537 = pneg %p125
        %s538 = sld [smem:[#allocation3 + %s32]]
        %p539 = scmp.lt.s32.totalorder %s538, 2
        %s540 = scalar_select %p539, %s538, 2
        %s541 = scalar_lea.vmem %s5, %s540
        %p542 = pneg %p156
        %p543 = pneg %p153
        %s544 = sand.u32 %s32, 1
        %s545 = scalar_lea.sflag [#allocation5], %s544
        %s546 = sand.u32 %s171, 1
        %s547 = smul.addr %s546, 64
        %s548 = scalar_lea.vmem [#allocation11], %s547
        %p549 = pneg %p184
        %p550 = pneg %p181
        %s551 = sld [smem:[#allocation3 + %s32]]
        %p552 = scmp.lt.s32.totalorder %s551, 2
        %s553 = scalar_select %p552, %s551, 2
        %s554 = scalar_lea.vmem %s7, %s553
        %p555 = pneg %p212
        %p556 = pneg %p209
        %s557 = sand.u32 %s32, 1
        %s558 = scalar_lea.sflag [#allocation5], %s557
        %s559 = sand.u32 %s227, 1
        %s560 = smul.addr %s559, 64
        %s561 = scalar_lea.vmem [#allocation12], %s560
        %p562 = pneg %p240
        %p563 = pneg %p237
        %s564 = sld [smem:[#allocation3 + %s32]]
        %p565 = scmp.lt.s32.totalorder %s564, 2
        %s566 = scalar_select %p565, %s564, 2
        %s567 = scalar_lea.vmem %s9, %s566
        %p568 = pneg %p268
        %p569 = pneg %p265
        %p570 = pneg %p294
        %p571 = pneg %p291
        %s572 = sand.u32 %s281, 1
        %s573 = scalar_lea.sflag [#allocation6], %s572
        %s574 = sand.u32 %s281, 1
        %s575 = smul.addr %s574, 32
        %s576 = scalar_lea.vmem [#allocation13], %s575
        %s577 = smul.u32 4, %s32
        %s578 = smul.u32 4, %s32
        %s579 = sld [smem:[#allocation3 + %s32]]
        %s580 = sld [smem:[#allocation3 + %s32]]
        %p581 = scmp.lt.s32.totalorder %s580, 2
        %s582 = scalar_select %p581, %s580, 2
        %s583 = scalar_lea.vmem %s5, %s582
        %s584 = sld [smem:[#allocation3 + %s32]]
        %s585 = sld [smem:[#allocation3 + %s32]]
        %s586 = sld [smem:[#allocation3 + %s32]]
        %p587 = scmp.lt.s32.totalorder %s586, 2
        %s588 = scalar_select %p587, %s586, 2
        %s589 = scalar_lea.vmem %s7, %s588
        %s590 = sld [smem:[#allocation3 + %s32]]
        %s591 = sld [smem:[#allocation3 + %s32]]
        %s592 = sld [smem:[#allocation3 + %s32]]
        %p593 = scmp.lt.s32.totalorder %s592, 2
        %s594 = scalar_select %p593, %s592, 2
        %s595 = scalar_lea.vmem %s9, %s594
        %s596 = sld [smem:[#allocation3 + %s32]]
        %s597 = smul.u32 4, %s32
        %v599 = vld [vmem:[%s470] sm:$0xff]
        %v600 = vld [vmem:[%s470 + $0x8] sm:$0xf]
        %v601 = vld [vmem:[%s470 + $0xc] sm:$0xff]
        %v602 = vld [vmem:[%s470 + $0x14] sm:$0xf]
        %v603 = vld [vmem:[%s470 + $0x18] sm:$0xff]
        %v604 = vld [vmem:[%s470 + $0x20] sm:$0xf]
        %v605 = vld [vmem:[%s470 + $0x24] sm:$0xff]
        %v606 = vld [vmem:[%s470 + $0x2c] sm:$0xf]
        %v607 = vld [vmem:[#allocation7] sm:$0xf]
        %v608 = vld [vmem:[#allocation7 + $0x4] sm:$0xf]
        %v609 = vld [vmem:[#allocation7 + $0x8] sm:$0xf]
        %v610 = vld [vmem:[#allocation7 + $0xc] sm:$0xf]
        %v611 = vld [vmem:[#allocation7 + $0x10] sm:$0xf]
        %v612 = vld [vmem:[#allocation7 + $0x14] sm:$0xf]
        %v613 = vld [vmem:[#allocation7 + $0x18] sm:$0xf]
        %v614 = vld [vmem:[#allocation7 + $0x1c] sm:$0xf]
        %v615 = vld [vmem:[#allocation7 + $0x20] sm:$0xf]
        %v616 = vld [vmem:[#allocation7 + $0x24] sm:$0xf]
        %v617 = vld [vmem:[#allocation7 + $0x28] sm:$0xf]
        %v618 = vld [vmem:[#allocation7 + $0x2c] sm:$0xf]
        %v619 = vld [vmem:[#allocation7 + $0x30] sm:$0xf]
        %v620 = vld [vmem:[#allocation7 + $0x34] sm:$0xf]
        %v621 = vld [vmem:[#allocation7 + $0x38] sm:$0xf]
        %v622 = vld [vmem:[#allocation7 + $0x3c] sm:$0xf]
        %v623 = vld [vmem:[#allocation7 + $0x40] sm:$0xf]
        %v624 = vld [vmem:[#allocation7 + $0x44] sm:$0xf]
        %v625 = vld [vmem:[#allocation7 + $0x48] sm:$0xf]
        %v626 = vld [vmem:[#allocation7 + $0x4c] sm:$0xf]
        %v627 = vld [vmem:[#allocation7 + $0x50] sm:$0xf]
        %v628 = vld [vmem:[#allocation7 + $0x54] sm:$0xf]
        %v629 = vld [vmem:[#allocation7 + $0x58] sm:$0xf]
        %v630 = vld [vmem:[#allocation7 + $0x5c] sm:$0xf]
        %v631 = vld [vmem:[#allocation7 + $0x60] sm:$0xf]
        %v632 = vld [vmem:[#allocation7 + $0x64] sm:$0xf]
        %v633 = vld [vmem:[#allocation7 + $0x68] sm:$0xf]
        %v634 = vld [vmem:[#allocation7 + $0x6c] sm:$0xf]
        %v635 = vld [vmem:[#allocation7 + $0x70] sm:$0xf]
        %v636 = vld [vmem:[#allocation7 + $0x74] sm:$0xf]
        %v637 = vld [vmem:[#allocation7 + $0x78] sm:$0xf]
        %v638 = vld [vmem:[#allocation7 + $0x7c] sm:$0xf]
        %v639 = vld [vmem:[#allocation7 + $0x80] sm:$0xf]
        %v640 = vld [vmem:[#allocation7 + $0x84] sm:$0xf]
        %v641 = vld [vmem:[#allocation7 + $0x88] sm:$0xf]
        %v642 = vld [vmem:[#allocation7 + $0x8c] sm:$0xf]
        %v643 = vld [vmem:[#allocation7 + $0x90] sm:$0xf]
        %v644 = vld [vmem:[#allocation7 + $0x94] sm:$0xf]
        %v645 = vld [vmem:[#allocation7 + $0x98] sm:$0xf]
        %v646 = vld [vmem:[#allocation7 + $0x9c] sm:$0xf]
        %v647 = vld [vmem:[#allocation7 + $0xa0] sm:$0xf]
        %v648 = vld [vmem:[#allocation7 + $0xa4] sm:$0xf]
        %v649 = vld [vmem:[#allocation7 + $0xa8] sm:$0xf]
        %v650 = vld [vmem:[#allocation7 + $0xac] sm:$0xf]
        %v651 = vld [vmem:[#allocation7 + $0xb0] sm:$0xf]
        %v652 = vld [vmem:[#allocation7 + $0xb4] sm:$0xf]
        %v653 = vld [vmem:[#allocation7 + $0xb8] sm:$0xf]
        %v654 = vld [vmem:[#allocation7 + $0xbc] sm:$0xf]
        %v655 = vld [vmem:[%s483] sm:$0xff]
        %v656 = vld [vmem:[%s483 + $0x8] sm:$0xff]
        %v657 = vld [vmem:[%s483 + $0x10] sm:$0xff]
        %v658 = vld [vmem:[%s483 + $0x18] sm:$0xff]
        %v667 = vunpack.c.l.b16 %v599
        %v668 = vunpack.c.h.b16 %v599
        %v669 = vunpack.c.l.b16 %v600
        %v670 = vunpack.c.l.b16 %v601
        %v671 = vunpack.c.h.b16 %v601
        %v672 = vunpack.c.l.b16 %v602
        %v673 = vunpack.c.l.b16 %v603
        %v674 = vunpack.c.h.b16 %v603
        %v675 = vunpack.c.l.b16 %v604
        %v676 = vunpack.c.l.b16 %v605
        %v677 = vunpack.c.h.b16 %v605
        %v678 = vunpack.c.l.b16 %v606
        %v679 = vpack.c.b16 %v670, %v667
        %v680 = vpack.c.b16 %v671, %v668
        %v681 = vpack.c.b16 %v672, %v669
        %v682 = vpack.c.b16 %v676, %v673
        %v683 = vpack.c.b16 %v677, %v674
        %v684 = vpack.c.b16 %v678, %v675
        %v739 = vunpack.c.l.b16 %v607
        %v740 = vunpack.c.l.b16 %v608
        %v741 = vunpack.c.l.b16 %v609
        %v742 = vunpack.c.l.b16 %v610
        %v743 = vunpack.c.l.b16 %v611
        %v744 = vunpack.c.l.b16 %v612
        %v745 = vunpack.c.l.b16 %v613
        %v746 = vunpack.c.l.b16 %v614
        %v747 = vunpack.c.l.b16 %v615
        %v748 = vunpack.c.l.b16 %v616
        %v749 = vunpack.c.l.b16 %v617
        %v750 = vunpack.c.l.b16 %v618
        %v751 = vunpack.c.l.b16 %v619
        %v752 = vunpack.c.l.b16 %v620
        %v753 = vunpack.c.l.b16 %v621
        %v754 = vunpack.c.l.b16 %v622
        %v755 = vunpack.c.l.b16 %v623
        %v756 = vunpack.c.l.b16 %v624
        %v757 = vunpack.c.l.b16 %v625
        %v758 = vunpack.c.l.b16 %v626
        %v759 = vunpack.c.l.b16 %v627
        %v760 = vunpack.c.l.b16 %v628
        %v761 = vunpack.c.l.b16 %v629
        %v762 = vunpack.c.l.b16 %v630
        %v763 = vunpack.c.l.b16 %v631
        %v764 = vunpack.c.l.b16 %v632
        %v765 = vunpack.c.l.b16 %v633
        %v766 = vunpack.c.l.b16 %v634
        %v767 = vunpack.c.l.b16 %v635
        %v768 = vunpack.c.l.b16 %v636
        %v769 = vunpack.c.l.b16 %v637
        %v770 = vunpack.c.l.b16 %v638
        %v771 = vunpack.c.l.b16 %v639
        %v772 = vunpack.c.l.b16 %v640
        %v773 = vunpack.c.l.b16 %v641
        %v774 = vunpack.c.l.b16 %v642
        %v775 = vunpack.c.l.b16 %v643
        %v776 = vunpack.c.l.b16 %v644
        %v777 = vunpack.c.l.b16 %v645
        %v778 = vunpack.c.l.b16 %v646
        %v779 = vunpack.c.l.b16 %v647
        %v780 = vunpack.c.l.b16 %v648
        %v781 = vunpack.c.l.b16 %v649
        %v782 = vunpack.c.l.b16 %v650
        %v783 = vunpack.c.l.b16 %v651
        %v784 = vunpack.c.l.b16 %v652
        %v785 = vunpack.c.l.b16 %v653
        %v786 = vunpack.c.l.b16 %v654
        %v787 = vpack.c.b16 %v740, %v739
        %v788 = vpack.c.b16 %v742, %v741
        %v789 = vpack.c.b16 %v744, %v743
        %v790 = vpack.c.b16 %v746, %v745
        %v791 = vpack.c.b16 %v748, %v747
        %v792 = vpack.c.b16 %v750, %v749
        %v793 = vpack.c.b16 %v752, %v751
        %v794 = vpack.c.b16 %v754, %v753
        %v795 = vpack.c.b16 %v756, %v755
        %v796 = vpack.c.b16 %v758, %v757
        %v797 = vpack.c.b16 %v760, %v759
        %v798 = vpack.c.b16 %v762, %v761
        %v799 = vpack.c.b16 %v764, %v763
        %v800 = vpack.c.b16 %v766, %v765
        %v801 = vpack.c.b16 %v768, %v767
        %v802 = vpack.c.b16 %v770, %v769
        %v803 = vpack.c.b16 %v772, %v771
        %v804 = vpack.c.b16 %v774, %v773
        %v805 = vpack.c.b16 %v776, %v775
        %v806 = vpack.c.b16 %v778, %v777
        %v807 = vpack.c.b16 %v780, %v779
        %v808 = vpack.c.b16 %v782, %v781
        %v809 = vpack.c.b16 %v784, %v783
        %v810 = vpack.c.b16 %v786, %v785
        %835 = vmatprep.subr.bf16.mxu0 0
        %836 = vmatpush1.bf16.msra.mxu0 %v787
        %837 = vmatprep.subr.bf16.mxu0 0
        %838 = vmatpush1.bf16.msra.mxu0 %v788
        %839 = vmatprep.subr.bf16.mxu0 0
        %840 = vmatpush1.bf16.msra.mxu0 %v789
        %841 = vmatprep.subr.bf16.mxu0 0
        %842 = vmatpush1.bf16.msra.mxu0 %v790
        %843 = vmatprep.subr.bf16.mxu0 0
        %844 = vmatpush1.bf16.msra.mxu0 %v791
        %845 = vmatprep.subr.bf16.mxu0 0
        %846 = vmatpush1.bf16.msra.mxu0 %v792
        %847 = vmatprep.subr.bf16.mxu0 0
        %848 = vmatpush1.bf16.msra.mxu0 %v793
        %849 = vmatprep.subr.bf16.mxu0 0
        %850 = vmatpush1.bf16.msra.mxu0 %v794
        %851 = vmatprep.subr.bf16.mxu0 0
        %852 = vmatpush1.bf16.msra.mxu0 %v795
        %853 = vmatprep.subr.bf16.mxu0 0
        %854 = vmatpush1.bf16.msra.mxu0 %v796
        %855 = vmatprep.subr.bf16.mxu0 0
        %856 = vmatpush1.bf16.msra.mxu0 %v797
        %857 = vmatprep.subr.bf16.mxu0 0
        %858 = vmatpush1.bf16.msra.mxu0 %v798
        %859 = vmatprep.subr.bf16.mxu0 0
        %860 = vmatpush1.bf16.msra.mxu0 %v799
        %861 = vmatprep.subr.bf16.mxu0 0
        %862 = vmatpush1.bf16.msra.mxu0 %v800
        %863 = vmatprep.subr.bf16.mxu0 0
        %864 = vmatpush1.bf16.msra.mxu0 %v801
        %865 = vmatprep.subr.bf16.mxu0 0
        %866 = vmatpush1.bf16.msra.mxu0 %v802
        %867 = vmatprep.mubr.bf16.mxu0 %v680
        %868 = vmatmul.mubr.bf16.gmra.mrb[0].mxu0 %v679
        %v869 = vpop.f32.mrb[0].mxu0
        %v870 = vadd.f32 %v655, %v869
        %v871 = vpop.f32.mrb[0].mxu0
        %v872 = vpop.f32.mrb[0].mxu0
        %v873 = vadd.f32 %v656, %v872
        %v874 = vpop.f32.mrb[0].mxu0
        %875 = vmatprep.mubr.bf16.mxu0 %v683
        %876 = vmatmul.mubr.bf16.gmra.mrb[0].mxu0 %v682
        %v877 = vpop.f32.mrb[0].mxu0
        %v878 = vadd.f32 %v657, %v877
        %v879 = vpop.f32.mrb[0].mxu0
        %v880 = vpop.f32.mrb[0].mxu0
        %v881 = vadd.f32 %v658, %v880
        %v882 = vpop.f32.mrb[0].mxu0
        %883 = vdwg.mxu0
        %884 = vmatprep.subr.bf16.mxu0 0
        %885 = vmatpush1.bf16.msra.mxu0 %v803
        %886 = vmatprep.subr.bf16.mxu0 0
        %887 = vmatpush1.bf16.msra.mxu0 %v804
        %888 = vmatprep.subr.bf16.mxu0 0
        %889 = vmatpush1.bf16.msra.mxu0 %v805
        %890 = vmatprep.subr.bf16.mxu0 0
        %891 = vmatpush1.bf16.msra.mxu0 %v806
        %892 = vmatprep.subr.bf16.mxu0 0
        %893 = vmatpush1.bf16.msra.mxu0 %v807
        %894 = vmatprep.subr.bf16.mxu0 0
        %895 = vmatpush1.bf16.msra.mxu0 %v808
        %896 = vmatprep.subr.bf16.mxu0 0
        %897 = vmatpush1.bf16.msra.mxu0 %v809
        %898 = vmatprep.subr.bf16.mxu0 0
        %899 = vmatpush1.bf16.msra.mxu0 %v810
        %900 = vmatprep.subr.bf16.mxu0 0
        %901 = vmatpush1.bf16.msra.mxu0 0
        %902 = vmatprep.subr.bf16.mxu0 0
        %903 = vmatpush1.bf16.msra.mxu0 0
        %904 = vmatprep.subr.bf16.mxu0 0
        %905 = vmatpush1.bf16.msra.mxu0 0
        %906 = vmatprep.subr.bf16.mxu0 0
        %907 = vmatpush1.bf16.msra.mxu0 0
        %908 = vmatprep.subr.bf16.mxu0 0
        %909 = vmatpush1.bf16.msra.mxu0 0
        %910 = vmatprep.subr.bf16.mxu0 0
        %911 = vmatpush1.bf16.msra.mxu0 0
        %912 = vmatprep.subr.bf16.mxu0 0
        %913 = vmatpush1.bf16.msra.mxu0 0
        %914 = vmatprep.subr.bf16.mxu0 0
        %915 = vmatpush1.bf16.msra.mxu0 0
        %916 = vmatprep.mubr.bf16.mxu0 0
        %917 = vmatmul.mubr.bf16.gmra.mrb[0].mxu0 %v681
        %v918 = vpop.f32.mrb[0].mxu0
        %v919 = vadd.f32 %v870, %v918
        %v920 = vpop.f32.mrb[0].mxu0
        %v921 = vpop.f32.mrb[0].mxu0
        %v922 = vadd.f32 %v873, %v921
        %v923 = vpop.f32.mrb[0].mxu0
        %924 = vmatprep.mubr.bf16.mxu0 0
        %925 = vmatmul.mubr.bf16.gmra.mrb[0].mxu0 %v684
        %v926 = vpop.f32.mrb[0].mxu0
        %v927 = vadd.f32 %v878, %v926
        %v928 = vpop.f32.mrb[0].mxu0
        %v929 = vpop.f32.mrb[0].mxu0
        %v930 = vadd.f32 %v881, %v929
        %v931 = vpop.f32.mrb[0].mxu0
        %932 = vdwg.mxu0
        %v933 = vpack.c.bf16 %v922, %v919
        %v934 = vpack.c.bf16 %v930, %v927
        %v935 = vld [vmem:[%s492] sm:$0xf]
        %v936 = vld [vmem:[%s492 + $0x4] sm:$0xf]
        %v937 = vld [vmem:[%s492 + $0x8] sm:$0xf]
        %v938 = vld [vmem:[%s492 + $0xc] sm:$0xf]
        %v939 = vld [vmem:[%s492 + $0x10] sm:$0xf]
        %v940 = vld [vmem:[%s492 + $0x14] sm:$0xf]
        %v941 = vld [vmem:[%s492 + $0x18] sm:$0xf]
        %v942 = vld [vmem:[%s492 + $0x1c] sm:$0xf]
        %v943 = vld [vmem:[%s492 + $0x20] sm:$0xf]
        %v944 = vld [vmem:[%s492 + $0x24] sm:$0xf]
        %v945 = vld [vmem:[%s492 + $0x28] sm:$0xf]
        %v946 = vld [vmem:[%s492 + $0x2c] sm:$0xf]
        %v947 = vld [vmem:[%s492 + $0x30] sm:$0xf]
        %v948 = vld [vmem:[%s492 + $0x34] sm:$0xf]
        %v949 = vld [vmem:[%s492 + $0x38] sm:$0xf]
        %v950 = vld [vmem:[%s492 + $0x3c] sm:$0xf]
        %v951 = vld [vmem:[%s583] sm:$0x1]
        %v953 = vlaneseq
        %v954 = vshrl.u32 %v953, 7
        %v955 = vsub.s32 0, %v954
        %v956 = vrot.slane %v951, %v955
        %v974 = vunpack.c.l.b16 %v935
        %v975 = vunpack.c.l.b16 %v936
        %v976 = vunpack.c.l.b16 %v937
        %v977 = vunpack.c.l.b16 %v938
        %v978 = vunpack.c.l.b16 %v939
        %v979 = vunpack.c.l.b16 %v940
        %v980 = vunpack.c.l.b16 %v941
        %v981 = vunpack.c.l.b16 %v942
        %v982 = vunpack.c.l.b16 %v943
        %v983 = vunpack.c.l.b16 %v944
        %v984 = vunpack.c.l.b16 %v945
        %v985 = vunpack.c.l.b16 %v946
        %v986 = vunpack.c.l.b16 %v947
        %v987 = vunpack.c.l.b16 %v948
        %v988 = vunpack.c.l.b16 %v949
        %v989 = vunpack.c.l.b16 %v950
        %v990 = vpack.c.b16 %v975, %v974
        %v991 = vpack.c.b16 %v977, %v976
        %v992 = vpack.c.b16 %v979, %v978
        %v993 = vpack.c.b16 %v981, %v980
        %v994 = vpack.c.b16 %v983, %v982
        %v995 = vpack.c.b16 %v985, %v984
        %v996 = vpack.c.b16 %v987, %v986
        %v997 = vpack.c.b16 %v989, %v988
        %1006 = vmatprep.subr.bf16.mxu0 0
        %1007 = vmatpush1.bf16.msra.mxu0 %v990
        %1008 = vmatprep.subr.bf16.mxu0 0
        %1009 = vmatpush1.bf16.msra.mxu0 %v991
        %1010 = vmatprep.subr.bf16.mxu0 0
        %1011 = vmatpush1.bf16.msra.mxu0 %v992
        %1012 = vmatprep.subr.bf16.mxu0 0
        %1013 = vmatpush1.bf16.msra.mxu0 %v993
        %1014 = vmatprep.subr.bf16.mxu0 0
        %1015 = vmatpush1.bf16.msra.mxu0 %v994
        %1016 = vmatprep.subr.bf16.mxu0 0
        %1017 = vmatpush1.bf16.msra.mxu0 %v995
        %1018 = vmatprep.subr.bf16.mxu0 0
        %1019 = vmatpush1.bf16.msra.mxu0 %v996
        %1020 = vmatprep.subr.bf16.mxu0 0
        %1021 = vmatpush1.bf16.msra.mxu0 %v997
        %1022 = vmatprep.subr.bf16.mxu0 0
        %1023 = vmatpush1.bf16.msra.mxu0 0
        %1024 = vmatprep.subr.bf16.mxu0 0
        %1025 = vmatpush1.bf16.msra.mxu0 0
        %1026 = vmatprep.subr.bf16.mxu0 0
        %1027 = vmatpush1.bf16.msra.mxu0 0
        %1028 = vmatprep.subr.bf16.mxu0 0
        %1029 = vmatpush1.bf16.msra.mxu0 0
        %1030 = vmatprep.subr.bf16.mxu0 0
        %1031 = vmatpush1.bf16.msra.mxu0 0
        %1032 = vmatprep.subr.bf16.mxu0 0
        %1033 = vmatpush1.bf16.msra.mxu0 0
        %1034 = vmatprep.subr.bf16.mxu0 0
        %1035 = vmatpush1.bf16.msra.mxu0 0
        %1036 = vmatprep.subr.bf16.mxu0 0
        %1037 = vmatpush1.bf16.msra.mxu0 0
        %1038 = vmatprep.mubr.bf16.mxu0 0
        %1039 = vmatmul.mubr.bf16.gmra.mrb[0].mxu0 %v933
        %v1040 = vpop.f32.mrb[0].mxu0
        %v1041 = vadd.f32 %v956, %v1040
        %v1042 = vpop.f32.mrb[0].mxu0
        %v1043 = vpop.f32.mrb[0].mxu0
        %v1044 = vadd.f32 %v956, %v1043
        %v1045 = vpop.f32.mrb[0].mxu0
        %1046 = vmatprep.mubr.bf16.mxu0 0
        %1047 = vmatmul.mubr.bf16.gmra.mrb[0].mxu0 %v934
        %v1048 = vpop.f32.mrb[0].mxu0
        %v1049 = vadd.f32 %v956, %v1048
        %v1050 = vpop.f32.mrb[0].mxu0
        %v1051 = vpop.f32.mrb[0].mxu0
        %v1052 = vadd.f32 %v956, %v1051
        %v1053 = vpop.f32.mrb[0].mxu0
        %1054 = vdwg.mxu0
        %v1055 = vmax.f32 %v1041, 0.0
        %v1056 = vmax.f32 %v1044, 0.0
        %v1057 = vmax.f32 %v1049, 0.0
        %v1058 = vmax.f32 %v1052, 0.0
        %v1059 = vpack.c.bf16 %v1056, %v1055
        %v1060 = vpack.c.bf16 %v1058, %v1057
        %v1061 = vld [vmem:[%s501] sm:$0xf]
        %v1062 = vld [vmem:[%s501 + $0x4] sm:$0xf]
        %v1063 = vld [vmem:[%s501 + $0x8] sm:$0xf]
        %v1064 = vld [vmem:[%s501 + $0xc] sm:$0xf]
        %v1065 = vld [vmem:[%s501 + $0x10] sm:$0xf]
        %v1066 = vld [vmem:[%s501 + $0x14] sm:$0xf]
        %v1067 = vld [vmem:[%s501 + $0x18] sm:$0xf]
        %v1068 = vld [vmem:[%s501 + $0x1c] sm:$0xf]
        %v1069 = vld [vmem:[%s501 + $0x20] sm:$0xf]
        %v1070 = vld [vmem:[%s501 + $0x24] sm:$0xf]
        %v1071 = vld [vmem:[%s501 + $0x28] sm:$0xf]
        %v1072 = vld [vmem:[%s501 + $0x2c] sm:$0xf]
        %v1073 = vld [vmem:[%s501 + $0x30] sm:$0xf]
        %v1074 = vld [vmem:[%s501 + $0x34] sm:$0xf]
        %v1075 = vld [vmem:[%s501 + $0x38] sm:$0xf]
        %v1076 = vld [vmem:[%s501 + $0x3c] sm:$0xf]
        %v1077 = vld [vmem:[%s589] sm:$0x1]
        %v1079 = vlaneseq
        %v1080 = vshrl.u32 %v1079, 7
        %v1081 = vsub.s32 0, %v1080
        %v1082 = vrot.slane %v1077, %v1081
        %v1100 = vunpack.c.l.b16 %v1061
        %v1101 = vunpack.c.l.b16 %v1062
        %v1102 = vunpack.c.l.b16 %v1063
        %v1103 = vunpack.c.l.b16 %v1064
        %v1104 = vunpack.c.l.b16 %v1065
        %v1105 = vunpack.c.l.b16 %v1066
        %v1106 = vunpack.c.l.b16 %v1067
        %v1107 = vunpack.c.l.b16 %v1068
        %v1108 = vunpack.c.l.b16 %v1069
        %v1109 = vunpack.c.l.b16 %v1070
        %v1110 = vunpack.c.l.b16 %v1071
        %v1111 = vunpack.c.l.b16 %v1072
        %v1112 = vunpack.c.l.b16 %v1073
        %v1113 = vunpack.c.l.b16 %v1074
        %v1114 = vunpack.c.l.b16 %v1075
        %v1115 = vunpack.c.l.b16 %v1076
        %v1116 = vpack.c.b16 %v1101, %v1100
        %v1117 = vpack.c.b16 %v1103, %v1102
        %v1118 = vpack.c.b16 %v1105, %v1104
        %v1119 = vpack.c.b16 %v1107, %v1106
        %v1120 = vpack.c.b16 %v1109, %v1108
        %v1121 = vpack.c.b16 %v1111, %v1110
        %v1122 = vpack.c.b16 %v1113, %v1112
        %v1123 = vpack.c.b16 %v1115, %v1114
        %1132 = vmatprep.subr.bf16.mxu0 0
        %1133 = vmatpush1.bf16.msra.mxu0 %v1116
        %1134 = vmatprep.subr.bf16.mxu0 0
        %1135 = vmatpush1.bf16.msra.mxu0 %v1117
        %1136 = vmatprep.subr.bf16.mxu0 0
        %1137 = vmatpush1.bf16.msra.mxu0 %v1118
        %1138 = vmatprep.subr.bf16.mxu0 0
        %1139 = vmatpush1.bf16.msra.mxu0 %v1119
        %1140 = vmatprep.subr.bf16.mxu0 0
        %1141 = vmatpush1.bf16.msra.mxu0 %v1120
        %1142 = vmatprep.subr.bf16.mxu0 0
        %1143 = vmatpush1.bf16.msra.mxu0 %v1121
        %1144 = vmatprep.subr.bf16.mxu0 0
        %1145 = vmatpush1.bf16.msra.mxu0 %v1122
        %1146 = vmatprep.subr.bf16.mxu0 0
        %1147 = vmatpush1.bf16.msra.mxu0 %v1123
        %1148 = vmatprep.subr.bf16.mxu0 0
        %1149 = vmatpush1.bf16.msra.mxu0 0
        %1150 = vmatprep.subr.bf16.mxu0 0
        %1151 = vmatpush1.bf16.msra.mxu0 0
        %1152 = vmatprep.subr.bf16.mxu0 0
        %1153 = vmatpush1.bf16.msra.mxu0 0
        %1154 = vmatprep.subr.bf16.mxu0 0
        %1155 = vmatpush1.bf16.msra.mxu0 0
        %1156 = vmatprep.subr.bf16.mxu0 0
        %1157 = vmatpush1.bf16.msra.mxu0 0
        %1158 = vmatprep.subr.bf16.mxu0 0
        %1159 = vmatpush1.bf16.msra.mxu0 0
        %1160 = vmatprep.subr.bf16.mxu0 0
        %1161 = vmatpush1.bf16.msra.mxu0 0
        %1162 = vmatprep.subr.bf16.mxu0 0
        %1163 = vmatpush1.bf16.msra.mxu0 0
        %1164 = vmatprep.mubr.bf16.mxu0 0
        %1165 = vmatmul.mubr.bf16.gmra.mrb[0].mxu0 %v1059
        %v1166 = vpop.f32.mrb[0].mxu0
        %v1167 = vadd.f32 %v1082, %v1166
        %v1168 = vpop.f32.mrb[0].mxu0
        %v1169 = vpop.f32.mrb[0].mxu0
        %v1170 = vadd.f32 %v1082, %v1169
        %v1171 = vpop.f32.mrb[0].mxu0
        %1172 = vmatprep.mubr.bf16.mxu0 0
        %1173 = vmatmul.mubr.bf16.gmra.mrb[0].mxu0 %v1060
        %v1174 = vpop.f32.mrb[0].mxu0
        %v1175 = vadd.f32 %v1082, %v1174
        %v1176 = vpop.f32.mrb[0].mxu0
        %v1177 = vpop.f32.mrb[0].mxu0
        %v1178 = vadd.f32 %v1082, %v1177
        %v1179 = vpop.f32.mrb[0].mxu0
        %1180 = vdwg.mxu0
        %v1181 = vmax.f32 %v1167, 0.0
        %v1182 = vmax.f32 %v1170, 0.0
        %v1183 = vmax.f32 %v1175, 0.0
        %v1184 = vmax.f32 %v1178, 0.0
        %v1185 = vpack.c.bf16 %v1182, %v1181
        %v1186 = vpack.c.bf16 %v1184, %v1183
        %v1187 = vld [vmem:[%s510] sm:$0xf]
        %v1188 = vld [vmem:[%s510 + $0x4] sm:$0xf]
        %v1189 = vld [vmem:[%s510 + $0x8] sm:$0xf]
        %v1190 = vld [vmem:[%s510 + $0xc] sm:$0xf]
        %v1191 = vld [vmem:[%s510 + $0x10] sm:$0xf]
        %v1192 = vld [vmem:[%s510 + $0x14] sm:$0xf]
        %v1193 = vld [vmem:[%s510 + $0x18] sm:$0xf]
        %v1194 = vld [vmem:[%s510 + $0x1c] sm:$0xf]
        %v1195 = vld [vmem:[%s510 + $0x20] sm:$0xf]
        %v1196 = vld [vmem:[%s510 + $0x24] sm:$0xf]
        %v1197 = vld [vmem:[%s510 + $0x28] sm:$0xf]
        %v1198 = vld [vmem:[%s510 + $0x2c] sm:$0xf]
        %v1199 = vld [vmem:[%s510 + $0x30] sm:$0xf]
        %v1200 = vld [vmem:[%s510 + $0x34] sm:$0xf]
        %v1201 = vld [vmem:[%s510 + $0x38] sm:$0xf]
        %v1202 = vld [vmem:[%s510 + $0x3c] sm:$0xf]
        %v1203 = vld [vmem:[%s595] sm:$0x1]
        %v1205 = vlaneseq
        %v1206 = vshrl.u32 %v1205, 7
        %v1207 = vsub.s32 0, %v1206
        %v1208 = vrot.slane %v1203, %v1207
        %v1226 = vunpack.c.l.b16 %v1187
        %v1227 = vunpack.c.l.b16 %v1188
        %v1228 = vunpack.c.l.b16 %v1189
        %v1229 = vunpack.c.l.b16 %v1190
        %v1230 = vunpack.c.l.b16 %v1191
        %v1231 = vunpack.c.l.b16 %v1192
        %v1232 = vunpack.c.l.b16 %v1193
        %v1233 = vunpack.c.l.b16 %v1194
        %v1234 = vunpack.c.l.b16 %v1195
        %v1235 = vunpack.c.l.b16 %v1196
        %v1236 = vunpack.c.l.b16 %v1197
        %v1237 = vunpack.c.l.b16 %v1198
        %v1238 = vunpack.c.l.b16 %v1199
        %v1239 = vunpack.c.l.b16 %v1200
        %v1240 = vunpack.c.l.b16 %v1201
        %v1241 = vunpack.c.l.b16 %v1202
        %v1242 = vpack.c.b16 %v1227, %v1226
        %v1243 = vpack.c.b16 %v1229, %v1228
        %v1244 = vpack.c.b16 %v1231, %v1230
        %v1245 = vpack.c.b16 %v1233, %v1232
        %v1246 = vpack.c.b16 %v1235, %v1234
        %v1247 = vpack.c.b16 %v1237, %v1236
        %v1248 = vpack.c.b16 %v1239, %v1238
        %v1249 = vpack.c.b16 %v1241, %v1240
        %1258 = vmatprep.subr.bf16.mxu0 0
        %1259 = vmatpush1.bf16.msra.mxu0 %v1242
        %1260 = vmatprep.subr.bf16.mxu0 0
        %1261 = vmatpush1.bf16.msra.mxu0 %v1243
        %1262 = vmatprep.subr.bf16.mxu0 0
        %1263 = vmatpush1.bf16.msra.mxu0 %v1244
        %1264 = vmatprep.subr.bf16.mxu0 0
        %1265 = vmatpush1.bf16.msra.mxu0 %v1245
        %1266 = vmatprep.subr.bf16.mxu0 0
        %1267 = vmatpush1.bf16.msra.mxu0 %v1246
        %1268 = vmatprep.subr.bf16.mxu0 0
        %1269 = vmatpush1.bf16.msra.mxu0 %v1247
        %1270 = vmatprep.subr.bf16.mxu0 0
        %1271 = vmatpush1.bf16.msra.mxu0 %v1248
        %1272 = vmatprep.subr.bf16.mxu0 0
        %1273 = vmatpush1.bf16.msra.mxu0 %v1249
        %1274 = vmatprep.subr.bf16.mxu0 0
        %1275 = vmatpush1.bf16.msra.mxu0 0
        %1276 = vmatprep.subr.bf16.mxu0 0
        %1277 = vmatpush1.bf16.msra.mxu0 0
        %1278 = vmatprep.subr.bf16.mxu0 0
        %1279 = vmatpush1.bf16.msra.mxu0 0
        %1280 = vmatprep.subr.bf16.mxu0 0
        %1281 = vmatpush1.bf16.msra.mxu0 0
        %1282 = vmatprep.subr.bf16.mxu0 0
        %1283 = vmatpush1.bf16.msra.mxu0 0
        %1284 = vmatprep.subr.bf16.mxu0 0
        %1285 = vmatpush1.bf16.msra.mxu0 0
        %1286 = vmatprep.subr.bf16.mxu0 0
        %1287 = vmatpush1.bf16.msra.mxu0 0
        %1288 = vmatprep.subr.bf16.mxu0 0
        %1289 = vmatpush1.bf16.msra.mxu0 0
        %1290 = vmatprep.mubr.bf16.mxu0 0
        %1291 = vmatmul.mubr.bf16.gmra.mrb[0].mxu0 %v1185
        %v1292 = vpop.f32.mrb[0].mxu0
        %v1293 = vadd.f32 %v1208, %v1292
        %v1294 = vpop.f32.mrb[0].mxu0
        %v1295 = vpop.f32.mrb[0].mxu0
        %v1296 = vadd.f32 %v1208, %v1295
        %v1297 = vpop.f32.mrb[0].mxu0
        %1298 = vmatprep.mubr.bf16.mxu0 0
        %1299 = vmatmul.mubr.bf16.gmra.mrb[0].mxu0 %v1186
        %v1300 = vpop.f32.mrb[0].mxu0
        %v1301 = vadd.f32 %v1208, %v1300
        %v1302 = vpop.f32.mrb[0].mxu0
        %v1303 = vpop.f32.mrb[0].mxu0
        %v1304 = vadd.f32 %v1208, %v1303
        %v1305 = vpop.f32.mrb[0].mxu0
        %1306 = vdwg.mxu0
        %v1307 = vmax.f32 %v1293, 0.0
        %v1308 = vmax.f32 %v1296, 0.0
        %v1309 = vmax.f32 %v1301, 0.0
        %v1310 = vmax.f32 %v1304, 0.0
        %1311 = vst [vmem:[%s576] sm:$0xff] %v1307
        %1312 = vst [vmem:[%s576 + $0x8] sm:$0xff] %v1308
        %1313 = vst [vmem:[%s576 + $0x10] sm:$0xff] %v1309
        %1314 = vst [vmem:[%s576 + $0x18] sm:$0xff] %v1310
        %s1315 = sand.u32 %s281, 1
        %s1316 = scalar_lea.sflag [#allocation6], %s1315
        %s1317 = sand.u32 %s281, 1
        %s1318 = smul.addr %s1317, 32
        %s1319 = scalar_lea.vmem [#allocation13], %s1318
        // Predicated region
        $region81: #{tpu_custom_call.1} parent=55 // pred_check
          %p1320 = pneg %p291
        $region82: #{tpu_custom_call.1} parent=55 // pred_check_branch
          %1322 = sbr.rel (%p1320) target = $region84
        $region83: #{tpu_custom_call.1} parent=55 // pred_region
          %s1323 = smul.u32 4, %s32
          %s1325 = ssub.s32 512, 512
          %1326 = vsyncadd %s1316, %s1325
          %s1327 = smul.addr %s1323, 128
          %s1328 = scalar_lea.hbm %s10, %s1327
          %s1329 = sshll.u32 %s1319, 4
          %s1330 = int_to_ptr.vmem [resolvable:$true] %s1329
          %1335 = dma.vmem_to_hbm [thread:$0]  %s1330, 512, %s1328, %s1316, 128, 128, 8
        $region84: #{tpu_custom_call.1} parent=55 // pred_fallthru
          _
      $region56: #{tpu_custom_call.1} parent=5 // pred_fallthru
        _
      %p1336 = scmp.le.s32.totalorder 2, %s27
      // Predicated region
      $region85: #{tpu_custom_call.1} parent=5 // pred_check
        %p1337 = pneg %p1336
      $region86: #{tpu_custom_call.1} parent=5 // pred_check_branch
        %1339 = sbr.rel (%p1337) target = $region88
      $region87: #{tpu_custom_call.1} parent=5 // pred_region
        %s1340 = ssub.s32 %s27, 2
        // Predicated region
        $region89: #{tpu_custom_call.1} parent=87 // pred_check
          %p1341 = pneg %p297
        $region90: #{tpu_custom_call.1} parent=87 // pred_check_branch
          %1343 = sbr.rel (%p1341) target = $region92
        $region91: #{tpu_custom_call.1} parent=87 // pred_region
          %s1344 = sand.u32 %s282, 1
          %s1345 = scalar_lea.sflag [#allocation6], %s1344
          %s1346 = sand.u32 %s282, 1
          %s1347 = smul.addr %s1346, 32
          %s1348 = scalar_lea.vmem [#allocation13], %s1347
          %1349 = dma.done %s1345, 512
        $region92: #{tpu_custom_call.1} parent=87 // pred_fallthru
          _
      $region88: #{tpu_custom_call.1} parent=5 // pred_fallthru
        _
    $region6: #{tpu_custom_call.1} parent=1 // loop_footer
      %s31 = sadd.s32 1, %s27
    $region7: #{tpu_custom_call.1} parent=1 // loop_footer_branch
      %26 = sbr.rel target = $region3
    $region8: #{tpu_custom_call.1} parent=1 // loop_exit
      _
    %1350 = vsyncpa [#allocation5], 1
    %s1351 = scalar_lea.sflag [#allocation5], 1
    %1352 = vsyncpa %s1351, 1
    %1353 = vsyncpa [#allocation8], 1
    %1354 = vsyncpa [#allocation6], 1
    %s1355 = scalar_lea.sflag [#allocation6], 1
    %1356 = vsyncpa %s1355, 1

// kernel: tpu_custom_call.1
$region0: #{tpu_custom_call.1}
  #allocation0 [shape = 'u32[]', space=smem, size = 0x4, offset = 0x4, fixed_abs, tag = 'smem constant byte address 0x4 - core index']
  #allocation1 [shape = 'u32[144,128]{1,0:T(1,128)}', space=vmem, size = 0x12000, scoped, tag = 'internal scratch']
  #allocation2 [shape = 's32[1]{0}', space=sflag, size = 0x4, scoped, tag = 'scoped memory for tpu_custom_call.1']
  #allocation3 [shape = 'u8[512]{0}', space=smem, size = 0x200, scoped, tag = 'prefetched SMEM operand 0']
  %s0 = inlined_call_operand.hbm [shape: s32[3], index: 0, kind: input, shape index: {}]
  %s1 = inlined_call_operand.hbm [shape: bf16[96,384], index: 1, kind: input, shape index: {}]
  %s2 = inlined_call_operand.hbm [shape: bf16[384,128], index: 2, kind: input, shape index: {}]
  %s3 = inlined_call_operand.hbm [shape: f32[96,128], index: 3, kind: input, shape index: {}]
  %s4 = inlined_call_operand.hbm [shape: bf16[3,128,128], index: 4, kind: input, shape index: {}]
  %s5 = inlined_call_operand.vmem [shape: f32[3,1,128], index: 5, kind: input, shape index: {}]
  %s6 = inlined_call_operand.hbm [shape: bf16[3,128,128], index: 6, kind: input, shape index: {}]
  %s7 = inlined_call_operand.vmem [shape: f32[3,1,128], index: 7, kind: input, shape index: {}]
  %s8 = inlined_call_operand.hbm [shape: bf16[3,128,128], index: 8, kind: input, shape index: {}]
  %s9 = inlined_call_operand.vmem [shape: f32[3,1,128], index: 9, kind: input, shape index: {}]
  %s10 = inlined_call_operand.hbm [shape: f32[96,128], index: 10, kind: output, shape index: {}]
  %s11 = sld [smem:[#allocation0]]
  $region93: #{tpu_custom_call.1} parent=0
    _
  %s13 = ssub.s32 1, %s11
  %s14 = scalar_select 0, %s13, %s11
  %16 = dma.hbm_to_smem %s0, 16, [#allocation3], [#allocation2]
  %17 = dma.done [#allocation2], 16
  %18 = sfence
  $region1: #{tpu_custom_call.1} parent=0
    #allocation4 [shape = 'u8[49152]{0}', space=vmem, size = 0xc000, scoped, tag = 'input window, operand 1']
    #allocation5 [shape = 's32[2]{0}', space=sflag, size = 0x8, scoped, tag = 'scoped memory for tpu_custom_call.1']
    #allocation6 [shape = 's32[2]{0}', space=sflag, size = 0x8, scoped, tag = 'scoped memory for tpu_custom_call.1']
    #allocation7 [shape = 'u8[98304]{0}', space=vmem, size = 0x18000, scoped, tag = 'input window, operand 2, single buffered']
    #allocation8 [shape = 's32[1]{0}', space=sflag, size = 0x4, scoped, tag = 'scoped memory for tpu_custom_call.1']
    #allocation9 [shape = 'u8[32768]{0}', space=vmem, size = 0x8000, scoped, tag = 'input window, operand 3']
    #allocation10 [shape = 'u8[65536]{0}', space=vmem, size = 0x10000, scoped, tag = 'input window, operand 4']
    #allocation11 [shape = 'u8[65536]{0}', space=vmem, size = 0x10000, scoped, tag = 'input window, operand 6']
    #allocation12 [shape = 'u8[65536]{0}', space=vmem, size = 0x10000, scoped, tag = 'input window, operand 8']
    #allocation13 [shape = 'u8[32768]{0}', space=vmem, size = 0x8000, scoped, tag = 'output window, operand 0']
    %19 = vsyncpa [#allocation5], 0
    %s20 = scalar_lea.sflag [#allocation5], 1
    %21 = vsyncpa %s20, 0
    %22 = vsyncpa [#allocation8], 0
    %23 = vsyncpa [#allocation6], 0
    %s24 = scalar_lea.sflag [#allocation6], 1
    %25 = vsyncpa %s24, 0
    loop: start=0, step=1, limit=5
    $region2: #{tpu_custom_call.1} parent=1 // loop_pre_header
      _
    $region3: #{tpu_custom_call.1} parent=1 // loop_header
      %s27 = sphi 0, %s31
      %p28 = scmp.ge.s32.totalorder %s27, 5
      %s37 = sphi 0, %s39
      %s40 = sphi 0, %s37
      %s41 = sphi 0, %s40
      %s57 = sphi 0, %s41
      %s61 = sphi 0, %s61
      %s63 = sphi 0, %s61
      %s64 = sphi 0, %s63
      %s78 = sphi 0, %s64
      %s84 = sphi 0, %s86
      %s87 = sphi 0, %s84
      %s88 = sphi 0, %s87
      %s104 = sphi 0, %s88
      %s112 = sphi 0, %s114
      %s115 = sphi 0, %s112
      %s116 = sphi 0, %s115
      %s132 = sphi 0, %s116
      %s140 = sphi 0, %s142
      %s143 = sphi 0, %s140
      %s144 = sphi 0, %s143
      %s160 = sphi 0, %s144
      %s168 = sphi 0, %s170
      %s171 = sphi 0, %s168
      %s172 = sphi 0, %s171
      %s188 = sphi 0, %s172
      %s196 = sphi 0, %s198
      %s199 = sphi 0, %s196
      %s200 = sphi 0, %s199
      %s216 = sphi 0, %s200
      %s224 = sphi 0, %s226
      %s227 = sphi 0, %s224
      %s228 = sphi 0, %s227
      %s244 = sphi 0, %s228
      %s252 = sphi 0, %s254
      %s255 = sphi 0, %s252
      %s256 = sphi 0, %s255
      %s272 = sphi 0, %s256
      %s278 = sphi 0, %s280
      %s281 = sphi 0, %s278
      %s282 = sphi 0, %s281
      %s298 = sphi 0, %s282
    $region4: #{tpu_custom_call.1} parent=1 // loop_header_branch
      %30 = sbr.rel (%p28) target = $region8
    $region5: #{tpu_custom_call.1} parent=1 // loop_body
      %s32 = ssub.s32 %s27, 1
      %s33 = ssub.s32 %s27, 2
      %s34 = sadd.s32 %s27, 1
      %s35 = ssub.s32 %s27, %s34
      %p36 = scmp.eq.s32.totalorder %s35, 0
      %s38 = sadd.s32 %s37, 1
      %s39 = scalar_select %p36, %s37, %s38
      %p42 = pneg %p36
      %p43 = scmp.eq.s32.totalorder %s27, 2
      %p44 = por %p42, %p43
      %p45 = scmp.ne.s32.totalorder %s37, %s40
      %p46 = scmp.eq.s32.totalorder %s27, 0
      %p47 = por %p45, %p46
      %p48 = scmp.ne.s32.totalorder %s37, %s40
      %p49 = scmp.eq.s32.totalorder %s32, 2
      %p50 = por %p48, %p49
      %p51 = scmp.ne.s32.totalorder %s40, %s41
      %p52 = scmp.eq.s32.totalorder %s32, 0
      %p53 = por %p51, %p52
      %p54 = scmp.ne.s32.totalorder %s40, %s41
      %p55 = scmp.eq.s32.totalorder %s33, 2
      %p56 = por %p54, %p55
      %p58 = scmp.ne.s32.totalorder %s41, %s57
      %p59 = scmp.eq.s32.totalorder %s33, 0
      %p60 = por %p58, %p59
      %s62 = sadd.s32 %s61, 1
      %p65 = scmp.eq.s32.totalorder %s27, 2
      %p66 = scmp.ne.s32.totalorder %s61, %s63
      %p67 = scmp.eq.s32.totalorder %s27, 0
      %p68 = por %p66, %p67
      %p69 = scmp.ne.s32.totalorder %s61, %s63
      %p70 = scmp.eq.s32.totalorder %s32, 2
      %p71 = por %p69, %p70
      %p72 = scmp.ne.s32.totalorder %s63, %s64
      %p73 = scmp.eq.s32.totalorder %s32, 0
      %p74 = por %p72, %p73
      %p75 = scmp.ne.s32.totalorder %s63, %s64
      %p76 = scmp.eq.s32.totalorder %s33, 2
      %p77 = por %p75, %p76
      %p79 = scmp.ne.s32.totalorder %s64, %s78
      %p80 = scmp.eq.s32.totalorder %s33, 0
      %p81 = por %p79, %p80
      %s82 = ssub.s32 %s27, %s34
      %p83 = scmp.eq.s32.totalorder %s82, 0
      %s85 = sadd.s32 %s84, 1
      %s86 = scalar_select %p83, %s84, %s85
      %p89 = pneg %p83
      %p90 = scmp.eq.s32.totalorder %s27, 2
      %p91 = por %p89, %p90
      %p92 = scmp.ne.s32.totalorder %s84, %s87
      %p93 = scmp.eq.s32.totalorder %s27, 0
      %p94 = por %p92, %p93
      %p95 = scmp.ne.s32.totalorder %s84, %s87
      %p96 = scmp.eq.s32.totalorder %s32, 2
      %p97 = por %p95, %p96
      %p98 = scmp.ne.s32.totalorder %s87, %s88
      %p99 = scmp.eq.s32.totalorder %s32, 0
      %p100 = por %p98, %p99
      %p101 = scmp.ne.s32.totalorder %s87, %s88
      %p102 = scmp.eq.s32.totalorder %s33, 2
      %p103 = por %p101, %p102
      %p105 = scmp.ne.s32.totalorder %s88, %s104
      %p106 = scmp.eq.s32.totalorder %s33, 0
      %p107 = por %p105, %p106
      %s108 = sld [smem:[#allocation3 + %s27]]
      %s109 = sld [smem:[#allocation3 + %s34]]
      %s110 = ssub.s32 %s108, %s109
      %p111 = scmp.eq.s32.totalorder %s110, 0
      %s113 = sadd.s32 %s112, 1
      %s114 = scalar_select %p111, %s112, %s113
      %p117 = pneg %p111
      %p118 = scmp.eq.s32.totalorder %s27, 2
      %p119 = por %p117, %p118
      %p120 = scmp.ne.s32.totalorder %s112, %s115
      %p121 = scmp.eq.s32.totalorder %s27, 0
      %p122 = por %p120, %p121
      %p123 = scmp.ne.s32.totalorder %s112, %s115
      %p124 = scmp.eq.s32.totalorder %s32, 2
      %p125 = por %p123, %p124
      %p126 = scmp.ne.s32.totalorder %s115, %s116
      %p127 = scmp.eq.s32.totalorder %s32, 0
      %p128 = por %p126, %p127
      %p129 = scmp.ne.s32.totalorder %s115, %s116
      %p130 = scmp.eq.s32.totalorder %s33, 2
      %p131 = por %p129, %p130
      %p133 = scmp.ne.s32.totalorder %s116, %s132
      %p134 = scmp.eq.s32.totalorder %s33, 0
      %p135 = por %p133, %p134
      %s136 = sld [smem:[#allocation3 + %s27]]
      %s137 = sld [smem:[#allocation3 + %s34]]
      %s138 = ssub.s32 %s136, %s137
      %p139 = scmp.eq.s32.totalorder %s138, 0
      %s141 = sadd.s32 %s140, 1
      %s142 = scalar_select %p139, %s140, %s141
      %p145 = pneg %p139
      %p146 = scmp.eq.s32.totalorder %s27, 2
      %p147 = por %p145, %p146
      %p148 = scmp.ne.s32.totalorder %s140, %s143
      %p149 = scmp.eq.s32.totalorder %s27, 0
      %p150 = por %p148, %p149
      %p151 = scmp.ne.s32.totalorder %s140, %s143
      %p152 = scmp.eq.s32.totalorder %s32, 2
      %p153 = por %p151, %p152
      %p154 = scmp.ne.s32.totalorder %s143, %s144
      %p155 = scmp.eq.s32.totalorder %s32, 0
      %p156 = por %p154, %p155
      %p157 = scmp.ne.s32.totalorder %s143, %s144
      %p158 = scmp.eq.s32.totalorder %s33, 2
      %p159 = por %p157, %p158
      %p161 = scmp.ne.s32.totalorder %s144, %s160
      %p162 = scmp.eq.s32.totalorder %s33, 0
      %p163 = por %p161, %p162
      %s164 = sld [smem:[#allocation3 + %s27]]
      %s165 = sld [smem:[#allocation3 + %s34]]
      %s166 = ssub.s32 %s164, %s165
      %p167 = scmp.eq.s32.totalorder %s166, 0
      %s169 = sadd.s32 %s168, 1
      %s170 = scalar_select %p167, %s168, %s169
      %p173 = pneg %p167
      %p174 = scmp.eq.s32.totalorder %s27, 2
      %p175 = por %p173, %p174
      %p176 = scmp.ne.s32.totalorder %s168, %s171
      %p177 = scmp.eq.s32.totalorder %s27, 0
      %p178 = por %p176, %p177
      %p179 = scmp.ne.s32.totalorder %s168, %s171
      %p180 = scmp.eq.s32.totalorder %s32, 2
      %p181 = por %p179, %p180
      %p182 = scmp.ne.s32.totalorder %s171, %s172
      %p183 = scmp.eq.s32.totalorder %s32, 0
      %p184 = por %p182, %p183
      %p185 = scmp.ne.s32.totalorder %s171, %s172
      %p186 = scmp.eq.s32.totalorder %s33, 2
      %p187 = por %p185, %p186
      %p189 = scmp.ne.s32.totalorder %s172, %s188
      %p190 = scmp.eq.s32.totalorder %s33, 0
      %p191 = por %p189, %p190
      %s192 = sld [smem:[#allocation3 + %s27]]
      %s193 = sld [smem:[#allocation3 + %s34]]
      %s194 = ssub.s32 %s192, %s193
      %p195 = scmp.eq.s32.totalorder %s194, 0
      %s197 = sadd.s32 %s196, 1
      %s198 = scalar_select %p195, %s196, %s197
      %p201 = pneg %p195
      %p202 = scmp.eq.s32.totalorder %s27, 2
      %p203 = por %p201, %p202
      %p204 = scmp.ne.s32.totalorder %s196, %s199
      %p205 = scmp.eq.s32.totalorder %s27, 0
      %p206 = por %p204, %p205
      %p207 = scmp.ne.s32.totalorder %s196, %s199
      %p208 = scmp.eq.s32.totalorder %s32, 2
      %p209 = por %p207, %p208
      %p210 = scmp.ne.s32.totalorder %s199, %s200
      %p211 = scmp.eq.s32.totalorder %s32, 0
      %p212 = por %p210, %p211
      %p213 = scmp.ne.s32.totalorder %s199, %s200
      %p214 = scmp.eq.s32.totalorder %s33, 2
      %p215 = por %p213, %p214
      %p217 = scmp.ne.s32.totalorder %s200, %s216
      %p218 = scmp.eq.s32.totalorder %s33, 0
      %p219 = por %p217, %p218
      %s220 = sld [smem:[#allocation3 + %s27]]
      %s221 = sld [smem:[#allocation3 + %s34]]
      %s222 = ssub.s32 %s220, %s221
      %p223 = scmp.eq.s32.totalorder %s222, 0
      %s225 = sadd.s32 %s224, 1
      %s226 = scalar_select %p223, %s224, %s225
      %p229 = pneg %p223
      %p230 = scmp.eq.s32.totalorder %s27, 2
      %p231 = por %p229, %p230
      %p232 = scmp.ne.s32.totalorder %s224, %s227
      %p233 = scmp.eq.s32.totalorder %s27, 0
      %p234 = por %p232, %p233
      %p235 = scmp.ne.s32.totalorder %s224, %s227
      %p236 = scmp.eq.s32.totalorder %s32, 2
      %p237 = por %p235, %p236
      %p238 = scmp.ne.s32.totalorder %s227, %s228
      %p239 = scmp.eq.s32.totalorder %s32, 0
      %p240 = por %p238, %p239
      %p241 = scmp.ne.s32.totalorder %s227, %s228
      %p242 = scmp.eq.s32.totalorder %s33, 2
      %p243 = por %p241, %p242
      %p245 = scmp.ne.s32.totalorder %s228, %s244
      %p246 = scmp.eq.s32.totalorder %s33, 0
      %p247 = por %p245, %p246
      %s248 = sld [smem:[#allocation3 + %s27]]
      %s249 = sld [smem:[#allocation3 + %s34]]
      %s250 = ssub.s32 %s248, %s249
      %p251 = scmp.eq.s32.totalorder %s250, 0
      %s253 = sadd.s32 %s252, 1
      %s254 = scalar_select %p251, %s252, %s253
      %p257 = pneg %p251
      %p258 = scmp.eq.s32.totalorder %s27, 2
      %p259 = por %p257, %p258
      %p260 = scmp.ne.s32.totalorder %s252, %s255
      %p261 = scmp.eq.s32.totalorder %s27, 0
      %p262 = por %p260, %p261
      %p263 = scmp.ne.s32.totalorder %s252, %s255
      %p264 = scmp.eq.s32.totalorder %s32, 2
      %p265 = por %p263, %p264
      %p266 = scmp.ne.s32.totalorder %s255, %s256
      %p267 = scmp.eq.s32.totalorder %s32, 0
      %p268 = por %p266, %p267
      %p269 = scmp.ne.s32.totalorder %s255, %s256
      %p270 = scmp.eq.s32.totalorder %s33, 2
      %p271 = por %p269, %p270
      %p273 = scmp.ne.s32.totalorder %s256, %s272
      %p274 = scmp.eq.s32.totalorder %s33, 0
      %p275 = por %p273, %p274
      %s276 = ssub.s32 %s27, %s34
      %p277 = scmp.eq.s32.totalorder %s276, 0
      %s279 = sadd.s32 %s278, 1
      %s280 = scalar_select %p277, %s278, %s279
      %p283 = pneg %p277
      %p284 = scmp.eq.s32.totalorder %s27, 2
      %p285 = por %p283, %p284
      %p286 = scmp.ne.s32.totalorder %s278, %s281
      %p287 = scmp.eq.s32.totalorder %s27, 0
      %p288 = por %p286, %p287
      %p289 = scmp.ne.s32.totalorder %s278, %s281
      %p290 = scmp.eq.s32.totalorder %s32, 2
      %p291 = por %p289, %p290
      %p292 = scmp.ne.s32.totalorder %s281, %s282
      %p293 = scmp.eq.s32.totalorder %s32, 0
      %p294 = por %p292, %p293
      %p295 = scmp.ne.s32.totalorder %s281, %s282
      %p296 = scmp.eq.s32.totalorder %s33, 2
      %p297 = por %p295, %p296
      %p299 = scmp.ne.s32.totalorder %s282, %s298
      %p300 = scmp.eq.s32.totalorder %s33, 0
      %p301 = por %p299, %p300
      %p302 = scmp.le.s32.totalorder 1, %s27
      %p303 = scmp.lt.s32.totalorder %s27, 4
      %p304 = pnand %p302, %p303
      %p305 = pneg %p304
      // Predicated region
      $region9: #{tpu_custom_call.1} parent=5 // pred_check
        _
      $region10: #{tpu_custom_call.1} parent=5 // pred_check_branch
        %307 = sbr.rel (%p304) target = $region12
      $region11: #{tpu_custom_call.1} parent=5 // pred_region
        %s308 = ssub.s32 %s27, 1
        // Predicated region
        $region13: #{tpu_custom_call.1} parent=11 // pred_check
          %p309 = pneg %p74
        $region14: #{tpu_custom_call.1} parent=11 // pred_check_branch
          %311 = sbr.rel (%p309) target = $region16
        $region15: #{tpu_custom_call.1} parent=11 // pred_region
          %s313 = ssub.s32 3072, 3072
          %314 = vsyncadd [#allocation8], %s313
          %s315 = sshll.u32 [#allocation7], 4
          %s316 = int_to_ptr.vmem [resolvable:$true] %s315
          %321 = dma.hbm_to_vmem [thread:$0]  %s2, 3072, %s316, [#allocation8], 64, 64, 4
        $region16: #{tpu_custom_call.1} parent=11 // pred_fallthru
          _
      $region12: #{tpu_custom_call.1} parent=5 // pred_fallthru
        _
      %p322 = scmp.lt.s32.totalorder %s27, 3
      // Predicated region
      $region17: #{tpu_custom_call.1} parent=5 // pred_check
        %p323 = pneg %p322
      $region18: #{tpu_custom_call.1} parent=5 // pred_check_branch
        %325 = sbr.rel (%p323) target = $region20
      $region19: #{tpu_custom_call.1} parent=5 // pred_region
        // Predicated region
        $region21: #{tpu_custom_call.1} parent=19 // pred_check
          %p326 = pneg %p47
        $region22: #{tpu_custom_call.1} parent=19 // pred_check_branch
          %328 = sbr.rel (%p326) target = $region24
        $region23: #{tpu_custom_call.1} parent=19 // pred_region
          %s329 = sand.u32 %s27, 1
          %s330 = scalar_lea.sflag [#allocation5], %s329
          %s331 = sand.u32 %s37, 1
          %s332 = smul.addr %s331, 48
          %s333 = scalar_lea.vmem [#allocation4], %s332
          %s334 = smul.u32 4, %s27
          %s336 = ssub.s32 768, 768
          %337 = vsyncadd %s330, %s336
          %s338 = smul.addr %s334, 3
          %s339 = smul.addr %s338, 64
          %s340 = scalar_lea.hbm %s1, %s339
          %s341 = sshll.u32 %s333, 4
          %s342 = int_to_ptr.vmem [resolvable:$true] %s341
          %347 = dma.hbm_to_vmem [thread:$0]  %s340, 768, %s342, %s330, 192, 192, 12
        $region24: #{tpu_custom_call.1} parent=19 // pred_fallthru
          _
        // Predicated region
        $region25: #{tpu_custom_call.1} parent=19 // pred_check
          %p348 = pneg %p94
        $region26: #{tpu_custom_call.1} parent=19 // pred_check_branch
          %350 = sbr.rel (%p348) target = $region28
        $region27: #{tpu_custom_call.1} parent=19 // pred_region
          %s351 = sand.u32 %s27, 1
          %s352 = scalar_lea.sflag [#allocation5], %s351
          %s353 = sand.u32 %s84, 1
          %s354 = smul.addr %s353, 32
          %s355 = scalar_lea.vmem [#allocation9], %s354
          %s356 = smul.u32 4, %s27
          %s358 = ssub.s32 512, 512
          %359 = vsyncadd %s352, %s358
          %s360 = smul.addr %s356, 128
          %s361 = scalar_lea.hbm %s3, %s360
          %s362 = sshll.u32 %s355, 4
          %s363 = int_to_ptr.vmem [resolvable:$true] %s362
          %368 = dma.hbm_to_vmem [thread:$0]  %s361, 512, %s363, %s352, 128, 128, 8
        $region28: #{tpu_custom_call.1} parent=19 // pred_fallthru
          _
        // Predicated region
        $region29: #{tpu_custom_call.1} parent=19 // pred_check
          %p369 = pneg %p122
        $region30: #{tpu_custom_call.1} parent=19 // pred_check_branch
          %371 = sbr.rel (%p369) target = $region32
        $region31: #{tpu_custom_call.1} parent=19 // pred_region
          %s372 = sand.u32 %s27, 1
          %s373 = scalar_lea.sflag [#allocation5], %s372
          %s374 = sand.u32 %s112, 1
          %s375 = smul.addr %s374, 64
          %s376 = scalar_lea.vmem [#allocation10], %s375
          %s377 = sld [smem:[#allocation3 + %s27]]
          %s379 = ssub.s32 1024, 1024
          %380 = vsyncadd %s373, %s379
          %s381 = smul.addr %s377, 16
          %s382 = smul.addr %s381, 64
          %s383 = scalar_lea.hbm %s4, %s382
          %s384 = sshll.u32 %s376, 4
          %s385 = int_to_ptr.vmem [resolvable:$true] %s384
          %390 = dma.hbm_to_vmem [thread:$0]  %s383, 1024, %s385, %s373, 64, 64, 4
        $region32: #{tpu_custom_call.1} parent=19 // pred_fallthru
          _
        // Predicated region
        $region33: #{tpu_custom_call.1} parent=19 // pred_check
          %p391 = pneg %p150
        $region34: #{tpu_custom_call.1} parent=19 // pred_check_branch
          %393 = sbr.rel (%p391) target = $region36
        $region35: #{tpu_custom_call.1} parent=19 // pred_region
          %s394 = sld [smem:[#allocation3 + %s27]]
          %p395 = scmp.lt.s32.totalorder %s394, 2
          %s396 = scalar_select %p395, %s394, 2
          %s397 = scalar_lea.vmem %s5, %s396
          %s398 = sld [smem:[#allocation3 + %s27]]
        $region36: #{tpu_custom_call.1} parent=19 // pred_fallthru
          _
        // Predicated region
        $region37: #{tpu_custom_call.1} parent=19 // pred_check
          %p399 = pneg %p178
        $region38: #{tpu_custom_call.1} parent=19 // pred_check_branch
          %401 = sbr.rel (%p399) target = $region40
        $region39: #{tpu_custom_call.1} parent=19 // pred_region
          %s402 = sand.u32 %s27, 1
          %s403 = scalar_lea.sflag [#allocation5], %s402
          %s404 = sand.u32 %s168, 1
          %s405 = smul.addr %s404, 64
          %s406 = scalar_lea.vmem [#allocation11], %s405
          %s407 = sld [smem:[#allocation3 + %s27]]
          %s409 = ssub.s32 1024, 1024
          %410 = vsyncadd %s403, %s409
          %s411 = smul.addr %s407, 16
          %s412 = smul.addr %s411, 64
          %s413 = scalar_lea.hbm %s6, %s412
          %s414 = sshll.u32 %s406, 4
          %s415 = int_to_ptr.vmem [resolvable:$true] %s414
          %420 = dma.hbm_to_vmem [thread:$0]  %s413, 1024, %s415, %s403, 64, 64, 4
        $region40: #{tpu_custom_call.1} parent=19 // pred_fallthru
          _
        // Predicated region
        $region41: #{tpu_custom_call.1} parent=19 // pred_check
          %p421 = pneg %p206
        $region42: #{tpu_custom_call.1} parent=19 // pred_check_branch
          %423 = sbr.rel (%p421) target = $region44
        $region43: #{tpu_custom_call.1} parent=19 // pred_region
          %s424 = sld [smem:[#allocation3 + %s27]]
          %p425 = scmp.lt.s32.totalorder %s424, 2
          %s426 = scalar_select %p425, %s424, 2
          %s427 = scalar_lea.vmem %s7, %s426
          %s428 = sld [smem:[#allocation3 + %s27]]
        $region44: #{tpu_custom_call.1} parent=19 // pred_fallthru
          _
        // Predicated region
        $region45: #{tpu_custom_call.1} parent=19 // pred_check
          %p429 = pneg %p234
        $region46: #{tpu_custom_call.1} parent=19 // pred_check_branch
          %431 = sbr.rel (%p429) target = $region48
        $region47: #{tpu_custom_call.1} parent=19 // pred_region
          %s432 = sand.u32 %s27, 1
          %s433 = scalar_lea.sflag [#allocation5], %s432
          %s434 = sand.u32 %s224, 1
          %s435 = smul.addr %s434, 64
          %s436 = scalar_lea.vmem [#allocation12], %s435
          %s437 = sld [smem:[#allocation3 + %s27]]
          %s439 = ssub.s32 1024, 1024
          %440 = vsyncadd %s433, %s439
          %s441 = smul.addr %s437, 16
          %s442 = smul.addr %s441, 64
          %s443 = scalar_lea.hbm %s8, %s442
          %s444 = sshll.u32 %s436, 4
          %s445 = int_to_ptr.vmem [resolvable:$true] %s444
          %450 = dma.hbm_to_vmem [thread:$0]  %s443, 1024, %s445, %s433, 64, 64, 4
        $region48: #{tpu_custom_call.1} parent=19 // pred_fallthru
          _
        // Predicated region
        $region49: #{tpu_custom_call.1} parent=19 // pred_check
          %p451 = pneg %p262
        $region50: #{tpu_custom_call.1} parent=19 // pred_check_branch
          %453 = sbr.rel (%p451) target = $region52
        $region51: #{tpu_custom_call.1} parent=19 // pred_region
          %s454 = sld [smem:[#allocation3 + %s27]]
          %p455 = scmp.lt.s32.totalorder %s454, 2
          %s456 = scalar_select %p455, %s454, 2
          %s457 = scalar_lea.vmem %s9, %s456
          %s458 = sld [smem:[#allocation3 + %s27]]
        $region52: #{tpu_custom_call.1} parent=19 // pred_fallthru
          _
      $region20: #{tpu_custom_call.1} parent=5 // pred_fallthru
        _
      %p459 = scmp.le.s32.totalorder 1, %s27
      %p460 = scmp.lt.s32.totalorder %s27, 4
      %p461 = pnand %p459, %p460
      %p462 = pneg %p461
      // Predicated region
      $region53: #{tpu_custom_call.1} parent=5 // pred_check
        _
      $region54: #{tpu_custom_call.1} parent=5 // pred_check_branch
        %464 = sbr.rel (%p461) target = $region56
      $region55: #{tpu_custom_call.1} parent=5 // pred_region
        %s465 = ssub.s32 %s27, 1
        %s466 = sand.u32 %s32, 1
        %s467 = scalar_lea.sflag [#allocation5], %s466
        %s468 = sand.u32 %s40, 1
        %s469 = smul.addr %s468, 48
        %s470 = scalar_lea.vmem [#allocation4], %s469
        // Predicated region
        $region57: #{tpu_custom_call.1} parent=55 // pred_check
          %p471 = pneg %p53
        $region58: #{tpu_custom_call.1} parent=55 // pred_check_branch
          %473 = sbr.rel (%p471) target = $region60
        $region59: #{tpu_custom_call.1} parent=55 // pred_region
          %474 = dma.done %s467, 768
        $region60: #{tpu_custom_call.1} parent=55 // pred_fallthru
          _
        // Predicated region
        $region61: #{tpu_custom_call.1} parent=55 // pred_check
          %p475 = pneg %p74
        $region62: #{tpu_custom_call.1} parent=55 // pred_check_branch
          %477 = sbr.rel (%p475) target = $region64
        $region63: #{tpu_custom_call.1} parent=55 // pred_region
          %478 = dma.done [#allocation8], 3072
        $region64: #{tpu_custom_call.1} parent=55 // pred_fallthru
          _
        %s479 = sand.u32 %s32, 1
        %s480 = scalar_lea.sflag [#allocation5], %s479
        %s481 = sand.u32 %s87, 1
        %s482 = smul.addr %s481, 32
        %s483 = scalar_lea.vmem [#allocation9], %s482
        // Predicated region
        $region65: #{tpu_custom_call.1} parent=55 // pred_check
          %p484 = pneg %p100
        $region66: #{tpu_custom_call.1} parent=55 // pred_check_branch
          %486 = sbr.rel (%p484) target = $region68
        $region67: #{tpu_custom_call.1} parent=55 // pred_region
          %487 = dma.done %s480, 512
        $region68: #{tpu_custom_call.1} parent=55 // pred_fallthru
          _
        %s488 = sand.u32 %s32, 1
        %s489 = scalar_lea.sflag [#allocation5], %s488
        %s490 = sand.u32 %s115, 1
        %s491 = smul.addr %s490, 64
        %s492 = scalar_lea.vmem [#allocation10], %s491
        // Predicated region
        $region69: #{tpu_custom_call.1} parent=55 // pred_check
          %p493 = pneg %p128
        $region70: #{tpu_custom_call.1} parent=55 // pred_check_branch
          %495 = sbr.rel (%p493) target = $region72
        $region71: #{tpu_custom_call.1} parent=55 // pred_region
          %496 = dma.done %s489, 1024
        $region72: #{tpu_custom_call.1} parent=55 // pred_fallthru
          _
        %s497 = sand.u32 %s32, 1
        %s498 = scalar_lea.sflag [#allocation5], %s497
        %s499 = sand.u32 %s171, 1
        %s500 = smul.addr %s499, 64
        %s501 = scalar_lea.vmem [#allocation11], %s500
        // Predicated region
        $region73: #{tpu_custom_call.1} parent=55 // pred_check
          %p502 = pneg %p184
        $region74: #{tpu_custom_call.1} parent=55 // pred_check_branch
          %504 = sbr.rel (%p502) target = $region76
        $region75: #{tpu_custom_call.1} parent=55 // pred_region
          %505 = dma.done %s498, 1024
        $region76: #{tpu_custom_call.1} parent=55 // pred_fallthru
          _
        %s506 = sand.u32 %s32, 1
        %s507 = scalar_lea.sflag [#allocation5], %s506
        %s508 = sand.u32 %s227, 1
        %s509 = smul.addr %s508, 64
        %s510 = scalar_lea.vmem [#allocation12], %s509
        // Predicated region
        $region77: #{tpu_custom_call.1} parent=55 // pred_check
          %p511 = pneg %p240
        $region78: #{tpu_custom_call.1} parent=55 // pred_check_branch
          %513 = sbr.rel (%p511) target = $region80
        $region79: #{tpu_custom_call.1} parent=55 // pred_region
          %514 = dma.done %s507, 1024
        $region80: #{tpu_custom_call.1} parent=55 // pred_fallthru
          _
        %s515 = sand.u32 %s32, 1
        %s516 = scalar_lea.sflag [#allocation5], %s515
        %s517 = sand.u32 %s40, 1
        %s518 = smul.addr %s517, 48
        %s519 = scalar_lea.vmem [#allocation4], %s518
        %p520 = pneg %p53
        %p521 = pneg %p50
        %p522 = pneg %p74
        %p523 = pneg %p71
        %s524 = sand.u32 %s32, 1
        %s525 = scalar_lea.sflag [#allocation5], %s524
        %s526 = sand.u32 %s87, 1
        %s527 = smul.addr %s526, 32
        %s528 = scalar_lea.vmem [#allocation9], %s527
        %p529 = pneg %p100
        %p530 = pneg %p97
        %s531 = sand.u32 %s32, 1
        %s532 = scalar_lea.sflag [#allocation5], %s531
        %s533 = sand.u32 %s115, 1
        %s534 = smul.addr %s533, 64
        %s535 = scalar_lea.vmem [#allocation10], %s534
        %p536 = pneg %p128
        %p537 = pneg %p125
        %s538 = sld [smem:[#allocation3 + %s32]]
        %p539 = scmp.lt.s32.totalorder %s538, 2
        %s540 = scalar_select %p539, %s538, 2
        %s541 = scalar_lea.vmem %s5, %s540
        %p542 = pneg %p156
        %p543 = pneg %p153
        %s544 = sand.u32 %s32, 1
        %s545 = scalar_lea.sflag [#allocation5], %s544
        %s546 = sand.u32 %s171, 1
        %s547 = smul.addr %s546, 64
        %s548 = scalar_lea.vmem [#allocation11], %s547
        %p549 = pneg %p184
        %p550 = pneg %p181
        %s551 = sld [smem:[#allocation3 + %s32]]
        %p552 = scmp.lt.s32.totalorder %s551, 2
        %s553 = scalar_select %p552, %s551, 2
        %s554 = scalar_lea.vmem %s7, %s553
        %p555 = pneg %p212
        %p556 = pneg %p209
        %s557 = sand.u32 %s32, 1
        %s558 = scalar_lea.sflag [#allocation5], %s557
        %s559 = sand.u32 %s227, 1
        %s560 = smul.addr %s559, 64
        %s561 = scalar_lea.vmem [#allocation12], %s560
        %p562 = pneg %p240
        %p563 = pneg %p237
        %s564 = sld [smem:[#allocation3 + %s32]]
        %p565 = scmp.lt.s32.totalorder %s564, 2
        %s566 = scalar_select %p565, %s564, 2
        %s567 = scalar_lea.vmem %s9, %s566
        %p568 = pneg %p268
        %p569 = pneg %p265
        %p570 = pneg %p294
        %p571 = pneg %p291
        %s572 = sand.u32 %s281, 1
        %s573 = scalar_lea.sflag [#allocation6], %s572
        %s574 = sand.u32 %s281, 1
        %s575 = smul.addr %s574, 32
        %s576 = scalar_lea.vmem [#allocation13], %s575
        %s577 = smul.u32 4, %s32
        %s578 = smul.u32 4, %s32
        %s579 = sld [smem:[#allocation3 + %s32]]
        %s580 = sld [smem:[#allocation3 + %s32]]
        %p581 = scmp.lt.s32.totalorder %s580, 2
        %s582 = scalar_select %p581, %s580, 2
        %s583 = scalar_lea.vmem %s5, %s582
        %s584 = sld [smem:[#allocation3 + %s32]]
        %s585 = sld [smem:[#allocation3 + %s32]]
        %s586 = sld [smem:[#allocation3 + %s32]]
        %p587 = scmp.lt.s32.totalorder %s586, 2
        %s588 = scalar_select %p587, %s586, 2
        %s589 = scalar_lea.vmem %s7, %s588
        %s590 = sld [smem:[#allocation3 + %s32]]
        %s591 = sld [smem:[#allocation3 + %s32]]
        %s592 = sld [smem:[#allocation3 + %s32]]
        %p593 = scmp.lt.s32.totalorder %s592, 2
        %s594 = scalar_select %p593, %s592, 2
        %s595 = scalar_lea.vmem %s9, %s594
        %s596 = sld [smem:[#allocation3 + %s32]]
        %s597 = smul.u32 4, %s32
        %v599 = vld [vmem:[%s470] sm:$0xff]
        %v600 = vld [vmem:[%s470 + $0x8] sm:$0xf]
        %v601 = vld [vmem:[%s470 + $0xc] sm:$0xff]
        %v602 = vld [vmem:[%s470 + $0x14] sm:$0xf]
        %v603 = vld [vmem:[%s470 + $0x18] sm:$0xff]
        %v604 = vld [vmem:[%s470 + $0x20] sm:$0xf]
        %v605 = vld [vmem:[%s470 + $0x24] sm:$0xff]
        %v606 = vld [vmem:[%s470 + $0x2c] sm:$0xf]
        %v607 = vld [vmem:[#allocation7] sm:$0xf]
        %v608 = vld [vmem:[#allocation7 + $0x4] sm:$0xf]
        %v609 = vld [vmem:[#allocation7 + $0x8] sm:$0xf]
        %v610 = vld [vmem:[#allocation7 + $0xc] sm:$0xf]
        %v611 = vld [vmem:[#allocation7 + $0x10] sm:$0xf]
        %v612 = vld [vmem:[#allocation7 + $0x14] sm:$0xf]
        %v613 = vld [vmem:[#allocation7 + $0x18] sm:$0xf]
        %v614 = vld [vmem:[#allocation7 + $0x1c] sm:$0xf]
        %v615 = vld [vmem:[#allocation7 + $0x20] sm:$0xf]
        %v616 = vld [vmem:[#allocation7 + $0x24] sm:$0xf]
        %v617 = vld [vmem:[#allocation7 + $0x28] sm:$0xf]
        %v618 = vld [vmem:[#allocation7 + $0x2c] sm:$0xf]
        %v619 = vld [vmem:[#allocation7 + $0x30] sm:$0xf]
        %v620 = vld [vmem:[#allocation7 + $0x34] sm:$0xf]
        %v621 = vld [vmem:[#allocation7 + $0x38] sm:$0xf]
        %v622 = vld [vmem:[#allocation7 + $0x3c] sm:$0xf]
        %v623 = vld [vmem:[#allocation7 + $0x40] sm:$0xf]
        %v624 = vld [vmem:[#allocation7 + $0x44] sm:$0xf]
        %v625 = vld [vmem:[#allocation7 + $0x48] sm:$0xf]
        %v626 = vld [vmem:[#allocation7 + $0x4c] sm:$0xf]
        %v627 = vld [vmem:[#allocation7 + $0x50] sm:$0xf]
        %v628 = vld [vmem:[#allocation7 + $0x54] sm:$0xf]
        %v629 = vld [vmem:[#allocation7 + $0x58] sm:$0xf]
        %v630 = vld [vmem:[#allocation7 + $0x5c] sm:$0xf]
        %v631 = vld [vmem:[#allocation7 + $0x60] sm:$0xf]
        %v632 = vld [vmem:[#allocation7 + $0x64] sm:$0xf]
        %v633 = vld [vmem:[#allocation7 + $0x68] sm:$0xf]
        %v634 = vld [vmem:[#allocation7 + $0x6c] sm:$0xf]
        %v635 = vld [vmem:[#allocation7 + $0x70] sm:$0xf]
        %v636 = vld [vmem:[#allocation7 + $0x74] sm:$0xf]
        %v637 = vld [vmem:[#allocation7 + $0x78] sm:$0xf]
        %v638 = vld [vmem:[#allocation7 + $0x7c] sm:$0xf]
        %v639 = vld [vmem:[#allocation7 + $0x80] sm:$0xf]
        %v640 = vld [vmem:[#allocation7 + $0x84] sm:$0xf]
        %v641 = vld [vmem:[#allocation7 + $0x88] sm:$0xf]
        %v642 = vld [vmem:[#allocation7 + $0x8c] sm:$0xf]
        %v643 = vld [vmem:[#allocation7 + $0x90] sm:$0xf]
        %v644 = vld [vmem:[#allocation7 + $0x94] sm:$0xf]
        %v645 = vld [vmem:[#allocation7 + $0x98] sm:$0xf]
        %v646 = vld [vmem:[#allocation7 + $0x9c] sm:$0xf]
        %v647 = vld [vmem:[#allocation7 + $0xa0] sm:$0xf]
        %v648 = vld [vmem:[#allocation7 + $0xa4] sm:$0xf]
        %v649 = vld [vmem:[#allocation7 + $0xa8] sm:$0xf]
        %v650 = vld [vmem:[#allocation7 + $0xac] sm:$0xf]
        %v651 = vld [vmem:[#allocation7 + $0xb0] sm:$0xf]
        %v652 = vld [vmem:[#allocation7 + $0xb4] sm:$0xf]
        %v653 = vld [vmem:[#allocation7 + $0xb8] sm:$0xf]
        %v654 = vld [vmem:[#allocation7 + $0xbc] sm:$0xf]
        %v655 = vld [vmem:[%s483] sm:$0xff]
        %v656 = vld [vmem:[%s483 + $0x8] sm:$0xff]
        %v657 = vld [vmem:[%s483 + $0x10] sm:$0xff]
        %v658 = vld [vmem:[%s483 + $0x18] sm:$0xff]
        %v667 = vunpack.c.l.b16 %v599
        %v668 = vunpack.c.h.b16 %v599
        %v669 = vunpack.c.l.b16 %v600
        %v670 = vunpack.c.l.b16 %v601
        %v671 = vunpack.c.h.b16 %v601
        %v672 = vunpack.c.l.b16 %v602
        %v673 = vunpack.c.l.b16 %v603
        %v674 = vunpack.c.h.b16 %v603
        %v675 = vunpack.c.l.b16 %v604
        %v676 = vunpack.c.l.b16 %v605
        %v677 = vunpack.c.h.b16 %v605
        %v678 = vunpack.c.l.b16 %v606
        %v679 = vpack.c.b16 %v670, %v667
        %v680 = vpack.c.b16 %v671, %v668
        %v681 = vpack.c.b16 %v672, %v669
        %v682 = vpack.c.b16 %v676, %v673
        %v683 = vpack.c.b16 %v677, %v674
        %v684 = vpack.c.b16 %v678, %v675
        %v739 = vunpack.c.l.b16 %v607
        %v740 = vunpack.c.l.b16 %v608
        %v741 = vunpack.c.l.b16 %v609
        %v742 = vunpack.c.l.b16 %v610
        %v743 = vunpack.c.l.b16 %v611
        %v744 = vunpack.c.l.b16 %v612
        %v745 = vunpack.c.l.b16 %v613
        %v746 = vunpack.c.l.b16 %v614
        %v747 = vunpack.c.l.b16 %v615
        %v748 = vunpack.c.l.b16 %v616
        %v749 = vunpack.c.l.b16 %v617
        %v750 = vunpack.c.l.b16 %v618
        %v751 = vunpack.c.l.b16 %v619
        %v752 = vunpack.c.l.b16 %v620
        %v753 = vunpack.c.l.b16 %v621
        %v754 = vunpack.c.l.b16 %v622
        %v755 = vunpack.c.l.b16 %v623
        %v756 = vunpack.c.l.b16 %v624
        %v757 = vunpack.c.l.b16 %v625
        %v758 = vunpack.c.l.b16 %v626
        %v759 = vunpack.c.l.b16 %v627
        %v760 = vunpack.c.l.b16 %v628
        %v761 = vunpack.c.l.b16 %v629
        %v762 = vunpack.c.l.b16 %v630
        %v763 = vunpack.c.l.b16 %v631
        %v764 = vunpack.c.l.b16 %v632
        %v765 = vunpack.c.l.b16 %v633
        %v766 = vunpack.c.l.b16 %v634
        %v767 = vunpack.c.l.b16 %v635
        %v768 = vunpack.c.l.b16 %v636
        %v769 = vunpack.c.l.b16 %v637
        %v770 = vunpack.c.l.b16 %v638
        %v771 = vunpack.c.l.b16 %v639
        %v772 = vunpack.c.l.b16 %v640
        %v773 = vunpack.c.l.b16 %v641
        %v774 = vunpack.c.l.b16 %v642
        %v775 = vunpack.c.l.b16 %v643
        %v776 = vunpack.c.l.b16 %v644
        %v777 = vunpack.c.l.b16 %v645
        %v778 = vunpack.c.l.b16 %v646
        %v779 = vunpack.c.l.b16 %v647
        %v780 = vunpack.c.l.b16 %v648
        %v781 = vunpack.c.l.b16 %v649
        %v782 = vunpack.c.l.b16 %v650
        %v783 = vunpack.c.l.b16 %v651
        %v784 = vunpack.c.l.b16 %v652
        %v785 = vunpack.c.l.b16 %v653
        %v786 = vunpack.c.l.b16 %v654
        %v787 = vpack.c.b16 %v740, %v739
        %v788 = vpack.c.b16 %v742, %v741
        %v789 = vpack.c.b16 %v744, %v743
        %v790 = vpack.c.b16 %v746, %v745
        %v791 = vpack.c.b16 %v748, %v747
        %v792 = vpack.c.b16 %v750, %v749
        %v793 = vpack.c.b16 %v752, %v751
        %v794 = vpack.c.b16 %v754, %v753
        %v795 = vpack.c.b16 %v756, %v755
        %v796 = vpack.c.b16 %v758, %v757
        %v797 = vpack.c.b16 %v760, %v759
        %v798 = vpack.c.b16 %v762, %v761
        %v799 = vpack.c.b16 %v764, %v763
        %v800 = vpack.c.b16 %v766, %v765
        %v801 = vpack.c.b16 %v768, %v767
        %v802 = vpack.c.b16 %v770, %v769
        %v803 = vpack.c.b16 %v772, %v771
        %v804 = vpack.c.b16 %v774, %v773
        %v805 = vpack.c.b16 %v776, %v775
        %v806 = vpack.c.b16 %v778, %v777
        %v807 = vpack.c.b16 %v780, %v779
        %v808 = vpack.c.b16 %v782, %v781
        %v809 = vpack.c.b16 %v784, %v783
        %v810 = vpack.c.b16 %v786, %v785
        %835 = vmatprep.subr.bf16.mxu0 0
        %836 = vmatpush1.bf16.msra.mxu0 %v787
        %837 = vmatprep.subr.bf16.mxu0 0
        %838 = vmatpush1.bf16.msra.mxu0 %v788
        %839 = vmatprep.subr.bf16.mxu0 0
        %840 = vmatpush1.bf16.msra.mxu0 %v789
        %841 = vmatprep.subr.bf16.mxu0 0
        %842 = vmatpush1.bf16.msra.mxu0 %v790
        %843 = vmatprep.subr.bf16.mxu0 0
        %844 = vmatpush1.bf16.msra.mxu0 %v791
        %845 = vmatprep.subr.bf16.mxu0 0
        %846 = vmatpush1.bf16.msra.mxu0 %v792
        %847 = vmatprep.subr.bf16.mxu0 0
        %848 = vmatpush1.bf16.msra.mxu0 %v793
        %849 = vmatprep.subr.bf16.mxu0 0
        %850 = vmatpush1.bf16.msra.mxu0 %v794
        %851 = vmatprep.subr.bf16.mxu0 0
        %852 = vmatpush1.bf16.msra.mxu0 %v795
        %853 = vmatprep.subr.bf16.mxu0 0
        %854 = vmatpush1.bf16.msra.mxu0 %v796
        %855 = vmatprep.subr.bf16.mxu0 0
        %856 = vmatpush1.bf16.msra.mxu0 %v797
        %857 = vmatprep.subr.bf16.mxu0 0
        %858 = vmatpush1.bf16.msra.mxu0 %v798
        %859 = vmatprep.subr.bf16.mxu0 0
        %860 = vmatpush1.bf16.msra.mxu0 %v799
        %861 = vmatprep.subr.bf16.mxu0 0
        %862 = vmatpush1.bf16.msra.mxu0 %v800
        %863 = vmatprep.subr.bf16.mxu0 0
        %864 = vmatpush1.bf16.msra.mxu0 %v801
        %865 = vmatprep.subr.bf16.mxu0 0
        %866 = vmatpush1.bf16.msra.mxu0 %v802
        %867 = vmatprep.mubr.bf16.mxu0 %v680
        %868 = vmatmul.mubr.bf16.gmra.mrb[0].mxu0 %v679
        %v869 = vpop.f32.mrb[0].mxu0
        %v870 = vadd.f32 %v655, %v869
        %v871 = vpop.f32.mrb[0].mxu0
        %v872 = vpop.f32.mrb[0].mxu0
        %v873 = vadd.f32 %v656, %v872
        %v874 = vpop.f32.mrb[0].mxu0
        %875 = vmatprep.mubr.bf16.mxu0 %v683
        %876 = vmatmul.mubr.bf16.gmra.mrb[0].mxu0 %v682
        %v877 = vpop.f32.mrb[0].mxu0
        %v878 = vadd.f32 %v657, %v877
        %v879 = vpop.f32.mrb[0].mxu0
        %v880 = vpop.f32.mrb[0].mxu0
        %v881 = vadd.f32 %v658, %v880
        %v882 = vpop.f32.mrb[0].mxu0
        %883 = vdwg.mxu0
        %884 = vmatprep.subr.bf16.mxu0 0
        %885 = vmatpush1.bf16.msra.mxu0 %v803
        %886 = vmatprep.subr.bf16.mxu0 0
        %887 = vmatpush1.bf16.msra.mxu0 %v804
        %888 = vmatprep.subr.bf16.mxu0 0
        %889 = vmatpush1.bf16.msra.mxu0 %v805
        %890 = vmatprep.subr.bf16.mxu0 0
        %891 = vmatpush1.bf16.msra.mxu0 %v806
        %892 = vmatprep.subr.bf16.mxu0 0
        %893 = vmatpush1.bf16.msra.mxu0 %v807
        %894 = vmatprep.subr.bf16.mxu0 0
        %895 = vmatpush1.bf16.msra.mxu0 %v808
        %896 = vmatprep.subr.bf16.mxu0 0
        %897 = vmatpush1.bf16.msra.mxu0 %v809
        %898 = vmatprep.subr.bf16.mxu0 0
        %899 = vmatpush1.bf16.msra.mxu0 %v810
        %900 = vmatprep.subr.bf16.mxu0 0
        %901 = vmatpush1.bf16.msra.mxu0 0
        %902 = vmatprep.subr.bf16.mxu0 0
        %903 = vmatpush1.bf16.msra.mxu0 0
        %904 = vmatprep.subr.bf16.mxu0 0
        %905 = vmatpush1.bf16.msra.mxu0 0
        %906 = vmatprep.subr.bf16.mxu0 0
        %907 = vmatpush1.bf16.msra.mxu0 0
        %908 = vmatprep.subr.bf16.mxu0 0
        %909 = vmatpush1.bf16.msra.mxu0 0
        %910 = vmatprep.subr.bf16.mxu0 0
        %911 = vmatpush1.bf16.msra.mxu0 0
        %912 = vmatprep.subr.bf16.mxu0 0
        %913 = vmatpush1.bf16.msra.mxu0 0
        %914 = vmatprep.subr.bf16.mxu0 0
        %915 = vmatpush1.bf16.msra.mxu0 0
        %916 = vmatprep.mubr.bf16.mxu0 0
        %917 = vmatmul.mubr.bf16.gmra.mrb[0].mxu0 %v681
        %v918 = vpop.f32.mrb[0].mxu0
        %v919 = vadd.f32 %v870, %v918
        %v920 = vpop.f32.mrb[0].mxu0
        %v921 = vpop.f32.mrb[0].mxu0
        %v922 = vadd.f32 %v873, %v921
        %v923 = vpop.f32.mrb[0].mxu0
        %924 = vmatprep.mubr.bf16.mxu0 0
        %925 = vmatmul.mubr.bf16.gmra.mrb[0].mxu0 %v684
        %v926 = vpop.f32.mrb[0].mxu0
        %v927 = vadd.f32 %v878, %v926
        %v928 = vpop.f32.mrb[0].mxu0
        %v929 = vpop.f32.mrb[0].mxu0
        %v930 = vadd.f32 %v881, %v929
        %v931 = vpop.f32.mrb[0].mxu0
        %932 = vdwg.mxu0
        %v933 = vpack.c.bf16 %v922, %v919
        %v934 = vpack.c.bf16 %v930, %v927
        %v935 = vld [vmem:[%s492] sm:$0xf]
        %v936 = vld [vmem:[%s492 + $0x4] sm:$0xf]
        %v937 = vld [vmem:[%s492 + $0x8] sm:$0xf]
        %v938 = vld [vmem:[%s492 + $0xc] sm:$0xf]
        %v939 = vld [vmem:[%s492 + $0x10] sm:$0xf]
        %v940 = vld [vmem:[%s492 + $0x14] sm:$0xf]
        %v941 = vld [vmem:[%s492 + $0x18] sm:$0xf]
        %v942 = vld [vmem:[%s492 + $0x1c] sm:$0xf]
        %v943 = vld [vmem:[%s492 + $0x20] sm:$0xf]
        %v944 = vld [vmem:[%s492 + $0x24] sm:$0xf]
        %v945 = vld [vmem:[%s492 + $0x28] sm:$0xf]
        %v946 = vld [vmem:[%s492 + $0x2c] sm:$0xf]
        %v947 = vld [vmem:[%s492 + $0x30] sm:$0xf]
        %v948 = vld [vmem:[%s492 + $0x34] sm:$0xf]
        %v949 = vld [vmem:[%s492 + $0x38] sm:$0xf]
        %v950 = vld [vmem:[%s492 + $0x3c] sm:$0xf]
        %v951 = vld [vmem:[%s583] sm:$0x1]
        %v953 = vlaneseq
        %v954 = vshrl.u32 %v953, 7
        %v955 = vsub.s32 0, %v954
        %v956 = vrot.slane %v951, %v955
        %v974 = vunpack.c.l.b16 %v935
        %v975 = vunpack.c.l.b16 %v936
        %v976 = vunpack.c.l.b16 %v937
        %v977 = vunpack.c.l.b16 %v938
        %v978 = vunpack.c.l.b16 %v939
        %v979 = vunpack.c.l.b16 %v940
        %v980 = vunpack.c.l.b16 %v941
        %v981 = vunpack.c.l.b16 %v942
        %v982 = vunpack.c.l.b16 %v943
        %v983 = vunpack.c.l.b16 %v944
        %v984 = vunpack.c.l.b16 %v945
        %v985 = vunpack.c.l.b16 %v946
        %v986 = vunpack.c.l.b16 %v947
        %v987 = vunpack.c.l.b16 %v948
        %v988 = vunpack.c.l.b16 %v949
        %v989 = vunpack.c.l.b16 %v950
        %v990 = vpack.c.b16 %v975, %v974
        %v991 = vpack.c.b16 %v977, %v976
        %v992 = vpack.c.b16 %v979, %v978
        %v993 = vpack.c.b16 %v981, %v980
        %v994 = vpack.c.b16 %v983, %v982
        %v995 = vpack.c.b16 %v985, %v984
        %v996 = vpack.c.b16 %v987, %v986
        %v997 = vpack.c.b16 %v989, %v988
        %1006 = vmatprep.subr.bf16.mxu0 0
        %1007 = vmatpush1.bf16.msra.mxu0 %v990
        %1008 = vmatprep.subr.bf16.mxu0 0
        %1009 = vmatpush1.bf16.msra.mxu0 %v991
        %1010 = vmatprep.subr.bf16.mxu0 0
        %1011 = vmatpush1.bf16.msra.mxu0 %v992
        %1012 = vmatprep.subr.bf16.mxu0 0
        %1013 = vmatpush1.bf16.msra.mxu0 %v993
        %1014 = vmatprep.subr.bf16.mxu0 0
        %1015 = vmatpush1.bf16.msra.mxu0 %v994
        %1016 = vmatprep.subr.bf16.mxu0 0
        %1017 = vmatpush1.bf16.msra.mxu0 %v995
        %1018 = vmatprep.subr.bf16.mxu0 0
        %1019 = vmatpush1.bf16.msra.mxu0 %v996
        %1020 = vmatprep.subr.bf16.mxu0 0
        %1021 = vmatpush1.bf16.msra.mxu0 %v997
        %1022 = vmatprep.subr.bf16.mxu0 0
        %1023 = vmatpush1.bf16.msra.mxu0 0
        %1024 = vmatprep.subr.bf16.mxu0 0
        %1025 = vmatpush1.bf16.msra.mxu0 0
        %1026 = vmatprep.subr.bf16.mxu0 0
        %1027 = vmatpush1.bf16.msra.mxu0 0
        %1028 = vmatprep.subr.bf16.mxu0 0
        %1029 = vmatpush1.bf16.msra.mxu0 0
        %1030 = vmatprep.subr.bf16.mxu0 0
        %1031 = vmatpush1.bf16.msra.mxu0 0
        %1032 = vmatprep.subr.bf16.mxu0 0
        %1033 = vmatpush1.bf16.msra.mxu0 0
        %1034 = vmatprep.subr.bf16.mxu0 0
        %1035 = vmatpush1.bf16.msra.mxu0 0
        %1036 = vmatprep.subr.bf16.mxu0 0
        %1037 = vmatpush1.bf16.msra.mxu0 0
        %1038 = vmatprep.mubr.bf16.mxu0 0
        %1039 = vmatmul.mubr.bf16.gmra.mrb[0].mxu0 %v933
        %v1040 = vpop.f32.mrb[0].mxu0
        %v1041 = vadd.f32 %v956, %v1040
        %v1042 = vpop.f32.mrb[0].mxu0
        %v1043 = vpop.f32.mrb[0].mxu0
        %v1044 = vadd.f32 %v956, %v1043
        %v1045 = vpop.f32.mrb[0].mxu0
        %1046 = vmatprep.mubr.bf16.mxu0 0
        %1047 = vmatmul.mubr.bf16.gmra.mrb[0].mxu0 %v934
        %v1048 = vpop.f32.mrb[0].mxu0
        %v1049 = vadd.f32 %v956, %v1048
        %v1050 = vpop.f32.mrb[0].mxu0
        %v1051 = vpop.f32.mrb[0].mxu0
        %v1052 = vadd.f32 %v956, %v1051
        %v1053 = vpop.f32.mrb[0].mxu0
        %1054 = vdwg.mxu0
        %v1055 = vmax.f32 %v1041, 0.0
        %v1056 = vmax.f32 %v1044, 0.0
        %v1057 = vmax.f32 %v1049, 0.0
        %v1058 = vmax.f32 %v1052, 0.0
        %v1059 = vpack.c.bf16 %v1056, %v1055
        %v1060 = vpack.c.bf16 %v1058, %v1057
        %v1061 = vld [vmem:[%s501] sm:$0xf]
        %v1062 = vld [vmem:[%s501 + $0x4] sm:$0xf]
        %v1063 = vld [vmem:[%s501 + $0x8] sm:$0xf]
        %v1064 = vld [vmem:[%s501 + $0xc] sm:$0xf]
        %v1065 = vld [vmem:[%s501 + $0x10] sm:$0xf]
        %v1066 = vld [vmem:[%s501 + $0x14] sm:$0xf]
        %v1067 = vld [vmem:[%s501 + $0x18] sm:$0xf]
        %v1068 = vld [vmem:[%s501 + $0x1c] sm:$0xf]
        %v1069 = vld [vmem:[%s501 + $0x20] sm:$0xf]
        %v1070 = vld [vmem:[%s501 + $0x24] sm:$0xf]
        %v1071 = vld [vmem:[%s501 + $0x28] sm:$0xf]
        %v1072 = vld [vmem:[%s501 + $0x2c] sm:$0xf]
        %v1073 = vld [vmem:[%s501 + $0x30] sm:$0xf]
        %v1074 = vld [vmem:[%s501 + $0x34] sm:$0xf]
        %v1075 = vld [vmem:[%s501 + $0x38] sm:$0xf]
        %v1076 = vld [vmem:[%s501 + $0x3c] sm:$0xf]
        %v1077 = vld [vmem:[%s589] sm:$0x1]
        %v1079 = vlaneseq
        %v1080 = vshrl.u32 %v1079, 7
        %v1081 = vsub.s32 0, %v1080
        %v1082 = vrot.slane %v1077, %v1081
        %v1100 = vunpack.c.l.b16 %v1061
        %v1101 = vunpack.c.l.b16 %v1062
        %v1102 = vunpack.c.l.b16 %v1063
        %v1103 = vunpack.c.l.b16 %v1064
        %v1104 = vunpack.c.l.b16 %v1065
        %v1105 = vunpack.c.l.b16 %v1066
        %v1106 = vunpack.c.l.b16 %v1067
        %v1107 = vunpack.c.l.b16 %v1068
        %v1108 = vunpack.c.l.b16 %v1069
        %v1109 = vunpack.c.l.b16 %v1070
        %v1110 = vunpack.c.l.b16 %v1071
        %v1111 = vunpack.c.l.b16 %v1072
        %v1112 = vunpack.c.l.b16 %v1073
        %v1113 = vunpack.c.l.b16 %v1074
        %v1114 = vunpack.c.l.b16 %v1075
        %v1115 = vunpack.c.l.b16 %v1076
        %v1116 = vpack.c.b16 %v1101, %v1100
        %v1117 = vpack.c.b16 %v1103, %v1102
        %v1118 = vpack.c.b16 %v1105, %v1104
        %v1119 = vpack.c.b16 %v1107, %v1106
        %v1120 = vpack.c.b16 %v1109, %v1108
        %v1121 = vpack.c.b16 %v1111, %v1110
        %v1122 = vpack.c.b16 %v1113, %v1112
        %v1123 = vpack.c.b16 %v1115, %v1114
        %1132 = vmatprep.subr.bf16.mxu0 0
        %1133 = vmatpush1.bf16.msra.mxu0 %v1116
        %1134 = vmatprep.subr.bf16.mxu0 0
        %1135 = vmatpush1.bf16.msra.mxu0 %v1117
        %1136 = vmatprep.subr.bf16.mxu0 0
        %1137 = vmatpush1.bf16.msra.mxu0 %v1118
        %1138 = vmatprep.subr.bf16.mxu0 0
        %1139 = vmatpush1.bf16.msra.mxu0 %v1119
        %1140 = vmatprep.subr.bf16.mxu0 0
        %1141 = vmatpush1.bf16.msra.mxu0 %v1120
        %1142 = vmatprep.subr.bf16.mxu0 0
        %1143 = vmatpush1.bf16.msra.mxu0 %v1121
        %1144 = vmatprep.subr.bf16.mxu0 0
        %1145 = vmatpush1.bf16.msra.mxu0 %v1122
        %1146 = vmatprep.subr.bf16.mxu0 0
        %1147 = vmatpush1.bf16.msra.mxu0 %v1123
        %1148 = vmatprep.subr.bf16.mxu0 0
        %1149 = vmatpush1.bf16.msra.mxu0 0
        %1150 = vmatprep.subr.bf16.mxu0 0
        %1151 = vmatpush1.bf16.msra.mxu0 0
        %1152 = vmatprep.subr.bf16.mxu0 0
        %1153 = vmatpush1.bf16.msra.mxu0 0
        %1154 = vmatprep.subr.bf16.mxu0 0
        %1155 = vmatpush1.bf16.msra.mxu0 0
        %1156 = vmatprep.subr.bf16.mxu0 0
        %1157 = vmatpush1.bf16.msra.mxu0 0
        %1158 = vmatprep.subr.bf16.mxu0 0
        %1159 = vmatpush1.bf16.msra.mxu0 0
        %1160 = vmatprep.subr.bf16.mxu0 0
        %1161 = vmatpush1.bf16.msra.mxu0 0
        %1162 = vmatprep.subr.bf16.mxu0 0
        %1163 = vmatpush1.bf16.msra.mxu0 0
        %1164 = vmatprep.mubr.bf16.mxu0 0
        %1165 = vmatmul.mubr.bf16.gmra.mrb[0].mxu0 %v1059
        %v1166 = vpop.f32.mrb[0].mxu0
        %v1167 = vadd.f32 %v1082, %v1166
        %v1168 = vpop.f32.mrb[0].mxu0
        %v1169 = vpop.f32.mrb[0].mxu0
        %v1170 = vadd.f32 %v1082, %v1169
        %v1171 = vpop.f32.mrb[0].mxu0
        %1172 = vmatprep.mubr.bf16.mxu0 0
        %1173 = vmatmul.mubr.bf16.gmra.mrb[0].mxu0 %v1060
        %v1174 = vpop.f32.mrb[0].mxu0
        %v1175 = vadd.f32 %v1082, %v1174
        %v1176 = vpop.f32.mrb[0].mxu0
        %v1177 = vpop.f32.mrb[0].mxu0
        %v1178 = vadd.f32 %v1082, %v1177
        %v1179 = vpop.f32.mrb[0].mxu0
        %1180 = vdwg.mxu0
        %v1181 = vmax.f32 %v1167, 0.0
        %v1182 = vmax.f32 %v1170, 0.0
        %v1183 = vmax.f32 %v1175, 0.0
        %v1184 = vmax.f32 %v1178, 0.0
        %v1185 = vpack.c.bf16 %v1182, %v1181
        %v1186 = vpack.c.bf16 %v1184, %v1183
        %v1187 = vld [vmem:[%s510] sm:$0xf]
        %v1188 = vld [vmem:[%s510 + $0x4] sm:$0xf]
        %v1189 = vld [vmem:[%s510 + $0x8] sm:$0xf]
        %v1190 = vld [vmem:[%s510 + $0xc] sm:$0xf]
        %v1191 = vld [vmem:[%s510 + $0x10] sm:$0xf]
        %v1192 = vld [vmem:[%s510 + $0x14] sm:$0xf]
        %v1193 = vld [vmem:[%s510 + $0x18] sm:$0xf]
        %v1194 = vld [vmem:[%s510 + $0x1c] sm:$0xf]
        %v1195 = vld [vmem:[%s510 + $0x20] sm:$0xf]
        %v1196 = vld [vmem:[%s510 + $0x24] sm:$0xf]
        %v1197 = vld [vmem:[%s510 + $0x28] sm:$0xf]
        %v1198 = vld [vmem:[%s510 + $0x2c] sm:$0xf]
        %v1199 = vld [vmem:[%s510 + $0x30] sm:$0xf]
        %v1200 = vld [vmem:[%s510 + $0x34] sm:$0xf]
        %v1201 = vld [vmem:[%s510 + $0x38] sm:$0xf]
        %v1202 = vld [vmem:[%s510 + $0x3c] sm:$0xf]
        %v1203 = vld [vmem:[%s595] sm:$0x1]
        %v1205 = vlaneseq
        %v1206 = vshrl.u32 %v1205, 7
        %v1207 = vsub.s32 0, %v1206
        %v1208 = vrot.slane %v1203, %v1207
        %v1226 = vunpack.c.l.b16 %v1187
        %v1227 = vunpack.c.l.b16 %v1188
        %v1228 = vunpack.c.l.b16 %v1189
        %v1229 = vunpack.c.l.b16 %v1190
        %v1230 = vunpack.c.l.b16 %v1191
        %v1231 = vunpack.c.l.b16 %v1192
        %v1232 = vunpack.c.l.b16 %v1193
        %v1233 = vunpack.c.l.b16 %v1194
        %v1234 = vunpack.c.l.b16 %v1195
        %v1235 = vunpack.c.l.b16 %v1196
        %v1236 = vunpack.c.l.b16 %v1197
        %v1237 = vunpack.c.l.b16 %v1198
        %v1238 = vunpack.c.l.b16 %v1199
        %v1239 = vunpack.c.l.b16 %v1200
        %v1240 = vunpack.c.l.b16 %v1201
        %v1241 = vunpack.c.l.b16 %v1202
        %v1242 = vpack.c.b16 %v1227, %v1226
        %v1243 = vpack.c.b16 %v1229, %v1228
        %v1244 = vpack.c.b16 %v1231, %v1230
        %v1245 = vpack.c.b16 %v1233, %v1232
        %v1246 = vpack.c.b16 %v1235, %v1234
        %v1247 = vpack.c.b16 %v1237, %v1236
        %v1248 = vpack.c.b16 %v1239, %v1238
        %v1249 = vpack.c.b16 %v1241, %v1240
        %1258 = vmatprep.subr.bf16.mxu0 0
        %1259 = vmatpush1.bf16.msra.mxu0 %v1242
        %1260 = vmatprep.subr.bf16.mxu0 0
        %1261 = vmatpush1.bf16.msra.mxu0 %v1243
        %1262 = vmatprep.subr.bf16.mxu0 0
        %1263 = vmatpush1.bf16.msra.mxu0 %v1244
        %1264 = vmatprep.subr.bf16.mxu0 0
        %1265 = vmatpush1.bf16.msra.mxu0 %v1245
        %1266 = vmatprep.subr.bf16.mxu0 0
        %1267 = vmatpush1.bf16.msra.mxu0 %v1246
        %1268 = vmatprep.subr.bf16.mxu0 0
        %1269 = vmatpush1.bf16.msra.mxu0 %v1247
        %1270 = vmatprep.subr.bf16.mxu0 0
        %1271 = vmatpush1.bf16.msra.mxu0 %v1248
        %1272 = vmatprep.subr.bf16.mxu0 0
        %1273 = vmatpush1.bf16.msra.mxu0 %v1249
        %1274 = vmatprep.subr.bf16.mxu0 0
        %1275 = vmatpush1.bf16.msra.mxu0 0
        %1276 = vmatprep.subr.bf16.mxu0 0
        %1277 = vmatpush1.bf16.msra.mxu0 0
        %1278 = vmatprep.subr.bf16.mxu0 0
        %1279 = vmatpush1.bf16.msra.mxu0 0
        %1280 = vmatprep.subr.bf16.mxu0 0
        %1281 = vmatpush1.bf16.msra.mxu0 0
        %1282 = vmatprep.subr.bf16.mxu0 0
        %1283 = vmatpush1.bf16.msra.mxu0 0
        %1284 = vmatprep.subr.bf16.mxu0 0
        %1285 = vmatpush1.bf16.msra.mxu0 0
        %1286 = vmatprep.subr.bf16.mxu0 0
        %1287 = vmatpush1.bf16.msra.mxu0 0
        %1288 = vmatprep.subr.bf16.mxu0 0
        %1289 = vmatpush1.bf16.msra.mxu0 0
        %1290 = vmatprep.mubr.bf16.mxu0 0
        %1291 = vmatmul.mubr.bf16.gmra.mrb[0].mxu0 %v1185
        %v1292 = vpop.f32.mrb[0].mxu0
        %v1293 = vadd.f32 %v1208, %v1292
        %v1294 = vpop.f32.mrb[0].mxu0
        %v1295 = vpop.f32.mrb[0].mxu0
        %v1296 = vadd.f32 %v1208, %v1295
        %v1297 = vpop.f32.mrb[0].mxu0
        %1298 = vmatprep.mubr.bf16.mxu0 0
        %1299 = vmatmul.mubr.bf16.gmra.mrb[0].mxu0 %v1186
        %v1300 = vpop.f32.mrb[0].mxu0
        %v1301 = vadd.f32 %v1208, %v1300
        %v1302 = vpop.f32.mrb[0].mxu0
        %v1303 = vpop.f32.mrb[0].mxu0
        %v1304 = vadd.f32 %v1208, %v1303
        %v1305 = vpop.f32.mrb[0].mxu0
        %1306 = vdwg.mxu0
        %v1307 = vmax.f32 %v1293, 0.0
        %v1308 = vmax.f32 %v1296, 0.0
        %v1309 = vmax.f32 %v1301, 0.0
        %v1310 = vmax.f32 %v1304, 0.0
        %1311 = vst [vmem:[%s576] sm:$0xff] %v1307
        %1312 = vst [vmem:[%s576 + $0x8] sm:$0xff] %v1308
        %1313 = vst [vmem:[%s576 + $0x10] sm:$0xff] %v1309
        %1314 = vst [vmem:[%s576 + $0x18] sm:$0xff] %v1310
        %s1315 = sand.u32 %s281, 1
        %s1316 = scalar_lea.sflag [#allocation6], %s1315
        %s1317 = sand.u32 %s281, 1
        %s1318 = smul.addr %s1317, 32
        %s1319 = scalar_lea.vmem [#allocation13], %s1318
        // Predicated region
        $region81: #{tpu_custom_call.1} parent=55 // pred_check
          %p1320 = pneg %p291
        $region82: #{tpu_custom_call.1} parent=55 // pred_check_branch
          %1322 = sbr.rel (%p1320) target = $region84
        $region83: #{tpu_custom_call.1} parent=55 // pred_region
          %s1323 = smul.u32 4, %s32
          %s1325 = ssub.s32 512, 512
          %1326 = vsyncadd %s1316, %s1325
          %s1327 = smul.addr %s1323, 128
          %s1328 = scalar_lea.hbm %s10, %s1327
          %s1329 = sshll.u32 %s1319, 4
          %s1330 = int_to_ptr.vmem [resolvable:$true] %s1329
          %1335 = dma.vmem_to_hbm [thread:$0]  %s1330, 512, %s1328, %s1316, 128, 128, 8
        $region84: #{tpu_custom_call.1} parent=55 // pred_fallthru
          _
      $region56: #{tpu_custom_call.1} parent=5 // pred_fallthru
        _
      %p1336 = scmp.le.s32.totalorder 2, %s27
      // Predicated region
      $region85: #{tpu_custom_call.1} parent=5 // pred_check
        %p1337 = pneg %p1336
      $region86: #{tpu_custom_call.1} parent=5 // pred_check_branch
        %1339 = sbr.rel (%p1337) target = $region88
      $region87: #{tpu_custom_call.1} parent=5 // pred_region
        %s1340 = ssub.s32 %s27, 2
        // Predicated region
        $region89: #{tpu_custom_call.1} parent=87 // pred_check
          %p1341 = pneg %p297
        $region90: #{tpu_custom_call.1} parent=87 // pred_check_branch
          %1343 = sbr.rel (%p1341) target = $region92
        $region91: #{tpu_custom_call.1} parent=87 // pred_region
          %s1344 = sand.u32 %s282, 1
          %s1345 = scalar_lea.sflag [#allocation6], %s1344
          %s1346 = sand.u32 %s282, 1
          %s1347 = smul.addr %s1346, 32
          %s1348 = scalar_lea.vmem [#allocation13], %s1347
          %1349 = dma.done %s1345, 512
        $region92: #{tpu_custom_call.1} parent=87 // pred_fallthru
          _
      $region88: #{tpu_custom_call.1} parent=5 // pred_fallthru
        _
    $region6: #{tpu_custom_call.1} parent=1 // loop_footer
      %s31 = sadd.s32 1, %s27
    $region7: #{tpu_custom_call.1} parent=1 // loop_footer_branch
      %26 = sbr.rel target = $region3
    $region8: #{tpu_custom_call.1} parent=1 // loop_exit
      _
    %1350 = vsyncpa [#allocation5], 1
    %s1351 = scalar_lea.sflag [#allocation5], 1
    %1352 = vsyncpa %s1351, 1
    %1353 = vsyncpa [#allocation8], 1
    %1354 = vsyncpa [#allocation6], 1
    %s1355 = scalar_lea.sflag [#allocation6], 1
    %1356 = vsyncpa %s1355, 1

</llo_original>
